<compile_context>
chip_gen: v7x
topology: tpu7x:2x2x1
jax: 0.10.0
libtpu: 0.0.40
codegen_flags: <defaults>
</compile_context>

<pallas_src>
import functools

import jax
import jax.numpy as jnp
import numpy as np
from jax.experimental import pallas as pl
from jax.experimental.pallas import tpu as pltpu

BN_EPS = 1e-5


# ------------------------------- kernel body -------------------------------

def _rcn_a_kernel(
    xpf_ref,            # (1, 4*cin_p, XW) f32 : parity-split, margin-padded image
    w1_ref,             # (F, K1*K1*cin_p) bf16 : conv1 weight, col = tap*cin_p + c
    s1_ref, b1_ref,     # (F, 1) f32 : folded BN1 scale / bias (conv bias folded in)
    wff_ref,            # (F, F) bf16 : 1x1 ffconv weight
    sff_ref, bff_ref,   # (F, 1) f32
    wrr_ref,            # (9, F, F) bf16 : 3x3 rrconv weight, leading dim = tap
    srr_ref, brr_ref,   # (F, 1) f32
    mask_ref,           # (1, S) f32 : 1.0 on the valid 10x10 interior lanes
    sel4_ref,           # (S, 4*sp) f32 : 2x2-window corner selector (4 blocks)
    fcw_ref,            # (C, F, sp) f32 : fc weight reshaped
    fcb_ref,            # (C, 1) f32
    out_ref,            # (1, C, 1) f32
    pat_scr,            # (4, K1*K1*cin_p, S) bf16 : conv1 im2col, one page / parity
    pad_scr,            # (F, XW) bf16 : margin-padded activation for the 3x3 convs
    *, cin_p, feat, k1, rs, s_img, marg, sp,
):
    del feat
    S = s_img
    n_tap = k1 * k1
    f32 = jnp.float32
    bf16 = jnp.bfloat16

    mask = mask_ref[...]                                      # (1, S) 0/1

    # Margins of the 3x3-conv scratch must read as zero on every grid step.
    pad_scr[...] = jnp.zeros_like(pad_scr)

    # ---- conv1(5x5 valid) + BN + ReLU + MaxPool(2,2), parity decomposition ----
    # Each output-pixel parity (a, b) of the 2x2 pooling window is one GEMM;
    # the MaxPool is then an elementwise max of the four per-parity results.
    x1 = None
    for ab in range(4):
        a, b = divmod(ab, 2)

        def tap_slice(t):
            di, dj = divmod(t, k1)
            u, ci = divmod(a + di, 2)
            v, cj = divmod(b + dj, 2)
            grp = ci * 2 + cj
            start = marg + (u - 1) * rs + (v - 1)
            return xpf_ref[0, grp * cin_p:(grp + 1) * cin_p, start:start + S]

        # bf16 im2col: two taps (16 packed sublane rows) per store.
        t = 0
        while t < n_tap:
            if t + 1 < n_tap:
                pair = jnp.concatenate([tap_slice(t), tap_slice(t + 1)], axis=0)
                pat_scr[ab, t * cin_p:(t + 2) * cin_p, :] = pair.astype(bf16)
                t += 2
            else:
                pat_scr[ab, t * cin_p:(t + 1) * cin_p, :] = (
                    tap_slice(t).astype(bf16))
                t += 1

        cp = jnp.dot(w1_ref[...], pat_scr[ab],
                     preferred_element_type=f32)                # (F, S)
        cp = jnp.maximum(cp * s1_ref[...] + b1_ref[...], 0.0)   # BN + ReLU
        x1 = cp if x1 is None else jnp.maximum(x1, cp)          # MaxPool(2,2)

    x1 = x1 * mask            # zero ring / row-padding lanes (0/1 mask multiply)

    # ---- attention branch: AdaptiveAvgPool((5,5)) + CAM (SpatialAttentionBlock_P)
    # One selector matmul gathers the 4 corners of every 2x2 window; the exact
    # 2x2 average is the mean of the 4 dense sp-wide blocks.
    x1d = jnp.dot(x1, sel4_ref[...], preferred_element_type=f32)      # (F, 4*sp)
    l_dense = 0.25 * (x1d[:, 0:sp] + x1d[:, sp:2 * sp]
                      + x1d[:, 2 * sp:3 * sp] + x1d[:, 3 * sp:4 * sp])

    fcw = fcw_ref[...]                                                # (C, F, sp)
    cam = jnp.mean(fcw * l_dense[None, :, :], axis=1)                 # (C, sp)
    cam = cam - jnp.min(cam, axis=1, keepdims=True)
    cam = cam / jnp.max(cam, axis=1, keepdims=True)   # matches PyTorch (no eps)
    y_att = jnp.mean(cam, axis=0, keepdims=True)                      # (1, sp)

    # ---- RclBlock (eval): ffconv(1x1), rrconv(3x3) applied twice ----
    def bn_relu(z, s_ref, b_ref):
        return jnp.maximum(z * s_ref[...] + b_ref[...], 0.0)

    def conv3x3(t_in):
        # 9 shifted bf16 x bf16 matmuls accumulated in f32 (no im2col scratch).
        pad_scr[:, marg:marg + S] = t_in.astype(bf16)
        acc = None
        for t in range(9):
            di, dj = divmod(t, 3)
            start = marg + (di - 1) * rs + (dj - 1)
            part = jnp.dot(wrr_ref[t], pad_scr[:, start:start + S],
                           preferred_element_type=f32)
            acc = part if acc is None else acc + part
        return acc

    ff = jnp.dot(wff_ref[...], x1.astype(bf16), preferred_element_type=f32)
    t1 = x1 + bn_relu(ff, sff_ref, bff_ref) * mask              # x + ffconv(x)
    t2 = x1 + bn_relu(conv3x3(t1), srr_ref, brr_ref) * mask     # x + rrconv(x + y)
    y3 = bn_relu(conv3x3(t2), srr_ref, brr_ref)                 # rrconv(x + y)
    # (no mask on y3: only valid 2x2-window lanes are read below)

    # ---- MaxPool(2,2) 10x10 -> 5x5 (Dropout == identity), densified ----
    y3d = jnp.dot(y3, sel4_ref[...], preferred_element_type=f32)      # (F, 4*sp)
    xr = jnp.maximum(jnp.maximum(y3d[:, 0:sp], y3d[:, sp:2 * sp]),
                     jnp.maximum(y3d[:, 2 * sp:3 * sp], y3d[:, 3 * sp:4 * sp]))

    # ---- head: (x * attention) flattened through the Linear layer ----
    xy = xr * y_att                                                   # (F, sp)
    per_cf = jnp.sum(fcw * xy[None, :, :], axis=2)                    # (C, F)
    logits = jnp.sum(per_cf, axis=1, keepdims=True) + fcb_ref[...]    # (C, 1)
    out_ref[...] = logits.reshape(1, logits.shape[0], 1)


# ------------------------------- host wrapper -------------------------------

def _fold_bn(conv_b, gamma, beta, mean, var):
    scale = gamma / jnp.sqrt(var + BN_EPS)
    bias = conv_b * scale + beta - mean * scale
    return (scale.reshape(-1, 1).astype(jnp.float32),
            bias.reshape(-1, 1).astype(jnp.float32))


def _const_spec(arr):
    if arr.ndim == 2:
        return pl.BlockSpec(arr.shape, lambda b: (0, 0))
    if arr.ndim == 3:
        return pl.BlockSpec(arr.shape, lambda b: (0, 0, 0))
    raise ValueError("unsupported rank")


@jax.jit
def rcn_a_forward(params, x):
    """RCN_A (model_version=3, num_layers=1) eval-mode forward."""
    n, c_in, h, w = x.shape
    f, _, k1, _ = params["c1_w"].shape
    classes = params["fc_w"].shape[0]

    assert h == w and h % 2 == 0
    ho = h - k1 + 1                       # conv1 output size (valid conv)
    assert ho > 0 and ho % 2 == 0
    p1 = ho // 2                          # after MaxPool(2,2)
    assert p1 % 2 == 0
    p2 = p1 // 2                          # after the RclBlock MaxPool(2,2)
    sp = p2 * p2
    assert params["fc_w"].shape[1] == f * sp
    hf = h // 2                           # parity-field size
    assert hf == p1 + 2                   # geometry used by the shift trick (k1=5)

    cin_p = ((c_in + 7) // 8) * 8         # channels padded to a sublane group
    rs = ((p1 + 2 + 7) // 8) * 8          # lane stride of one activation row
    s_img = (p1 + 2) * rs                 # flat lanes of one image
    marg = ((rs + 1 + 31) // 32) * 32     # margin >= rs + 1 for shifted windows
    xw = marg + s_img + marg

    # ---- parity-split (2x2-subsampled) input fields, per image ----
    fields = []
    for ci in range(2):
        for cj in range(2):
            fld = x[:, :, ci::2, cj::2]                       # (N, Cin, hf, hf)
            fld = jnp.pad(fld, ((0, 0), (0, 0), (0, 0), (0, rs - hf)))
            fld = fld.reshape(n, c_in, s_img)
            fld = jnp.pad(fld, ((0, 0), (0, cin_p - c_in),
                                (marg, xw - marg - s_img)))
            fields.append(fld)
    xpf = jnp.concatenate(fields, axis=1).astype(jnp.float32)  # (N, 4*cin_p, XW)

    # ---- weights rearranged for the in-kernel GEMMs (MXU operands in bf16) ----
    w1 = jnp.transpose(params["c1_w"], (0, 2, 3, 1))           # (F, k1, k1, Cin)
    w1 = jnp.pad(w1, ((0, 0), (0, 0), (0, 0), (0, cin_p - c_in)))
    w1 = w1.reshape(f, k1 * k1 * cin_p).astype(jnp.bfloat16)
    wff = params["ff_w"].reshape(f, f).astype(jnp.bfloat16)
    wrr = jnp.transpose(params["rr_w"], (2, 3, 0, 1)).reshape(9, f, f)
    wrr = wrr.astype(jnp.bfloat16)

    s1, b1 = _fold_bn(params["c1_b"], params["c1_gamma"], params["c1_beta"],
                      params["c1_mean"], params["c1_var"])
    sff, bff = _fold_bn(params["ff_b"], params["ff_gamma"], params["ff_beta"],
                        params["ff_mean"], params["ff_var"])
    srr, brr = _fold_bn(params["rr_b"], params["rr_gamma"], params["rr_beta"],
                        params["rr_mean"], params["rr_var"])

    # ---- static per-image layout helpers (compile-time constants) ----
    col = np.arange(s_img)
    row = col // rs
    cc = col % rs
    interior = (row >= 1) & (row <= p1) & (cc >= 1) & (cc <= p1)
    mask = jnp.asarray(interior.astype(np.float32).reshape(1, s_img))

    sel4 = np.zeros((s_img, 4 * sp), np.float32)   # batch-independent, tiny
    for k, off in enumerate((0, 1, rs, rs + 1)):
        for p in range(p2):
            for q in range(p2):
                lane = (1 + 2 * p) * rs + (1 + 2 * q) + off
                sel4[lane, k * sp + p * p2 + q] = 1.0
    sel4 = jnp.asarray(sel4)

    fcw = params["fc_w"].reshape(classes, f, sp).astype(jnp.float32)
    fcb = params["fc_b"].reshape(classes, 1).astype(jnp.float32)

    kernel = functools.partial(
        _rcn_a_kernel, cin_p=cin_p, feat=f, k1=k1, rs=rs,
        s_img=s_img, marg=marg, sp=sp)

    consts = (w1, s1, b1, wff, sff, bff, wrr, srr, brr, mask, sel4, fcw, fcb)
    in_specs = [pl.BlockSpec((1, 4 * cin_p, xw), lambda b: (b, 0, 0))]
    in_specs += [_const_spec(a) for a in consts]
    out_spec = pl.BlockSpec((1, classes, 1), lambda b: (b, 0, 0))

    scratch_shapes = [
        pltpu.VMEM((4, k1 * k1 * cin_p, s_img), jnp.bfloat16),  # conv1 im2col
        pltpu.VMEM((f, xw), jnp.bfloat16),                      # 3x3-conv margins
    ]

    def nbytes(a):
        return int(np.prod(a.shape)) * a.dtype.itemsize

    scratch_bytes = (4 * k1 * k1 * cin_p * s_img + f * xw) * 2
    block_bytes = 2 * (4 * cin_p * xw * 4 + classes * 4)       # double-buffered
    const_bytes = sum(nbytes(a) for a in consts)
    vmem_limit = int(max(8 * (scratch_bytes + block_bytes + const_bytes),
                         16 << 20))

    # NOTE: at F=8 every GEMM uses <6% of the MXU; the kernel is ld/st- and
    # VALU-bound, so no GEMM-tile tuning is attempted (per review).
    flops_per_img = 2 * (4 * f * (k1 * k1 * cin_p) * s_img      # conv1
                         + f * f * s_img                         # ffconv
                         + 2 * 9 * f * f * s_img                 # 2x rrconv
                         + 2 * f * s_img * 4 * sp)               # 2x pool selector
    cost = pl.CostEstimate(
        flops=int(n * flops_per_img), transcendentals=0,
        bytes_accessed=int(nbytes(xpf) + const_bytes + n * classes * 4))

    out = pl.pallas_call(
        kernel,
        out_shape=jax.ShapeDtypeStruct((n, classes, 1), jnp.float32),
        grid_spec=pltpu.PrefetchScalarGridSpec(
            num_scalar_prefetch=0, grid=(n,),
            in_specs=in_specs, out_specs=out_spec,
            scratch_shapes=scratch_shapes),
        compiler_params=pltpu.CompilerParams(
            dimension_semantics=("parallel",),
            vmem_limit_bytes=vmem_limit),
        cost_estimate=cost,
    )(xpf, *consts)
    return out[:, :, 0]                                         # (N, classes)


# ----------------------------- parameter set-up -----------------------------

def init_params(key, num_input, featuremaps, num_classes, pool_size):
    ks = jax.random.split(key, 7)
    f = featuremaps

    def kaiming(k, shape):                 # kaiming_normal_, mode='fan_out'
        fan_out = shape[0] * shape[2] * shape[3]
        return ((2.0 / fan_out) ** 0.5) * jax.random.normal(k, shape, jnp.float32)

    params = dict(
        c1_w=kaiming(ks[0], (f, num_input, 5, 5)),
        c1_b=0.01 * jax.random.normal(ks[1], (f,), jnp.float32),
        ff_w=kaiming(ks[2], (f, f, 1, 1)),
        ff_b=0.01 * jax.random.normal(ks[3], (f,), jnp.float32),
        rr_w=kaiming(ks[4], (f, f, 3, 3)),
        rr_b=0.01 * jax.random.normal(ks[5], (f,), jnp.float32),
        fc_w=0.01 * jax.random.normal(
            ks[6], (num_classes, pool_size * pool_size * f), jnp.float32),
        fc_b=jnp.zeros((num_classes,), jnp.float32),
    )
    for pfx in ("c1", "ff", "rr"):         # BatchNorm eval: weight=1, bias=0, stats
        params[pfx + "_gamma"] = jnp.ones((f,), jnp.float32)
        params[pfx + "_beta"] = jnp.zeros((f,), jnp.float32)
        params[pfx + "_mean"] = jnp.zeros((f,), jnp.float32)
        params[pfx + "_var"] = jnp.ones((f,), jnp.float32)
    return params


if __name__ == "__main__":
    key = jax.random.PRNGKey(0)
    kx, kp = jax.random.split(key)

    N, C_in, H, W = 2, 3, 24, 24
    featuremaps, num_classes, pool_size = 8, 3, 5

    x = jax.random.normal(kx, (N, C_in, H, W), jnp.float32)
    params = init_params(kp, C_in, featuremaps, num_classes, pool_size)

    out = rcn_a_forward(params, x)
    out = jax.block_until_ready(out)
    assert out.shape == (N, num_classes)
    assert bool(jnp.all(jnp.isfinite(out)))
    print("KERNEL_OK")
</pallas_src>

<mosaic_0001>
module attributes {stable_mosaic.version = 11 : i64} {
  func.func @_rcn_a_kernel(%arg0: i32, %arg1: memref<1x32x256xf32, #tpu.memory_space<vmem>>, %arg2: memref<8x200xbf16, #tpu.memory_space<vmem>>, %arg3: memref<8x1xf32, #tpu.memory_space<vmem>>, %arg4: memref<8x1xf32, #tpu.memory_space<vmem>>, %arg5: memref<8x8xbf16, #tpu.memory_space<vmem>>, %arg6: memref<8x1xf32, #tpu.memory_space<vmem>>, %arg7: memref<8x1xf32, #tpu.memory_space<vmem>>, %arg8: memref<9x8x8xbf16, #tpu.memory_space<vmem>>, %arg9: memref<8x1xf32, #tpu.memory_space<vmem>>, %arg10: memref<8x1xf32, #tpu.memory_space<vmem>>, %arg11: memref<1x192xf32, #tpu.memory_space<vmem>>, %arg12: memref<192x100xf32, #tpu.memory_space<vmem>>, %arg13: memref<3x8x25xf32, #tpu.memory_space<vmem>>, %arg14: memref<3x1xf32, #tpu.memory_space<vmem>>, %arg15: memref<1x3x1xf32, #tpu.memory_space<vmem>>, %arg16: memref<4x200x192xbf16, #tpu.memory_space<vmem>>, %arg17: memref<8x256xbf16, #tpu.memory_space<vmem>>) attributes {dimension_semantics = [#tpu.dimension_semantics<parallel>], iteration_bounds = array<i64: 2>, scalar_prefetch = 0 : i64, scratch_operands = 2 : i64, tpu.core_type = #tpu.core_type<tc>, window_params = [{transform_indices = @transform_0, window_bounds = array<i64: 1, 32, 256>}, {pipeline_mode = #tpu.pipeline_mode<synchronous>, transform_indices = @transform_1, window_bounds = array<i64: 8, 200>}, {pipeline_mode = #tpu.pipeline_mode<synchronous>, transform_indices = @transform_2, window_bounds = array<i64: 8, 1>}, {pipeline_mode = #tpu.pipeline_mode<synchronous>, transform_indices = @transform_3, window_bounds = array<i64: 8, 1>}, {pipeline_mode = #tpu.pipeline_mode<synchronous>, transform_indices = @transform_4, window_bounds = array<i64: 8, 8>}, {pipeline_mode = #tpu.pipeline_mode<synchronous>, transform_indices = @transform_5, window_bounds = array<i64: 8, 1>}, {pipeline_mode = #tpu.pipeline_mode<synchronous>, transform_indices = @transform_6, window_bounds = array<i64: 8, 1>}, {pipeline_mode = #tpu.pipeline_mode<synchronous>, transform_indices = @transform_7, window_bounds = array<i64: 9, 8, 8>}, {pipeline_mode = #tpu.pipeline_mode<synchronous>, transform_indices = @transform_8, window_bounds = array<i64: 8, 1>}, {pipeline_mode = #tpu.pipeline_mode<synchronous>, transform_indices = @transform_9, window_bounds = array<i64: 8, 1>}, {pipeline_mode = #tpu.pipeline_mode<synchronous>, transform_indices = @transform_10, window_bounds = array<i64: 1, 192>}, {pipeline_mode = #tpu.pipeline_mode<synchronous>, transform_indices = @transform_11, window_bounds = array<i64: 192, 100>}, {pipeline_mode = #tpu.pipeline_mode<synchronous>, transform_indices = @transform_12, window_bounds = array<i64: 3, 8, 25>}, {pipeline_mode = #tpu.pipeline_mode<synchronous>, transform_indices = @transform_13, window_bounds = array<i64: 3, 1>}, {transform_indices = @transform_14, window_bounds = array<i64: 1, 3, 1>}]} {
    %c0 = arith.constant 0 : index
    %c0_0 = arith.constant 0 : index
    %0 = vector.load %arg11[%c0, %c0_0] : memref<1x192xf32, #tpu.memory_space<vmem>>, vector<1x192xf32>
    %cst = arith.constant 0.000000e+00 : bf16
    %1 = vector.broadcast %cst : bf16 to vector<8x256xbf16>
    %c0_1 = arith.constant 0 : index
    %c0_2 = arith.constant 0 : index
    %2 = vector.load %arg17[%c0_1, %c0_2] : memref<8x256xbf16, #tpu.memory_space<vmem>>, vector<8x256xbf16>
    tpu.vector_store %arg17[%c0_1, %c0_2], %1 {strides = array<i32>} : memref<8x256xbf16, #tpu.memory_space<vmem>>, vector<8x256xbf16>,
    %c0_3 = arith.constant 0 : index
    %c0_4 = arith.constant 0 : index
    %c15 = arith.constant 15 : index
    %3 = vector.load %arg1[%c0_3, %c0_4, %c15] : memref<1x32x256xf32, #tpu.memory_space<vmem>>, vector<1x8x192xf32>
    %4 = vector.shape_cast %3 : vector<1x8x192xf32> to vector<8x192xf32>
    %c0_5 = arith.constant 0 : index
    %c8 = arith.constant 8 : index
    %c15_6 = arith.constant 15 : index
    %5 = vector.load %arg1[%c0_5, %c8, %c15_6] : memref<1x32x256xf32, #tpu.memory_space<vmem>>, vector<1x8x192xf32>
    %6 = vector.shape_cast %5 : vector<1x8x192xf32> to vector<8x192xf32>
    %7 = tpu.concatenate %4, %6 in 0 : vector<8x192xf32>, vector<8x192xf32> -> vector<16x192xf32>
    %8 = arith.truncf %7 : vector<16x192xf32> to vector<16x192xbf16>
    %c0_7 = arith.constant 0 : index
    %c0_8 = arith.constant 0 : index
    %c0_9 = arith.constant 0 : index
    %9 = vector.load %arg16[%c0_7, %c0_8, %c0_9] : memref<4x200x192xbf16, #tpu.memory_space<vmem>>, vector<1x16x192xbf16>
    %10 = vector.shape_cast %9 : vector<1x16x192xbf16> to vector<16x192xbf16>
    %11 = vector.shape_cast %8 : vector<16x192xbf16> to vector<1x16x192xbf16>
    tpu.vector_store %arg16[%c0_7, %c0_8, %c0_9], %11 {strides = array<i32>} : memref<4x200x192xbf16, #tpu.memory_space<vmem>>, vector<1x16x192xbf16>,
    %c0_10 = arith.constant 0 : index
    %c0_11 = arith.constant 0 : index
    %c16 = arith.constant 16 : index
    %12 = vector.load %arg1[%c0_10, %c0_11, %c16] : memref<1x32x256xf32, #tpu.memory_space<vmem>>, vector<1x8x192xf32>
    %13 = vector.shape_cast %12 : vector<1x8x192xf32> to vector<8x192xf32>
    %c0_12 = arith.constant 0 : index
    %c8_13 = arith.constant 8 : index
    %c16_14 = arith.constant 16 : index
    %14 = vector.load %arg1[%c0_12, %c8_13, %c16_14] : memref<1x32x256xf32, #tpu.memory_space<vmem>>, vector<1x8x192xf32>
    %15 = vector.shape_cast %14 : vector<1x8x192xf32> to vector<8x192xf32>
    %16 = tpu.concatenate %13, %15 in 0 : vector<8x192xf32>, vector<8x192xf32> -> vector<16x192xf32>
    %17 = arith.truncf %16 : vector<16x192xf32> to vector<16x192xbf16>
    %c0_15 = arith.constant 0 : index
    %c16_16 = arith.constant 16 : index
    %c0_17 = arith.constant 0 : index
    %18 = vector.load %arg16[%c0_15, %c16_16, %c0_17] : memref<4x200x192xbf16, #tpu.memory_space<vmem>>, vector<1x16x192xbf16>
    %19 = vector.shape_cast %18 : vector<1x16x192xbf16> to vector<16x192xbf16>
    %20 = vector.shape_cast %17 : vector<16x192xbf16> to vector<1x16x192xbf16>
    tpu.vector_store %arg16[%c0_15, %c16_16, %c0_17], %20 {strides = array<i32>} : memref<4x200x192xbf16, #tpu.memory_space<vmem>>, vector<1x16x192xbf16>,
    %c0_18 = arith.constant 0 : index
    %c0_19 = arith.constant 0 : index
    %c17 = arith.constant 17 : index
    %21 = vector.load %arg1[%c0_18, %c0_19, %c17] : memref<1x32x256xf32, #tpu.memory_space<vmem>>, vector<1x8x192xf32>
    %22 = vector.shape_cast %21 : vector<1x8x192xf32> to vector<8x192xf32>
    %c0_20 = arith.constant 0 : index
    %c16_21 = arith.constant 16 : index
    %c15_22 = arith.constant 15 : index
    %23 = vector.load %arg1[%c0_20, %c16_21, %c15_22] : memref<1x32x256xf32, #tpu.memory_space<vmem>>, vector<1x8x192xf32>
    %24 = vector.shape_cast %23 : vector<1x8x192xf32> to vector<8x192xf32>
    %25 = tpu.concatenate %22, %24 in 0 : vector<8x192xf32>, vector<8x192xf32> -> vector<16x192xf32>
    %26 = arith.truncf %25 : vector<16x192xf32> to vector<16x192xbf16>
    %c0_23 = arith.constant 0 : index
    %c32 = arith.constant 32 : index
    %c0_24 = arith.constant 0 : index
    %27 = vector.load %arg16[%c0_23, %c32, %c0_24] : memref<4x200x192xbf16, #tpu.memory_space<vmem>>, vector<1x16x192xbf16>
    %28 = vector.shape_cast %27 : vector<1x16x192xbf16> to vector<16x192xbf16>
    %29 = vector.shape_cast %26 : vector<16x192xbf16> to vector<1x16x192xbf16>
    tpu.vector_store %arg16[%c0_23, %c32, %c0_24], %29 {strides = array<i32>} : memref<4x200x192xbf16, #tpu.memory_space<vmem>>, vector<1x16x192xbf16>,
    %c0_25 = arith.constant 0 : index
    %c24 = arith.constant 24 : index
    %c15_26 = arith.constant 15 : index
    %30 = vector.load %arg1[%c0_25, %c24, %c15_26] : memref<1x32x256xf32, #tpu.memory_space<vmem>>, vector<1x8x192xf32>
    %31 = vector.shape_cast %30 : vector<1x8x192xf32> to vector<8x192xf32>
    %c0_27 = arith.constant 0 : index
    %c16_28 = arith.constant 16 : index
    %c16_29 = arith.constant 16 : index
    %32 = vector.load %arg1[%c0_27, %c16_28, %c16_29] : memref<1x32x256xf32, #tpu.memory_space<vmem>>, vector<1x8x192xf32>
    %33 = vector.shape_cast %32 : vector<1x8x192xf32> to vector<8x192xf32>
    %34 = tpu.concatenate %31, %33 in 0 : vector<8x192xf32>, vector<8x192xf32> -> vector<16x192xf32>
    %35 = arith.truncf %34 : vector<16x192xf32> to vector<16x192xbf16>
    %c0_30 = arith.constant 0 : index
    %c48 = arith.constant 48 : index
    %c0_31 = arith.constant 0 : index
    %36 = vector.load %arg16[%c0_30, %c48, %c0_31] : memref<4x200x192xbf16, #tpu.memory_space<vmem>>, vector<1x16x192xbf16>
    %37 = vector.shape_cast %36 : vector<1x16x192xbf16> to vector<16x192xbf16>
    %38 = vector.shape_cast %35 : vector<16x192xbf16> to vector<1x16x192xbf16>
    tpu.vector_store %arg16[%c0_30, %c48, %c0_31], %38 {strides = array<i32>} : memref<4x200x192xbf16, #tpu.memory_space<vmem>>, vector<1x16x192xbf16>,
    %c0_32 = arith.constant 0 : index
    %c24_33 = arith.constant 24 : index
    %c16_34 = arith.constant 16 : index
    %39 = vector.load %arg1[%c0_32, %c24_33, %c16_34] : memref<1x32x256xf32, #tpu.memory_space<vmem>>, vector<1x8x192xf32>
    %40 = vector.shape_cast %39 : vector<1x8x192xf32> to vector<8x192xf32>
    %c0_35 = arith.constant 0 : index
    %c16_36 = arith.constant 16 : index
    %c17_37 = arith.constant 17 : index
    %41 = vector.load %arg1[%c0_35, %c16_36, %c17_37] : memref<1x32x256xf32, #tpu.memory_space<vmem>>, vector<1x8x192xf32>
    %42 = vector.shape_cast %41 : vector<1x8x192xf32> to vector<8x192xf32>
    %43 = tpu.concatenate %40, %42 in 0 : vector<8x192xf32>, vector<8x192xf32> -> vector<16x192xf32>
    %44 = arith.truncf %43 : vector<16x192xf32> to vector<16x192xbf16>
    %c0_38 = arith.constant 0 : index
    %c64 = arith.constant 64 : index
    %c0_39 = arith.constant 0 : index
    %45 = vector.load %arg16[%c0_38, %c64, %c0_39] : memref<4x200x192xbf16, #tpu.memory_space<vmem>>, vector<1x16x192xbf16>
    %46 = vector.shape_cast %45 : vector<1x16x192xbf16> to vector<16x192xbf16>
    %47 = vector.shape_cast %44 : vector<16x192xbf16> to vector<1x16x192xbf16>
    tpu.vector_store %arg16[%c0_38, %c64, %c0_39], %47 {strides = array<i32>} : memref<4x200x192xbf16, #tpu.memory_space<vmem>>, vector<1x16x192xbf16>,
    %c0_40 = arith.constant 0 : index
    %c0_41 = arith.constant 0 : index
    %c31 = arith.constant 31 : index
    %48 = vector.load %arg1[%c0_40, %c0_41, %c31] : memref<1x32x256xf32, #tpu.memory_space<vmem>>, vector<1x8x192xf32>
    %49 = vector.shape_cast %48 : vector<1x8x192xf32> to vector<8x192xf32>
    %c0_42 = arith.constant 0 : index
    %c8_43 = arith.constant 8 : index
    %c31_44 = arith.constant 31 : index
    %50 = vector.load %arg1[%c0_42, %c8_43, %c31_44] : memref<1x32x256xf32, #tpu.memory_space<vmem>>, vector<1x8x192xf32>
    %51 = vector.shape_cast %50 : vector<1x8x192xf32> to vector<8x192xf32>
    %52 = tpu.concatenate %49, %51 in 0 : vector<8x192xf32>, vector<8x192xf32> -> vector<16x192xf32>
    %53 = arith.truncf %52 : vector<16x192xf32> to vector<16x192xbf16>
    %c0_45 = arith.constant 0 : index
    %c80 = arith.constant 80 : index
    %c0_46 = arith.constant 0 : index
    %54 = vector.load %arg16[%c0_45, %c80, %c0_46] : memref<4x200x192xbf16, #tpu.memory_space<vmem>>, vector<1x16x192xbf16>
    %55 = vector.shape_cast %54 : vector<1x16x192xbf16> to vector<16x192xbf16>
    %56 = vector.shape_cast %53 : vector<16x192xbf16> to vector<1x16x192xbf16>
    tpu.vector_store %arg16[%c0_45, %c80, %c0_46], %56 {strides = array<i32>} : memref<4x200x192xbf16, #tpu.memory_space<vmem>>, vector<1x16x192xbf16>,
    %c0_47 = arith.constant 0 : index
    %c0_48 = arith.constant 0 : index
    %c32_49 = arith.constant 32 : index
    %57 = vector.load %arg1[%c0_47, %c0_48, %c32_49] : memref<1x32x256xf32, #tpu.memory_space<vmem>>, vector<1x8x192xf32>
    %58 = vector.shape_cast %57 : vector<1x8x192xf32> to vector<8x192xf32>
    %c0_50 = arith.constant 0 : index
    %c8_51 = arith.constant 8 : index
    %c32_52 = arith.constant 32 : index
    %59 = vector.load %arg1[%c0_50, %c8_51, %c32_52] : memref<1x32x256xf32, #tpu.memory_space<vmem>>, vector<1x8x192xf32>
    %60 = vector.shape_cast %59 : vector<1x8x192xf32> to vector<8x192xf32>
    %61 = tpu.concatenate %58, %60 in 0 : vector<8x192xf32>, vector<8x192xf32> -> vector<16x192xf32>
    %62 = arith.truncf %61 : vector<16x192xf32> to vector<16x192xbf16>
    %c0_53 = arith.constant 0 : index
    %c96 = arith.constant 96 : index
    %c0_54 = arith.constant 0 : index
    %63 = vector.load %arg16[%c0_53, %c96, %c0_54] : memref<4x200x192xbf16, #tpu.memory_space<vmem>>, vector<1x16x192xbf16>
    %64 = vector.shape_cast %63 : vector<1x16x192xbf16> to vector<16x192xbf16>
    %65 = vector.shape_cast %62 : vector<16x192xbf16> to vector<1x16x192xbf16>
    tpu.vector_store %arg16[%c0_53, %c96, %c0_54], %65 {strides = array<i32>} : memref<4x200x192xbf16, #tpu.memory_space<vmem>>, vector<1x16x192xbf16>,
    %c0_55 = arith.constant 0 : index
    %c0_56 = arith.constant 0 : index
    %c33 = arith.constant 33 : index
    %66 = vector.load %arg1[%c0_55, %c0_56, %c33] : memref<1x32x256xf32, #tpu.memory_space<vmem>>, vector<1x8x192xf32>
    %67 = vector.shape_cast %66 : vector<1x8x192xf32> to vector<8x192xf32>
    %c0_57 = arith.constant 0 : index
    %c16_58 = arith.constant 16 : index
    %c31_59 = arith.constant 31 : index
    %68 = vector.load %arg1[%c0_57, %c16_58, %c31_59] : memref<1x32x256xf32, #tpu.memory_space<vmem>>, vector<1x8x192xf32>
    %69 = vector.shape_cast %68 : vector<1x8x192xf32> to vector<8x192xf32>
    %70 = tpu.concatenate %67, %69 in 0 : vector<8x192xf32>, vector<8x192xf32> -> vector<16x192xf32>
    %71 = arith.truncf %70 : vector<16x192xf32> to vector<16x192xbf16>
    %c0_60 = arith.constant 0 : index
    %c112 = arith.constant 112 : index
    %c0_61 = arith.constant 0 : index
    %72 = vector.load %arg16[%c0_60, %c112, %c0_61] : memref<4x200x192xbf16, #tpu.memory_space<vmem>>, vector<1x16x192xbf16>
    %73 = vector.shape_cast %72 : vector<1x16x192xbf16> to vector<16x192xbf16>
    %74 = vector.shape_cast %71 : vector<16x192xbf16> to vector<1x16x192xbf16>
    tpu.vector_store %arg16[%c0_60, %c112, %c0_61], %74 {strides = array<i32>} : memref<4x200x192xbf16, #tpu.memory_space<vmem>>, vector<1x16x192xbf16>,
    %c0_62 = arith.constant 0 : index
    %c24_63 = arith.constant 24 : index
    %c31_64 = arith.constant 31 : index
    %75 = vector.load %arg1[%c0_62, %c24_63, %c31_64] : memref<1x32x256xf32, #tpu.memory_space<vmem>>, vector<1x8x192xf32>
    %76 = vector.shape_cast %75 : vector<1x8x192xf32> to vector<8x192xf32>
    %c0_65 = arith.constant 0 : index
    %c16_66 = arith.constant 16 : index
    %c32_67 = arith.constant 32 : index
    %77 = vector.load %arg1[%c0_65, %c16_66, %c32_67] : memref<1x32x256xf32, #tpu.memory_space<vmem>>, vector<1x8x192xf32>
    %78 = vector.shape_cast %77 : vector<1x8x192xf32> to vector<8x192xf32>
    %79 = tpu.concatenate %76, %78 in 0 : vector<8x192xf32>, vector<8x192xf32> -> vector<16x192xf32>
    %80 = arith.truncf %79 : vector<16x192xf32> to vector<16x192xbf16>
    %c0_68 = arith.constant 0 : index
    %c128 = arith.constant 128 : index
    %c0_69 = arith.constant 0 : index
    %81 = vector.load %arg16[%c0_68, %c128, %c0_69] : memref<4x200x192xbf16, #tpu.memory_space<vmem>>, vector<1x16x192xbf16>
    %82 = vector.shape_cast %81 : vector<1x16x192xbf16> to vector<16x192xbf16>
    %83 = vector.shape_cast %80 : vector<16x192xbf16> to vector<1x16x192xbf16>
    tpu.vector_store %arg16[%c0_68, %c128, %c0_69], %83 {strides = array<i32>} : memref<4x200x192xbf16, #tpu.memory_space<vmem>>, vector<1x16x192xbf16>,
    %c0_70 = arith.constant 0 : index
    %c24_71 = arith.constant 24 : index
    %c32_72 = arith.constant 32 : index
    %84 = vector.load %arg1[%c0_70, %c24_71, %c32_72] : memref<1x32x256xf32, #tpu.memory_space<vmem>>, vector<1x8x192xf32>
    %85 = vector.shape_cast %84 : vector<1x8x192xf32> to vector<8x192xf32>
    %c0_73 = arith.constant 0 : index
    %c16_74 = arith.constant 16 : index
    %c33_75 = arith.constant 33 : index
    %86 = vector.load %arg1[%c0_73, %c16_74, %c33_75] : memref<1x32x256xf32, #tpu.memory_space<vmem>>, vector<1x8x192xf32>
    %87 = vector.shape_cast %86 : vector<1x8x192xf32> to vector<8x192xf32>
    %88 = tpu.concatenate %85, %87 in 0 : vector<8x192xf32>, vector<8x192xf32> -> vector<16x192xf32>
    %89 = arith.truncf %88 : vector<16x192xf32> to vector<16x192xbf16>
    %c0_76 = arith.constant 0 : index
    %c144 = arith.constant 144 : index
    %c0_77 = arith.constant 0 : index
    %90 = vector.load %arg16[%c0_76, %c144, %c0_77] : memref<4x200x192xbf16, #tpu.memory_space<vmem>>, vector<1x16x192xbf16>
    %91 = vector.shape_cast %90 : vector<1x16x192xbf16> to vector<16x192xbf16>
    %92 = vector.shape_cast %89 : vector<16x192xbf16> to vector<1x16x192xbf16>
    tpu.vector_store %arg16[%c0_76, %c144, %c0_77], %92 {strides = array<i32>} : memref<4x200x192xbf16, #tpu.memory_space<vmem>>, vector<1x16x192xbf16>,
    %c0_78 = arith.constant 0 : index
    %c0_79 = arith.constant 0 : index
    %c47 = arith.constant 47 : index
    %93 = vector.load %arg1[%c0_78, %c0_79, %c47] : memref<1x32x256xf32, #tpu.memory_space<vmem>>, vector<1x8x192xf32>
    %94 = vector.shape_cast %93 : vector<1x8x192xf32> to vector<8x192xf32>
    %c0_80 = arith.constant 0 : index
    %c8_81 = arith.constant 8 : index
    %c47_82 = arith.constant 47 : index
    %95 = vector.load %arg1[%c0_80, %c8_81, %c47_82] : memref<1x32x256xf32, #tpu.memory_space<vmem>>, vector<1x8x192xf32>
    %96 = vector.shape_cast %95 : vector<1x8x192xf32> to vector<8x192xf32>
    %97 = tpu.concatenate %94, %96 in 0 : vector<8x192xf32>, vector<8x192xf32> -> vector<16x192xf32>
    %98 = arith.truncf %97 : vector<16x192xf32> to vector<16x192xbf16>
    %c0_83 = arith.constant 0 : index
    %c160 = arith.constant 160 : index
    %c0_84 = arith.constant 0 : index
    %99 = vector.load %arg16[%c0_83, %c160, %c0_84] : memref<4x200x192xbf16, #tpu.memory_space<vmem>>, vector<1x16x192xbf16>
    %100 = vector.shape_cast %99 : vector<1x16x192xbf16> to vector<16x192xbf16>
    %101 = vector.shape_cast %98 : vector<16x192xbf16> to vector<1x16x192xbf16>
    tpu.vector_store %arg16[%c0_83, %c160, %c0_84], %101 {strides = array<i32>} : memref<4x200x192xbf16, #tpu.memory_space<vmem>>, vector<1x16x192xbf16>,
    %c0_85 = arith.constant 0 : index
    %c0_86 = arith.constant 0 : index
    %c48_87 = arith.constant 48 : index
    %102 = vector.load %arg1[%c0_85, %c0_86, %c48_87] : memref<1x32x256xf32, #tpu.memory_space<vmem>>, vector<1x8x192xf32>
    %103 = vector.shape_cast %102 : vector<1x8x192xf32> to vector<8x192xf32>
    %c0_88 = arith.constant 0 : index
    %c8_89 = arith.constant 8 : index
    %c48_90 = arith.constant 48 : index
    %104 = vector.load %arg1[%c0_88, %c8_89, %c48_90] : memref<1x32x256xf32, #tpu.memory_space<vmem>>, vector<1x8x192xf32>
    %105 = vector.shape_cast %104 : vector<1x8x192xf32> to vector<8x192xf32>
    %106 = tpu.concatenate %103, %105 in 0 : vector<8x192xf32>, vector<8x192xf32> -> vector<16x192xf32>
    %107 = arith.truncf %106 : vector<16x192xf32> to vector<16x192xbf16>
    %c0_91 = arith.constant 0 : index
    %c176 = arith.constant 176 : index
    %c0_92 = arith.constant 0 : index
    %108 = vector.load %arg16[%c0_91, %c176, %c0_92] : memref<4x200x192xbf16, #tpu.memory_space<vmem>>, vector<1x16x192xbf16>
    %109 = vector.shape_cast %108 : vector<1x16x192xbf16> to vector<16x192xbf16>
    %110 = vector.shape_cast %107 : vector<16x192xbf16> to vector<1x16x192xbf16>
    tpu.vector_store %arg16[%c0_91, %c176, %c0_92], %110 {strides = array<i32>} : memref<4x200x192xbf16, #tpu.memory_space<vmem>>, vector<1x16x192xbf16>,
    %c0_93 = arith.constant 0 : index
    %c0_94 = arith.constant 0 : index
    %c49 = arith.constant 49 : index
    %111 = vector.load %arg1[%c0_93, %c0_94, %c49] : memref<1x32x256xf32, #tpu.memory_space<vmem>>, vector<1x8x192xf32>
    %112 = vector.shape_cast %111 : vector<1x8x192xf32> to vector<8x192xf32>
    %113 = arith.truncf %112 : vector<8x192xf32> to vector<8x192xbf16>
    %c0_95 = arith.constant 0 : index
    %c192 = arith.constant 192 : index
    %c0_96 = arith.constant 0 : index
    %114 = vector.load %arg16[%c0_95, %c192, %c0_96] : memref<4x200x192xbf16, #tpu.memory_space<vmem>>, vector<1x8x192xbf16>
    %115 = vector.shape_cast %114 : vector<1x8x192xbf16> to vector<8x192xbf16>
    %116 = vector.shape_cast %113 : vector<8x192xbf16> to vector<1x8x192xbf16>
    tpu.vector_store %arg16[%c0_95, %c192, %c0_96], %116 {strides = array<i32>} : memref<4x200x192xbf16, #tpu.memory_space<vmem>>, vector<1x8x192xbf16>,
    %c0_97 = arith.constant 0 : index
    %c0_98 = arith.constant 0 : index
    %117 = vector.load %arg2[%c0_97, %c0_98] : memref<8x200xbf16, #tpu.memory_space<vmem>>, vector<8x200xbf16>
    %c0_99 = arith.constant 0 : index
    %c0_100 = arith.constant 0 : index
    %c0_101 = arith.constant 0 : index
    %118 = vector.load %arg16[%c0_99, %c0_100, %c0_101] : memref<4x200x192xbf16, #tpu.memory_space<vmem>>, vector<1x200x192xbf16>
    %119 = vector.shape_cast %118 : vector<1x200x192xbf16> to vector<200x192xbf16>
    %cst_102 = arith.constant dense<0.000000e+00> : vector<8x192xf32>
    %120 = tpu.matmul %117, %119, %cst_102 {dimension_numbers = #tpu.dot_dimension_numbers<[1], [0], [0], [1], [0, 0, 1, 1], [], []>} : vector<8x200xbf16>, vector<200x192xbf16>, vector<8x192xf32> -> vector<8x192xf32>
    %c0_103 = arith.constant 0 : index
    %c0_104 = arith.constant 0 : index
    %121 = vector.load %arg3[%c0_103, %c0_104] : memref<8x1xf32, #tpu.memory_space<vmem>>, vector<8x1xf32>
    %122 = vector.broadcast %121 : vector<8x1xf32> to vector<8x192xf32>
    %123 = arith.mulf %120, %122 : vector<8x192xf32>
    %c0_105 = arith.constant 0 : index
    %c0_106 = arith.constant 0 : index
    %124 = vector.load %arg4[%c0_105, %c0_106] : memref<8x1xf32, #tpu.memory_space<vmem>>, vector<8x1xf32>
    %125 = vector.broadcast %124 : vector<8x1xf32> to vector<8x192xf32>
    %126 = arith.addf %123, %125 : vector<8x192xf32>
    %cst_107 = arith.constant 0.000000e+00 : f32
    %127 = vector.broadcast %cst_107 : f32 to vector<8x192xf32>
    %128 = arith.maximumf %126, %127 : vector<8x192xf32>
    %c0_108 = arith.constant 0 : index
    %c8_109 = arith.constant 8 : index
    %c15_110 = arith.constant 15 : index
    %129 = vector.load %arg1[%c0_108, %c8_109, %c15_110] : memref<1x32x256xf32, #tpu.memory_space<vmem>>, vector<1x8x192xf32>
    %130 = vector.shape_cast %129 : vector<1x8x192xf32> to vector<8x192xf32>
    %c0_111 = arith.constant 0 : index
    %c0_112 = arith.constant 0 : index
    %c16_113 = arith.constant 16 : index
    %131 = vector.load %arg1[%c0_111, %c0_112, %c16_113] : memref<1x32x256xf32, #tpu.memory_space<vmem>>, vector<1x8x192xf32>
    %132 = vector.shape_cast %131 : vector<1x8x192xf32> to vector<8x192xf32>
    %133 = tpu.concatenate %130, %132 in 0 : vector<8x192xf32>, vector<8x192xf32> -> vector<16x192xf32>
    %134 = arith.truncf %133 : vector<16x192xf32> to vector<16x192xbf16>
    %c1 = arith.constant 1 : index
    %c0_114 = arith.constant 0 : index
    %c0_115 = arith.constant 0 : index
    %135 = vector.load %arg16[%c1, %c0_114, %c0_115] : memref<4x200x192xbf16, #tpu.memory_space<vmem>>, vector<1x16x192xbf16>
    %136 = vector.shape_cast %135 : vector<1x16x192xbf16> to vector<16x192xbf16>
    %137 = vector.shape_cast %134 : vector<16x192xbf16> to vector<1x16x192xbf16>
    tpu.vector_store %arg16[%c1, %c0_114, %c0_115], %137 {strides = array<i32>} : memref<4x200x192xbf16, #tpu.memory_space<vmem>>, vector<1x16x192xbf16>,
    %c0_116 = arith.constant 0 : index
    %c8_117 = arith.constant 8 : index
    %c16_118 = arith.constant 16 : index
    %138 = vector.load %arg1[%c0_116, %c8_117, %c16_118] : memref<1x32x256xf32, #tpu.memory_space<vmem>>, vector<1x8x192xf32>
    %139 = vector.shape_cast %138 : vector<1x8x192xf32> to vector<8x192xf32>
    %c0_119 = arith.constant 0 : index
    %c0_120 = arith.constant 0 : index
    %c17_121 = arith.constant 17 : index
    %140 = vector.load %arg1[%c0_119, %c0_120, %c17_121] : memref<1x32x256xf32, #tpu.memory_space<vmem>>, vector<1x8x192xf32>
    %141 = vector.shape_cast %140 : vector<1x8x192xf32> to vector<8x192xf32>
    %142 = tpu.concatenate %139, %141 in 0 : vector<8x192xf32>, vector<8x192xf32> -> vector<16x192xf32>
    %143 = arith.truncf %142 : vector<16x192xf32> to vector<16x192xbf16>
    %c1_122 = arith.constant 1 : index
    %c16_123 = arith.constant 16 : index
    %c0_124 = arith.constant 0 : index
    %144 = vector.load %arg16[%c1_122, %c16_123, %c0_124] : memref<4x200x192xbf16, #tpu.memory_space<vmem>>, vector<1x16x192xbf16>
    %145 = vector.shape_cast %144 : vector<1x16x192xbf16> to vector<16x192xbf16>
    %146 = vector.shape_cast %143 : vector<16x192xbf16> to vector<1x16x192xbf16>
    tpu.vector_store %arg16[%c1_122, %c16_123, %c0_124], %146 {strides = array<i32>} : memref<4x200x192xbf16, #tpu.memory_space<vmem>>, vector<1x16x192xbf16>,
    %c0_125 = arith.constant 0 : index
    %c8_126 = arith.constant 8 : index
    %c17_127 = arith.constant 17 : index
    %147 = vector.load %arg1[%c0_125, %c8_126, %c17_127] : memref<1x32x256xf32, #tpu.memory_space<vmem>>, vector<1x8x192xf32>
    %148 = vector.shape_cast %147 : vector<1x8x192xf32> to vector<8x192xf32>
    %c0_128 = arith.constant 0 : index
    %c24_129 = arith.constant 24 : index
    %c15_130 = arith.constant 15 : index
    %149 = vector.load %arg1[%c0_128, %c24_129, %c15_130] : memref<1x32x256xf32, #tpu.memory_space<vmem>>, vector<1x8x192xf32>
    %150 = vector.shape_cast %149 : vector<1x8x192xf32> to vector<8x192xf32>
    %151 = tpu.concatenate %148, %150 in 0 : vector<8x192xf32>, vector<8x192xf32> -> vector<16x192xf32>
    %152 = arith.truncf %151 : vector<16x192xf32> to vector<16x192xbf16>
    %c1_131 = arith.constant 1 : index
    %c32_132 = arith.constant 32 : index
    %c0_133 = arith.constant 0 : index
    %153 = vector.load %arg16[%c1_131, %c32_132, %c0_133] : memref<4x200x192xbf16, #tpu.memory_space<vmem>>, vector<1x16x192xbf16>
    %154 = vector.shape_cast %153 : vector<1x16x192xbf16> to vector<16x192xbf16>
    %155 = vector.shape_cast %152 : vector<16x192xbf16> to vector<1x16x192xbf16>
    tpu.vector_store %arg16[%c1_131, %c32_132, %c0_133], %155 {strides = array<i32>} : memref<4x200x192xbf16, #tpu.memory_space<vmem>>, vector<1x16x192xbf16>,
    %c0_134 = arith.constant 0 : index
    %c16_135 = arith.constant 16 : index
    %c16_136 = arith.constant 16 : index
    %156 = vector.load %arg1[%c0_134, %c16_135, %c16_136] : memref<1x32x256xf32, #tpu.memory_space<vmem>>, vector<1x8x192xf32>
    %157 = vector.shape_cast %156 : vector<1x8x192xf32> to vector<8x192xf32>
    %c0_137 = arith.constant 0 : index
    %c24_138 = arith.constant 24 : index
    %c16_139 = arith.constant 16 : index
    %158 = vector.load %arg1[%c0_137, %c24_138, %c16_139] : memref<1x32x256xf32, #tpu.memory_space<vmem>>, vector<1x8x192xf32>
    %159 = vector.shape_cast %158 : vector<1x8x192xf32> to vector<8x192xf32>
    %160 = tpu.concatenate %157, %159 in 0 : vector<8x192xf32>, vector<8x192xf32> -> vector<16x192xf32>
    %161 = arith.truncf %160 : vector<16x192xf32> to vector<16x192xbf16>
    %c1_140 = arith.constant 1 : index
    %c48_141 = arith.constant 48 : index
    %c0_142 = arith.constant 0 : index
    %162 = vector.load %arg16[%c1_140, %c48_141, %c0_142] : memref<4x200x192xbf16, #tpu.memory_space<vmem>>, vector<1x16x192xbf16>
    %163 = vector.shape_cast %162 : vector<1x16x192xbf16> to vector<16x192xbf16>
    %164 = vector.shape_cast %161 : vector<16x192xbf16> to vector<1x16x192xbf16>
    tpu.vector_store %arg16[%c1_140, %c48_141, %c0_142], %164 {strides = array<i32>} : memref<4x200x192xbf16, #tpu.memory_space<vmem>>, vector<1x16x192xbf16>,
    %c0_143 = arith.constant 0 : index
    %c16_144 = arith.constant 16 : index
    %c17_145 = arith.constant 17 : index
    %165 = vector.load %arg1[%c0_143, %c16_144, %c17_145] : memref<1x32x256xf32, #tpu.memory_space<vmem>>, vector<1x8x192xf32>
    %166 = vector.shape_cast %165 : vector<1x8x192xf32> to vector<8x192xf32>
    %c0_146 = arith.constant 0 : index
    %c24_147 = arith.constant 24 : index
    %c17_148 = arith.constant 17 : index
    %167 = vector.load %arg1[%c0_146, %c24_147, %c17_148] : memref<1x32x256xf32, #tpu.memory_space<vmem>>, vector<1x8x192xf32>
    %168 = vector.shape_cast %167 : vector<1x8x192xf32> to vector<8x192xf32>
    %169 = tpu.concatenate %166, %168 in 0 : vector<8x192xf32>, vector<8x192xf32> -> vector<16x192xf32>
    %170 = arith.truncf %169 : vector<16x192xf32> to vector<16x192xbf16>
    %c1_149 = arith.constant 1 : index
    %c64_150 = arith.constant 64 : index
    %c0_151 = arith.constant 0 : index
    %171 = vector.load %arg16[%c1_149, %c64_150, %c0_151] : memref<4x200x192xbf16, #tpu.memory_space<vmem>>, vector<1x16x192xbf16>
    %172 = vector.shape_cast %171 : vector<1x16x192xbf16> to vector<16x192xbf16>
    %173 = vector.shape_cast %170 : vector<16x192xbf16> to vector<1x16x192xbf16>
    tpu.vector_store %arg16[%c1_149, %c64_150, %c0_151], %173 {strides = array<i32>} : memref<4x200x192xbf16, #tpu.memory_space<vmem>>, vector<1x16x192xbf16>,
    %c0_152 = arith.constant 0 : index
    %c8_153 = arith.constant 8 : index
    %c31_154 = arith.constant 31 : index
    %174 = vector.load %arg1[%c0_152, %c8_153, %c31_154] : memref<1x32x256xf32, #tpu.memory_space<vmem>>, vector<1x8x192xf32>
    %175 = vector.shape_cast %174 : vector<1x8x192xf32> to vector<8x192xf32>
    %c0_155 = arith.constant 0 : index
    %c0_156 = arith.constant 0 : index
    %c32_157 = arith.constant 32 : index
    %176 = vector.load %arg1[%c0_155, %c0_156, %c32_157] : memref<1x32x256xf32, #tpu.memory_space<vmem>>, vector<1x8x192xf32>
    %177 = vector.shape_cast %176 : vector<1x8x192xf32> to vector<8x192xf32>
    %178 = tpu.concatenate %175, %177 in 0 : vector<8x192xf32>, vector<8x192xf32> -> vector<16x192xf32>
    %179 = arith.truncf %178 : vector<16x192xf32> to vector<16x192xbf16>
    %c1_158 = arith.constant 1 : index
    %c80_159 = arith.constant 80 : index
    %c0_160 = arith.constant 0 : index
    %180 = vector.load %arg16[%c1_158, %c80_159, %c0_160] : memref<4x200x192xbf16, #tpu.memory_space<vmem>>, vector<1x16x192xbf16>
    %181 = vector.shape_cast %180 : vector<1x16x192xbf16> to vector<16x192xbf16>
    %182 = vector.shape_cast %179 : vector<16x192xbf16> to vector<1x16x192xbf16>
    tpu.vector_store %arg16[%c1_158, %c80_159, %c0_160], %182 {strides = array<i32>} : memref<4x200x192xbf16, #tpu.memory_space<vmem>>, vector<1x16x192xbf16>,
    %c0_161 = arith.constant 0 : index
    %c8_162 = arith.constant 8 : index
    %c32_163 = arith.constant 32 : index
    %183 = vector.load %arg1[%c0_161, %c8_162, %c32_163] : memref<1x32x256xf32, #tpu.memory_space<vmem>>, vector<1x8x192xf32>
    %184 = vector.shape_cast %183 : vector<1x8x192xf32> to vector<8x192xf32>
    %c0_164 = arith.constant 0 : index
    %c0_165 = arith.constant 0 : index
    %c33_166 = arith.constant 33 : index
    %185 = vector.load %arg1[%c0_164, %c0_165, %c33_166] : memref<1x32x256xf32, #tpu.memory_space<vmem>>, vector<1x8x192xf32>
    %186 = vector.shape_cast %185 : vector<1x8x192xf32> to vector<8x192xf32>
    %187 = tpu.concatenate %184, %186 in 0 : vector<8x192xf32>, vector<8x192xf32> -> vector<16x192xf32>
    %188 = arith.truncf %187 : vector<16x192xf32> to vector<16x192xbf16>
    %c1_167 = arith.constant 1 : index
    %c96_168 = arith.constant 96 : index
    %c0_169 = arith.constant 0 : index
    %189 = vector.load %arg16[%c1_167, %c96_168, %c0_169] : memref<4x200x192xbf16, #tpu.memory_space<vmem>>, vector<1x16x192xbf16>
    %190 = vector.shape_cast %189 : vector<1x16x192xbf16> to vector<16x192xbf16>
    %191 = vector.shape_cast %188 : vector<16x192xbf16> to vector<1x16x192xbf16>
    tpu.vector_store %arg16[%c1_167, %c96_168, %c0_169], %191 {strides = array<i32>} : memref<4x200x192xbf16, #tpu.memory_space<vmem>>, vector<1x16x192xbf16>,
    %c0_170 = arith.constant 0 : index
    %c8_171 = arith.constant 8 : index
    %c33_172 = arith.constant 33 : index
    %192 = vector.load %arg1[%c0_170, %c8_171, %c33_172] : memref<1x32x256xf32, #tpu.memory_space<vmem>>, vector<1x8x192xf32>
    %193 = vector.shape_cast %192 : vector<1x8x192xf32> to vector<8x192xf32>
    %c0_173 = arith.constant 0 : index
    %c24_174 = arith.constant 24 : index
    %c31_175 = arith.constant 31 : index
    %194 = vector.load %arg1[%c0_173, %c24_174, %c31_175] : memref<1x32x256xf32, #tpu.memory_space<vmem>>, vector<1x8x192xf32>
    %195 = vector.shape_cast %194 : vector<1x8x192xf32> to vector<8x192xf32>
    %196 = tpu.concatenate %193, %195 in 0 : vector<8x192xf32>, vector<8x192xf32> -> vector<16x192xf32>
    %197 = arith.truncf %196 : vector<16x192xf32> to vector<16x192xbf16>
    %c1_176 = arith.constant 1 : index
    %c112_177 = arith.constant 112 : index
    %c0_178 = arith.constant 0 : index
    %198 = vector.load %arg16[%c1_176, %c112_177, %c0_178] : memref<4x200x192xbf16, #tpu.memory_space<vmem>>, vector<1x16x192xbf16>
    %199 = vector.shape_cast %198 : vector<1x16x192xbf16> to vector<16x192xbf16>
    %200 = vector.shape_cast %197 : vector<16x192xbf16> to vector<1x16x192xbf16>
    tpu.vector_store %arg16[%c1_176, %c112_177, %c0_178], %200 {strides = array<i32>} : memref<4x200x192xbf16, #tpu.memory_space<vmem>>, vector<1x16x192xbf16>,
    %c0_179 = arith.constant 0 : index
    %c16_180 = arith.constant 16 : index
    %c32_181 = arith.constant 32 : index
    %201 = vector.load %arg1[%c0_179, %c16_180, %c32_181] : memref<1x32x256xf32, #tpu.memory_space<vmem>>, vector<1x8x192xf32>
    %202 = vector.shape_cast %201 : vector<1x8x192xf32> to vector<8x192xf32>
    %c0_182 = arith.constant 0 : index
    %c24_183 = arith.constant 24 : index
    %c32_184 = arith.constant 32 : index
    %203 = vector.load %arg1[%c0_182, %c24_183, %c32_184] : memref<1x32x256xf32, #tpu.memory_space<vmem>>, vector<1x8x192xf32>
    %204 = vector.shape_cast %203 : vector<1x8x192xf32> to vector<8x192xf32>
    %205 = tpu.concatenate %202, %204 in 0 : vector<8x192xf32>, vector<8x192xf32> -> vector<16x192xf32>
    %206 = arith.truncf %205 : vector<16x192xf32> to vector<16x192xbf16>
    %c1_185 = arith.constant 1 : index
    %c128_186 = arith.constant 128 : index
    %c0_187 = arith.constant 0 : index
    %207 = vector.load %arg16[%c1_185, %c128_186, %c0_187] : memref<4x200x192xbf16, #tpu.memory_space<vmem>>, vector<1x16x192xbf16>
    %208 = vector.shape_cast %207 : vector<1x16x192xbf16> to vector<16x192xbf16>
    %209 = vector.shape_cast %206 : vector<16x192xbf16> to vector<1x16x192xbf16>
    tpu.vector_store %arg16[%c1_185, %c128_186, %c0_187], %209 {strides = array<i32>} : memref<4x200x192xbf16, #tpu.memory_space<vmem>>, vector<1x16x192xbf16>,
    %c0_188 = arith.constant 0 : index
    %c16_189 = arith.constant 16 : index
    %c33_190 = arith.constant 33 : index
    %210 = vector.load %arg1[%c0_188, %c16_189, %c33_190] : memref<1x32x256xf32, #tpu.memory_space<vmem>>, vector<1x8x192xf32>
    %211 = vector.shape_cast %210 : vector<1x8x192xf32> to vector<8x192xf32>
    %c0_191 = arith.constant 0 : index
    %c24_192 = arith.constant 24 : index
    %c33_193 = arith.constant 33 : index
    %212 = vector.load %arg1[%c0_191, %c24_192, %c33_193] : memref<1x32x256xf32, #tpu.memory_space<vmem>>, vector<1x8x192xf32>
    %213 = vector.shape_cast %212 : vector<1x8x192xf32> to vector<8x192xf32>
    %214 = tpu.concatenate %211, %213 in 0 : vector<8x192xf32>, vector<8x192xf32> -> vector<16x192xf32>
    %215 = arith.truncf %214 : vector<16x192xf32> to vector<16x192xbf16>
    %c1_194 = arith.constant 1 : index
    %c144_195 = arith.constant 144 : index
    %c0_196 = arith.constant 0 : index
    %216 = vector.load %arg16[%c1_194, %c144_195, %c0_196] : memref<4x200x192xbf16, #tpu.memory_space<vmem>>, vector<1x16x192xbf16>
    %217 = vector.shape_cast %216 : vector<1x16x192xbf16> to vector<16x192xbf16>
    %218 = vector.shape_cast %215 : vector<16x192xbf16> to vector<1x16x192xbf16>
    tpu.vector_store %arg16[%c1_194, %c144_195, %c0_196], %218 {strides = array<i32>} : memref<4x200x192xbf16, #tpu.memory_space<vmem>>, vector<1x16x192xbf16>,
    %c0_197 = arith.constant 0 : index
    %c8_198 = arith.constant 8 : index
    %c47_199 = arith.constant 47 : index
    %219 = vector.load %arg1[%c0_197, %c8_198, %c47_199] : memref<1x32x256xf32, #tpu.memory_space<vmem>>, vector<1x8x192xf32>
    %220 = vector.shape_cast %219 : vector<1x8x192xf32> to vector<8x192xf32>
    %c0_200 = arith.constant 0 : index
    %c0_201 = arith.constant 0 : index
    %c48_202 = arith.constant 48 : index
    %221 = vector.load %arg1[%c0_200, %c0_201, %c48_202] : memref<1x32x256xf32, #tpu.memory_space<vmem>>, vector<1x8x192xf32>
    %222 = vector.shape_cast %221 : vector<1x8x192xf32> to vector<8x192xf32>
    %223 = tpu.concatenate %220, %222 in 0 : vector<8x192xf32>, vector<8x192xf32> -> vector<16x192xf32>
    %224 = arith.truncf %223 : vector<16x192xf32> to vector<16x192xbf16>
    %c1_203 = arith.constant 1 : index
    %c160_204 = arith.constant 160 : index
    %c0_205 = arith.constant 0 : index
    %225 = vector.load %arg16[%c1_203, %c160_204, %c0_205] : memref<4x200x192xbf16, #tpu.memory_space<vmem>>, vector<1x16x192xbf16>
    %226 = vector.shape_cast %225 : vector<1x16x192xbf16> to vector<16x192xbf16>
    %227 = vector.shape_cast %224 : vector<16x192xbf16> to vector<1x16x192xbf16>
    tpu.vector_store %arg16[%c1_203, %c160_204, %c0_205], %227 {strides = array<i32>} : memref<4x200x192xbf16, #tpu.memory_space<vmem>>, vector<1x16x192xbf16>,
    %c0_206 = arith.constant 0 : index
    %c8_207 = arith.constant 8 : index
    %c48_208 = arith.constant 48 : index
    %228 = vector.load %arg1[%c0_206, %c8_207, %c48_208] : memref<1x32x256xf32, #tpu.memory_space<vmem>>, vector<1x8x192xf32>
    %229 = vector.shape_cast %228 : vector<1x8x192xf32> to vector<8x192xf32>
    %c0_209 = arith.constant 0 : index
    %c0_210 = arith.constant 0 : index
    %c49_211 = arith.constant 49 : index
    %230 = vector.load %arg1[%c0_209, %c0_210, %c49_211] : memref<1x32x256xf32, #tpu.memory_space<vmem>>, vector<1x8x192xf32>
    %231 = vector.shape_cast %230 : vector<1x8x192xf32> to vector<8x192xf32>
    %232 = tpu.concatenate %229, %231 in 0 : vector<8x192xf32>, vector<8x192xf32> -> vector<16x192xf32>
    %233 = arith.truncf %232 : vector<16x192xf32> to vector<16x192xbf16>
    %c1_212 = arith.constant 1 : index
    %c176_213 = arith.constant 176 : index
    %c0_214 = arith.constant 0 : index
    %234 = vector.load %arg16[%c1_212, %c176_213, %c0_214] : memref<4x200x192xbf16, #tpu.memory_space<vmem>>, vector<1x16x192xbf16>
    %235 = vector.shape_cast %234 : vector<1x16x192xbf16> to vector<16x192xbf16>
    %236 = vector.shape_cast %233 : vector<16x192xbf16> to vector<1x16x192xbf16>
    tpu.vector_store %arg16[%c1_212, %c176_213, %c0_214], %236 {strides = array<i32>} : memref<4x200x192xbf16, #tpu.memory_space<vmem>>, vector<1x16x192xbf16>,
    %c0_215 = arith.constant 0 : index
    %c8_216 = arith.constant 8 : index
    %c49_217 = arith.constant 49 : index
    %237 = vector.load %arg1[%c0_215, %c8_216, %c49_217] : memref<1x32x256xf32, #tpu.memory_space<vmem>>, vector<1x8x192xf32>
    %238 = vector.shape_cast %237 : vector<1x8x192xf32> to vector<8x192xf32>
    %239 = arith.truncf %238 : vector<8x192xf32> to vector<8x192xbf16>
    %c1_218 = arith.constant 1 : index
    %c192_219 = arith.constant 192 : index
    %c0_220 = arith.constant 0 : index
    %240 = vector.load %arg16[%c1_218, %c192_219, %c0_220] : memref<4x200x192xbf16, #tpu.memory_space<vmem>>, vector<1x8x192xbf16>
    %241 = vector.shape_cast %240 : vector<1x8x192xbf16> to vector<8x192xbf16>
    %242 = vector.shape_cast %239 : vector<8x192xbf16> to vector<1x8x192xbf16>
    tpu.vector_store %arg16[%c1_218, %c192_219, %c0_220], %242 {strides = array<i32>} : memref<4x200x192xbf16, #tpu.memory_space<vmem>>, vector<1x8x192xbf16>,
    %c0_221 = arith.constant 0 : index
    %c0_222 = arith.constant 0 : index
    %243 = vector.load %arg2[%c0_221, %c0_222] : memref<8x200xbf16, #tpu.memory_space<vmem>>, vector<8x200xbf16>
    %c1_223 = arith.constant 1 : index
    %c0_224 = arith.constant 0 : index
    %c0_225 = arith.constant 0 : index
    %244 = vector.load %arg16[%c1_223, %c0_224, %c0_225] : memref<4x200x192xbf16, #tpu.memory_space<vmem>>, vector<1x200x192xbf16>
    %245 = vector.shape_cast %244 : vector<1x200x192xbf16> to vector<200x192xbf16>
    %cst_226 = arith.constant dense<0.000000e+00> : vector<8x192xf32>
    %246 = tpu.matmul %243, %245, %cst_226 {dimension_numbers = #tpu.dot_dimension_numbers<[1], [0], [0], [1], [0, 0, 1, 1], [], []>} : vector<8x200xbf16>, vector<200x192xbf16>, vector<8x192xf32> -> vector<8x192xf32>
    %c0_227 = arith.constant 0 : index
    %c0_228 = arith.constant 0 : index
    %247 = vector.load %arg3[%c0_227, %c0_228] : memref<8x1xf32, #tpu.memory_space<vmem>>, vector<8x1xf32>
    %248 = vector.broadcast %247 : vector<8x1xf32> to vector<8x192xf32>
    %249 = arith.mulf %246, %248 : vector<8x192xf32>
    %c0_229 = arith.constant 0 : index
    %c0_230 = arith.constant 0 : index
    %250 = vector.load %arg4[%c0_229, %c0_230] : memref<8x1xf32, #tpu.memory_space<vmem>>, vector<8x1xf32>
    %251 = vector.broadcast %250 : vector<8x1xf32> to vector<8x192xf32>
    %252 = arith.addf %249, %251 : vector<8x192xf32>
    %cst_231 = arith.constant 0.000000e+00 : f32
    %253 = vector.broadcast %cst_231 : f32 to vector<8x192xf32>
    %254 = arith.maximumf %252, %253 : vector<8x192xf32>
    %255 = arith.maximumf %128, %254 : vector<8x192xf32>
    %c0_232 = arith.constant 0 : index
    %c16_233 = arith.constant 16 : index
    %c15_234 = arith.constant 15 : index
    %256 = vector.load %arg1[%c0_232, %c16_233, %c15_234] : memref<1x32x256xf32, #tpu.memory_space<vmem>>, vector<1x8x192xf32>
    %257 = vector.shape_cast %256 : vector<1x8x192xf32> to vector<8x192xf32>
    %c0_235 = arith.constant 0 : index
    %c24_236 = arith.constant 24 : index
    %c15_237 = arith.constant 15 : index
    %258 = vector.load %arg1[%c0_235, %c24_236, %c15_237] : memref<1x32x256xf32, #tpu.memory_space<vmem>>, vector<1x8x192xf32>
    %259 = vector.shape_cast %258 : vector<1x8x192xf32> to vector<8x192xf32>
    %260 = tpu.concatenate %257, %259 in 0 : vector<8x192xf32>, vector<8x192xf32> -> vector<16x192xf32>
    %261 = arith.truncf %260 : vector<16x192xf32> to vector<16x192xbf16>
    %c2 = arith.constant 2 : index
    %c0_238 = arith.constant 0 : index
    %c0_239 = arith.constant 0 : index
    %262 = vector.load %arg16[%c2, %c0_238, %c0_239] : memref<4x200x192xbf16, #tpu.memory_space<vmem>>, vector<1x16x192xbf16>
    %263 = vector.shape_cast %262 : vector<1x16x192xbf16> to vector<16x192xbf16>
    %264 = vector.shape_cast %261 : vector<16x192xbf16> to vector<1x16x192xbf16>
    tpu.vector_store %arg16[%c2, %c0_238, %c0_239], %264 {strides = array<i32>} : memref<4x200x192xbf16, #tpu.memory_space<vmem>>, vector<1x16x192xbf16>,
    %c0_240 = arith.constant 0 : index
    %c16_241 = arith.constant 16 : index
    %c16_242 = arith.constant 16 : index
    %265 = vector.load %arg1[%c0_240, %c16_241, %c16_242] : memref<1x32x256xf32, #tpu.memory_space<vmem>>, vector<1x8x192xf32>
    %266 = vector.shape_cast %265 : vector<1x8x192xf32> to vector<8x192xf32>
    %c0_243 = arith.constant 0 : index
    %c24_244 = arith.constant 24 : index
    %c16_245 = arith.constant 16 : index
    %267 = vector.load %arg1[%c0_243, %c24_244, %c16_245] : memref<1x32x256xf32, #tpu.memory_space<vmem>>, vector<1x8x192xf32>
    %268 = vector.shape_cast %267 : vector<1x8x192xf32> to vector<8x192xf32>
    %269 = tpu.concatenate %266, %268 in 0 : vector<8x192xf32>, vector<8x192xf32> -> vector<16x192xf32>
    %270 = arith.truncf %269 : vector<16x192xf32> to vector<16x192xbf16>
    %c2_246 = arith.constant 2 : index
    %c16_247 = arith.constant 16 : index
    %c0_248 = arith.constant 0 : index
    %271 = vector.load %arg16[%c2_246, %c16_247, %c0_248] : memref<4x200x192xbf16, #tpu.memory_space<vmem>>, vector<1x16x192xbf16>
    %272 = vector.shape_cast %271 : vector<1x16x192xbf16> to vector<16x192xbf16>
    %273 = vector.shape_cast %270 : vector<16x192xbf16> to vector<1x16x192xbf16>
    tpu.vector_store %arg16[%c2_246, %c16_247, %c0_248], %273 {strides = array<i32>} : memref<4x200x192xbf16, #tpu.memory_space<vmem>>, vector<1x16x192xbf16>,
    %c0_249 = arith.constant 0 : index
    %c16_250 = arith.constant 16 : index
    %c17_251 = arith.constant 17 : index
    %274 = vector.load %arg1[%c0_249, %c16_250, %c17_251] : memref<1x32x256xf32, #tpu.memory_space<vmem>>, vector<1x8x192xf32>
    %275 = vector.shape_cast %274 : vector<1x8x192xf32> to vector<8x192xf32>
    %c0_252 = arith.constant 0 : index
    %c0_253 = arith.constant 0 : index
    %c31_254 = arith.constant 31 : index
    %276 = vector.load %arg1[%c0_252, %c0_253, %c31_254] : memref<1x32x256xf32, #tpu.memory_space<vmem>>, vector<1x8x192xf32>
    %277 = vector.shape_cast %276 : vector<1x8x192xf32> to vector<8x192xf32>
    %278 = tpu.concatenate %275, %277 in 0 : vector<8x192xf32>, vector<8x192xf32> -> vector<16x192xf32>
    %279 = arith.truncf %278 : vector<16x192xf32> to vector<16x192xbf16>
    %c2_255 = arith.constant 2 : index
    %c32_256 = arith.constant 32 : index
    %c0_257 = arith.constant 0 : index
    %280 = vector.load %arg16[%c2_255, %c32_256, %c0_257] : memref<4x200x192xbf16, #tpu.memory_space<vmem>>, vector<1x16x192xbf16>
    %281 = vector.shape_cast %280 : vector<1x16x192xbf16> to vector<16x192xbf16>
    %282 = vector.shape_cast %279 : vector<16x192xbf16> to vector<1x16x192xbf16>
    tpu.vector_store %arg16[%c2_255, %c32_256, %c0_257], %282 {strides = array<i32>} : memref<4x200x192xbf16, #tpu.memory_space<vmem>>, vector<1x16x192xbf16>,
    %c0_258 = arith.constant 0 : index
    %c8_259 = arith.constant 8 : index
    %c31_260 = arith.constant 31 : index
    %283 = vector.load %arg1[%c0_258, %c8_259, %c31_260] : memref<1x32x256xf32, #tpu.memory_space<vmem>>, vector<1x8x192xf32>
    %284 = vector.shape_cast %283 : vector<1x8x192xf32> to vector<8x192xf32>
    %c0_261 = arith.constant 0 : index
    %c0_262 = arith.constant 0 : index
    %c32_263 = arith.constant 32 : index
    %285 = vector.load %arg1[%c0_261, %c0_262, %c32_263] : memref<1x32x256xf32, #tpu.memory_space<vmem>>, vector<1x8x192xf32>
    %286 = vector.shape_cast %285 : vector<1x8x192xf32> to vector<8x192xf32>
    %287 = tpu.concatenate %284, %286 in 0 : vector<8x192xf32>, vector<8x192xf32> -> vector<16x192xf32>
    %288 = arith.truncf %287 : vector<16x192xf32> to vector<16x192xbf16>
    %c2_264 = arith.constant 2 : index
    %c48_265 = arith.constant 48 : index
    %c0_266 = arith.constant 0 : index
    %289 = vector.load %arg16[%c2_264, %c48_265, %c0_266] : memref<4x200x192xbf16, #tpu.memory_space<vmem>>, vector<1x16x192xbf16>
    %290 = vector.shape_cast %289 : vector<1x16x192xbf16> to vector<16x192xbf16>
    %291 = vector.shape_cast %288 : vector<16x192xbf16> to vector<1x16x192xbf16>
    tpu.vector_store %arg16[%c2_264, %c48_265, %c0_266], %291 {strides = array<i32>} : memref<4x200x192xbf16, #tpu.memory_space<vmem>>, vector<1x16x192xbf16>,
    %c0_267 = arith.constant 0 : index
    %c8_268 = arith.constant 8 : index
    %c32_269 = arith.constant 32 : index
    %292 = vector.load %arg1[%c0_267, %c8_268, %c32_269] : memref<1x32x256xf32, #tpu.memory_space<vmem>>, vector<1x8x192xf32>
    %293 = vector.shape_cast %292 : vector<1x8x192xf32> to vector<8x192xf32>
    %c0_270 = arith.constant 0 : index
    %c0_271 = arith.constant 0 : index
    %c33_272 = arith.constant 33 : index
    %294 = vector.load %arg1[%c0_270, %c0_271, %c33_272] : memref<1x32x256xf32, #tpu.memory_space<vmem>>, vector<1x8x192xf32>
    %295 = vector.shape_cast %294 : vector<1x8x192xf32> to vector<8x192xf32>
    %296 = tpu.concatenate %293, %295 in 0 : vector<8x192xf32>, vector<8x192xf32> -> vector<16x192xf32>
    %297 = arith.truncf %296 : vector<16x192xf32> to vector<16x192xbf16>
    %c2_273 = arith.constant 2 : index
    %c64_274 = arith.constant 64 : index
    %c0_275 = arith.constant 0 : index
    %298 = vector.load %arg16[%c2_273, %c64_274, %c0_275] : memref<4x200x192xbf16, #tpu.memory_space<vmem>>, vector<1x16x192xbf16>
    %299 = vector.shape_cast %298 : vector<1x16x192xbf16> to vector<16x192xbf16>
    %300 = vector.shape_cast %297 : vector<16x192xbf16> to vector<1x16x192xbf16>
    tpu.vector_store %arg16[%c2_273, %c64_274, %c0_275], %300 {strides = array<i32>} : memref<4x200x192xbf16, #tpu.memory_space<vmem>>, vector<1x16x192xbf16>,
    %c0_276 = arith.constant 0 : index
    %c16_277 = arith.constant 16 : index
    %c31_278 = arith.constant 31 : index
    %301 = vector.load %arg1[%c0_276, %c16_277, %c31_278] : memref<1x32x256xf32, #tpu.memory_space<vmem>>, vector<1x8x192xf32>
    %302 = vector.shape_cast %301 : vector<1x8x192xf32> to vector<8x192xf32>
    %c0_279 = arith.constant 0 : index
    %c24_280 = arith.constant 24 : index
    %c31_281 = arith.constant 31 : index
    %303 = vector.load %arg1[%c0_279, %c24_280, %c31_281] : memref<1x32x256xf32, #tpu.memory_space<vmem>>, vector<1x8x192xf32>
    %304 = vector.shape_cast %303 : vector<1x8x192xf32> to vector<8x192xf32>
    %305 = tpu.concatenate %302, %304 in 0 : vector<8x192xf32>, vector<8x192xf32> -> vector<16x192xf32>
    %306 = arith.truncf %305 : vector<16x192xf32> to vector<16x192xbf16>
    %c2_282 = arith.constant 2 : index
    %c80_283 = arith.constant 80 : index
    %c0_284 = arith.constant 0 : index
    %307 = vector.load %arg16[%c2_282, %c80_283, %c0_284] : memref<4x200x192xbf16, #tpu.memory_space<vmem>>, vector<1x16x192xbf16>
    %308 = vector.shape_cast %307 : vector<1x16x192xbf16> to vector<16x192xbf16>
    %309 = vector.shape_cast %306 : vector<16x192xbf16> to vector<1x16x192xbf16>
    tpu.vector_store %arg16[%c2_282, %c80_283, %c0_284], %309 {strides = array<i32>} : memref<4x200x192xbf16, #tpu.memory_space<vmem>>, vector<1x16x192xbf16>,
    %c0_285 = arith.constant 0 : index
    %c16_286 = arith.constant 16 : index
    %c32_287 = arith.constant 32 : index
    %310 = vector.load %arg1[%c0_285, %c16_286, %c32_287] : memref<1x32x256xf32, #tpu.memory_space<vmem>>, vector<1x8x192xf32>
    %311 = vector.shape_cast %310 : vector<1x8x192xf32> to vector<8x192xf32>
    %c0_288 = arith.constant 0 : index
    %c24_289 = arith.constant 24 : index
    %c32_290 = arith.constant 32 : index
    %312 = vector.load %arg1[%c0_288, %c24_289, %c32_290] : memref<1x32x256xf32, #tpu.memory_space<vmem>>, vector<1x8x192xf32>
    %313 = vector.shape_cast %312 : vector<1x8x192xf32> to vector<8x192xf32>
    %314 = tpu.concatenate %311, %313 in 0 : vector<8x192xf32>, vector<8x192xf32> -> vector<16x192xf32>
    %315 = arith.truncf %314 : vector<16x192xf32> to vector<16x192xbf16>
    %c2_291 = arith.constant 2 : index
    %c96_292 = arith.constant 96 : index
    %c0_293 = arith.constant 0 : index
    %316 = vector.load %arg16[%c2_291, %c96_292, %c0_293] : memref<4x200x192xbf16, #tpu.memory_space<vmem>>, vector<1x16x192xbf16>
    %317 = vector.shape_cast %316 : vector<1x16x192xbf16> to vector<16x192xbf16>
    %318 = vector.shape_cast %315 : vector<16x192xbf16> to vector<1x16x192xbf16>
    tpu.vector_store %arg16[%c2_291, %c96_292, %c0_293], %318 {strides = array<i32>} : memref<4x200x192xbf16, #tpu.memory_space<vmem>>, vector<1x16x192xbf16>,
    %c0_294 = arith.constant 0 : index
    %c16_295 = arith.constant 16 : index
    %c33_296 = arith.constant 33 : index
    %319 = vector.load %arg1[%c0_294, %c16_295, %c33_296] : memref<1x32x256xf32, #tpu.memory_space<vmem>>, vector<1x8x192xf32>
    %320 = vector.shape_cast %319 : vector<1x8x192xf32> to vector<8x192xf32>
    %c0_297 = arith.constant 0 : index
    %c0_298 = arith.constant 0 : index
    %c47_299 = arith.constant 47 : index
    %321 = vector.load %arg1[%c0_297, %c0_298, %c47_299] : memref<1x32x256xf32, #tpu.memory_space<vmem>>, vector<1x8x192xf32>
    %322 = vector.shape_cast %321 : vector<1x8x192xf32> to vector<8x192xf32>
    %323 = tpu.concatenate %320, %322 in 0 : vector<8x192xf32>, vector<8x192xf32> -> vector<16x192xf32>
    %324 = arith.truncf %323 : vector<16x192xf32> to vector<16x192xbf16>
    %c2_300 = arith.constant 2 : index
    %c112_301 = arith.constant 112 : index
    %c0_302 = arith.constant 0 : index
    %325 = vector.load %arg16[%c2_300, %c112_301, %c0_302] : memref<4x200x192xbf16, #tpu.memory_space<vmem>>, vector<1x16x192xbf16>
    %326 = vector.shape_cast %325 : vector<1x16x192xbf16> to vector<16x192xbf16>
    %327 = vector.shape_cast %324 : vector<16x192xbf16> to vector<1x16x192xbf16>
    tpu.vector_store %arg16[%c2_300, %c112_301, %c0_302], %327 {strides = array<i32>} : memref<4x200x192xbf16, #tpu.memory_space<vmem>>, vector<1x16x192xbf16>,
    %c0_303 = arith.constant 0 : index
    %c8_304 = arith.constant 8 : index
    %c47_305 = arith.constant 47 : index
    %328 = vector.load %arg1[%c0_303, %c8_304, %c47_305] : memref<1x32x256xf32, #tpu.memory_space<vmem>>, vector<1x8x192xf32>
    %329 = vector.shape_cast %328 : vector<1x8x192xf32> to vector<8x192xf32>
    %c0_306 = arith.constant 0 : index
    %c0_307 = arith.constant 0 : index
    %c48_308 = arith.constant 48 : index
    %330 = vector.load %arg1[%c0_306, %c0_307, %c48_308] : memref<1x32x256xf32, #tpu.memory_space<vmem>>, vector<1x8x192xf32>
    %331 = vector.shape_cast %330 : vector<1x8x192xf32> to vector<8x192xf32>
    %332 = tpu.concatenate %329, %331 in 0 : vector<8x192xf32>, vector<8x192xf32> -> vector<16x192xf32>
    %333 = arith.truncf %332 : vector<16x192xf32> to vector<16x192xbf16>
    %c2_309 = arith.constant 2 : index
    %c128_310 = arith.constant 128 : index
    %c0_311 = arith.constant 0 : index
    %334 = vector.load %arg16[%c2_309, %c128_310, %c0_311] : memref<4x200x192xbf16, #tpu.memory_space<vmem>>, vector<1x16x192xbf16>
    %335 = vector.shape_cast %334 : vector<1x16x192xbf16> to vector<16x192xbf16>
    %336 = vector.shape_cast %333 : vector<16x192xbf16> to vector<1x16x192xbf16>
    tpu.vector_store %arg16[%c2_309, %c128_310, %c0_311], %336 {strides = array<i32>} : memref<4x200x192xbf16, #tpu.memory_space<vmem>>, vector<1x16x192xbf16>,
    %c0_312 = arith.constant 0 : index
    %c8_313 = arith.constant 8 : index
    %c48_314 = arith.constant 48 : index
    %337 = vector.load %arg1[%c0_312, %c8_313, %c48_314] : memref<1x32x256xf32, #tpu.memory_space<vmem>>, vector<1x8x192xf32>
    %338 = vector.shape_cast %337 : vector<1x8x192xf32> to vector<8x192xf32>
    %c0_315 = arith.constant 0 : index
    %c0_316 = arith.constant 0 : index
    %c49_317 = arith.constant 49 : index
    %339 = vector.load %arg1[%c0_315, %c0_316, %c49_317] : memref<1x32x256xf32, #tpu.memory_space<vmem>>, vector<1x8x192xf32>
    %340 = vector.shape_cast %339 : vector<1x8x192xf32> to vector<8x192xf32>
    %341 = tpu.concatenate %338, %340 in 0 : vector<8x192xf32>, vector<8x192xf32> -> vector<16x192xf32>
    %342 = arith.truncf %341 : vector<16x192xf32> to vector<16x192xbf16>
    %c2_318 = arith.constant 2 : index
    %c144_319 = arith.constant 144 : index
    %c0_320 = arith.constant 0 : index
    %343 = vector.load %arg16[%c2_318, %c144_319, %c0_320] : memref<4x200x192xbf16, #tpu.memory_space<vmem>>, vector<1x16x192xbf16>
    %344 = vector.shape_cast %343 : vector<1x16x192xbf16> to vector<16x192xbf16>
    %345 = vector.shape_cast %342 : vector<16x192xbf16> to vector<1x16x192xbf16>
    tpu.vector_store %arg16[%c2_318, %c144_319, %c0_320], %345 {strides = array<i32>} : memref<4x200x192xbf16, #tpu.memory_space<vmem>>, vector<1x16x192xbf16>,
    %c0_321 = arith.constant 0 : index
    %c16_322 = arith.constant 16 : index
    %c47_323 = arith.constant 47 : index
    %346 = vector.load %arg1[%c0_321, %c16_322, %c47_323] : memref<1x32x256xf32, #tpu.memory_space<vmem>>, vector<1x8x192xf32>
    %347 = vector.shape_cast %346 : vector<1x8x192xf32> to vector<8x192xf32>
    %c0_324 = arith.constant 0 : index
    %c24_325 = arith.constant 24 : index
    %c47_326 = arith.constant 47 : index
    %348 = vector.load %arg1[%c0_324, %c24_325, %c47_326] : memref<1x32x256xf32, #tpu.memory_space<vmem>>, vector<1x8x192xf32>
    %349 = vector.shape_cast %348 : vector<1x8x192xf32> to vector<8x192xf32>
    %350 = tpu.concatenate %347, %349 in 0 : vector<8x192xf32>, vector<8x192xf32> -> vector<16x192xf32>
    %351 = arith.truncf %350 : vector<16x192xf32> to vector<16x192xbf16>
    %c2_327 = arith.constant 2 : index
    %c160_328 = arith.constant 160 : index
    %c0_329 = arith.constant 0 : index
    %352 = vector.load %arg16[%c2_327, %c160_328, %c0_329] : memref<4x200x192xbf16, #tpu.memory_space<vmem>>, vector<1x16x192xbf16>
    %353 = vector.shape_cast %352 : vector<1x16x192xbf16> to vector<16x192xbf16>
    %354 = vector.shape_cast %351 : vector<16x192xbf16> to vector<1x16x192xbf16>
    tpu.vector_store %arg16[%c2_327, %c160_328, %c0_329], %354 {strides = array<i32>} : memref<4x200x192xbf16, #tpu.memory_space<vmem>>, vector<1x16x192xbf16>,
    %c0_330 = arith.constant 0 : index
    %c16_331 = arith.constant 16 : index
    %c48_332 = arith.constant 48 : index
    %355 = vector.load %arg1[%c0_330, %c16_331, %c48_332] : memref<1x32x256xf32, #tpu.memory_space<vmem>>, vector<1x8x192xf32>
    %356 = vector.shape_cast %355 : vector<1x8x192xf32> to vector<8x192xf32>
    %c0_333 = arith.constant 0 : index
    %c24_334 = arith.constant 24 : index
    %c48_335 = arith.constant 48 : index
    %357 = vector.load %arg1[%c0_333, %c24_334, %c48_335] : memref<1x32x256xf32, #tpu.memory_space<vmem>>, vector<1x8x192xf32>
    %358 = vector.shape_cast %357 : vector<1x8x192xf32> to vector<8x192xf32>
    %359 = tpu.concatenate %356, %358 in 0 : vector<8x192xf32>, vector<8x192xf32> -> vector<16x192xf32>
    %360 = arith.truncf %359 : vector<16x192xf32> to vector<16x192xbf16>
    %c2_336 = arith.constant 2 : index
    %c176_337 = arith.constant 176 : index
    %c0_338 = arith.constant 0 : index
    %361 = vector.load %arg16[%c2_336, %c176_337, %c0_338] : memref<4x200x192xbf16, #tpu.memory_space<vmem>>, vector<1x16x192xbf16>
    %362 = vector.shape_cast %361 : vector<1x16x192xbf16> to vector<16x192xbf16>
    %363 = vector.shape_cast %360 : vector<16x192xbf16> to vector<1x16x192xbf16>
    tpu.vector_store %arg16[%c2_336, %c176_337, %c0_338], %363 {strides = array<i32>} : memref<4x200x192xbf16, #tpu.memory_space<vmem>>, vector<1x16x192xbf16>,
    %c0_339 = arith.constant 0 : index
    %c16_340 = arith.constant 16 : index
    %c49_341 = arith.constant 49 : index
    %364 = vector.load %arg1[%c0_339, %c16_340, %c49_341] : memref<1x32x256xf32, #tpu.memory_space<vmem>>, vector<1x8x192xf32>
    %365 = vector.shape_cast %364 : vector<1x8x192xf32> to vector<8x192xf32>
    %366 = arith.truncf %365 : vector<8x192xf32> to vector<8x192xbf16>
    %c2_342 = arith.constant 2 : index
    %c192_343 = arith.constant 192 : index
    %c0_344 = arith.constant 0 : index
    %367 = vector.load %arg16[%c2_342, %c192_343, %c0_344] : memref<4x200x192xbf16, #tpu.memory_space<vmem>>, vector<1x8x192xbf16>
    %368 = vector.shape_cast %367 : vector<1x8x192xbf16> to vector<8x192xbf16>
    %369 = vector.shape_cast %366 : vector<8x192xbf16> to vector<1x8x192xbf16>
    tpu.vector_store %arg16[%c2_342, %c192_343, %c0_344], %369 {strides = array<i32>} : memref<4x200x192xbf16, #tpu.memory_space<vmem>>, vector<1x8x192xbf16>,
    %c0_345 = arith.constant 0 : index
    %c0_346 = arith.constant 0 : index
    %370 = vector.load %arg2[%c0_345, %c0_346] : memref<8x200xbf16, #tpu.memory_space<vmem>>, vector<8x200xbf16>
    %c2_347 = arith.constant 2 : index
    %c0_348 = arith.constant 0 : index
    %c0_349 = arith.constant 0 : index
    %371 = vector.load %arg16[%c2_347, %c0_348, %c0_349] : memref<4x200x192xbf16, #tpu.memory_space<vmem>>, vector<1x200x192xbf16>
    %372 = vector.shape_cast %371 : vector<1x200x192xbf16> to vector<200x192xbf16>
    %cst_350 = arith.constant dense<0.000000e+00> : vector<8x192xf32>
    %373 = tpu.matmul %370, %372, %cst_350 {dimension_numbers = #tpu.dot_dimension_numbers<[1], [0], [0], [1], [0, 0, 1, 1], [], []>} : vector<8x200xbf16>, vector<200x192xbf16>, vector<8x192xf32> -> vector<8x192xf32>
    %c0_351 = arith.constant 0 : index
    %c0_352 = arith.constant 0 : index
    %374 = vector.load %arg3[%c0_351, %c0_352] : memref<8x1xf32, #tpu.memory_space<vmem>>, vector<8x1xf32>
    %375 = vector.broadcast %374 : vector<8x1xf32> to vector<8x192xf32>
    %376 = arith.mulf %373, %375 : vector<8x192xf32>
    %c0_353 = arith.constant 0 : index
    %c0_354 = arith.constant 0 : index
    %377 = vector.load %arg4[%c0_353, %c0_354] : memref<8x1xf32, #tpu.memory_space<vmem>>, vector<8x1xf32>
    %378 = vector.broadcast %377 : vector<8x1xf32> to vector<8x192xf32>
    %379 = arith.addf %376, %378 : vector<8x192xf32>
    %cst_355 = arith.constant 0.000000e+00 : f32
    %380 = vector.broadcast %cst_355 : f32 to vector<8x192xf32>
    %381 = arith.maximumf %379, %380 : vector<8x192xf32>
    %382 = arith.maximumf %255, %381 : vector<8x192xf32>
    %c0_356 = arith.constant 0 : index
    %c24_357 = arith.constant 24 : index
    %c15_358 = arith.constant 15 : index
    %383 = vector.load %arg1[%c0_356, %c24_357, %c15_358] : memref<1x32x256xf32, #tpu.memory_space<vmem>>, vector<1x8x192xf32>
    %384 = vector.shape_cast %383 : vector<1x8x192xf32> to vector<8x192xf32>
    %c0_359 = arith.constant 0 : index
    %c16_360 = arith.constant 16 : index
    %c16_361 = arith.constant 16 : index
    %385 = vector.load %arg1[%c0_359, %c16_360, %c16_361] : memref<1x32x256xf32, #tpu.memory_space<vmem>>, vector<1x8x192xf32>
    %386 = vector.shape_cast %385 : vector<1x8x192xf32> to vector<8x192xf32>
    %387 = tpu.concatenate %384, %386 in 0 : vector<8x192xf32>, vector<8x192xf32> -> vector<16x192xf32>
    %388 = arith.truncf %387 : vector<16x192xf32> to vector<16x192xbf16>
    %c3 = arith.constant 3 : index
    %c0_362 = arith.constant 0 : index
    %c0_363 = arith.constant 0 : index
    %389 = vector.load %arg16[%c3, %c0_362, %c0_363] : memref<4x200x192xbf16, #tpu.memory_space<vmem>>, vector<1x16x192xbf16>
    %390 = vector.shape_cast %389 : vector<1x16x192xbf16> to vector<16x192xbf16>
    %391 = vector.shape_cast %388 : vector<16x192xbf16> to vector<1x16x192xbf16>
    tpu.vector_store %arg16[%c3, %c0_362, %c0_363], %391 {strides = array<i32>} : memref<4x200x192xbf16, #tpu.memory_space<vmem>>, vector<1x16x192xbf16>,
    %c0_364 = arith.constant 0 : index
    %c24_365 = arith.constant 24 : index
    %c16_366 = arith.constant 16 : index
    %392 = vector.load %arg1[%c0_364, %c24_365, %c16_366] : memref<1x32x256xf32, #tpu.memory_space<vmem>>, vector<1x8x192xf32>
    %393 = vector.shape_cast %392 : vector<1x8x192xf32> to vector<8x192xf32>
    %c0_367 = arith.constant 0 : index
    %c16_368 = arith.constant 16 : index
    %c17_369 = arith.constant 17 : index
    %394 = vector.load %arg1[%c0_367, %c16_368, %c17_369] : memref<1x32x256xf32, #tpu.memory_space<vmem>>, vector<1x8x192xf32>
    %395 = vector.shape_cast %394 : vector<1x8x192xf32> to vector<8x192xf32>
    %396 = tpu.concatenate %393, %395 in 0 : vector<8x192xf32>, vector<8x192xf32> -> vector<16x192xf32>
    %397 = arith.truncf %396 : vector<16x192xf32> to vector<16x192xbf16>
    %c3_370 = arith.constant 3 : index
    %c16_371 = arith.constant 16 : index
    %c0_372 = arith.constant 0 : index
    %398 = vector.load %arg16[%c3_370, %c16_371, %c0_372] : memref<4x200x192xbf16, #tpu.memory_space<vmem>>, vector<1x16x192xbf16>
    %399 = vector.shape_cast %398 : vector<1x16x192xbf16> to vector<16x192xbf16>
    %400 = vector.shape_cast %397 : vector<16x192xbf16> to vector<1x16x192xbf16>
    tpu.vector_store %arg16[%c3_370, %c16_371, %c0_372], %400 {strides = array<i32>} : memref<4x200x192xbf16, #tpu.memory_space<vmem>>, vector<1x16x192xbf16>,
    %c0_373 = arith.constant 0 : index
    %c24_374 = arith.constant 24 : index
    %c17_375 = arith.constant 17 : index
    %401 = vector.load %arg1[%c0_373, %c24_374, %c17_375] : memref<1x32x256xf32, #tpu.memory_space<vmem>>, vector<1x8x192xf32>
    %402 = vector.shape_cast %401 : vector<1x8x192xf32> to vector<8x192xf32>
    %c0_376 = arith.constant 0 : index
    %c8_377 = arith.constant 8 : index
    %c31_378 = arith.constant 31 : index
    %403 = vector.load %arg1[%c0_376, %c8_377, %c31_378] : memref<1x32x256xf32, #tpu.memory_space<vmem>>, vector<1x8x192xf32>
    %404 = vector.shape_cast %403 : vector<1x8x192xf32> to vector<8x192xf32>
    %405 = tpu.concatenate %402, %404 in 0 : vector<8x192xf32>, vector<8x192xf32> -> vector<16x192xf32>
    %406 = arith.truncf %405 : vector<16x192xf32> to vector<16x192xbf16>
    %c3_379 = arith.constant 3 : index
    %c32_380 = arith.constant 32 : index
    %c0_381 = arith.constant 0 : index
    %407 = vector.load %arg16[%c3_379, %c32_380, %c0_381] : memref<4x200x192xbf16, #tpu.memory_space<vmem>>, vector<1x16x192xbf16>
    %408 = vector.shape_cast %407 : vector<1x16x192xbf16> to vector<16x192xbf16>
    %409 = vector.shape_cast %406 : vector<16x192xbf16> to vector<1x16x192xbf16>
    tpu.vector_store %arg16[%c3_379, %c32_380, %c0_381], %409 {strides = array<i32>} : memref<4x200x192xbf16, #tpu.memory_space<vmem>>, vector<1x16x192xbf16>,
    %c0_382 = arith.constant 0 : index
    %c0_383 = arith.constant 0 : index
    %c32_384 = arith.constant 32 : index
    %410 = vector.load %arg1[%c0_382, %c0_383, %c32_384] : memref<1x32x256xf32, #tpu.memory_space<vmem>>, vector<1x8x192xf32>
    %411 = vector.shape_cast %410 : vector<1x8x192xf32> to vector<8x192xf32>
    %c0_385 = arith.constant 0 : index
    %c8_386 = arith.constant 8 : index
    %c32_387 = arith.constant 32 : index
    %412 = vector.load %arg1[%c0_385, %c8_386, %c32_387] : memref<1x32x256xf32, #tpu.memory_space<vmem>>, vector<1x8x192xf32>
    %413 = vector.shape_cast %412 : vector<1x8x192xf32> to vector<8x192xf32>
    %414 = tpu.concatenate %411, %413 in 0 : vector<8x192xf32>, vector<8x192xf32> -> vector<16x192xf32>
    %415 = arith.truncf %414 : vector<16x192xf32> to vector<16x192xbf16>
    %c3_388 = arith.constant 3 : index
    %c48_389 = arith.constant 48 : index
    %c0_390 = arith.constant 0 : index
    %416 = vector.load %arg16[%c3_388, %c48_389, %c0_390] : memref<4x200x192xbf16, #tpu.memory_space<vmem>>, vector<1x16x192xbf16>
    %417 = vector.shape_cast %416 : vector<1x16x192xbf16> to vector<16x192xbf16>
    %418 = vector.shape_cast %415 : vector<16x192xbf16> to vector<1x16x192xbf16>
    tpu.vector_store %arg16[%c3_388, %c48_389, %c0_390], %418 {strides = array<i32>} : memref<4x200x192xbf16, #tpu.memory_space<vmem>>, vector<1x16x192xbf16>,
    %c0_391 = arith.constant 0 : index
    %c0_392 = arith.constant 0 : index
    %c33_393 = arith.constant 33 : index
    %419 = vector.load %arg1[%c0_391, %c0_392, %c33_393] : memref<1x32x256xf32, #tpu.memory_space<vmem>>, vector<1x8x192xf32>
    %420 = vector.shape_cast %419 : vector<1x8x192xf32> to vector<8x192xf32>
    %c0_394 = arith.constant 0 : index
    %c8_395 = arith.constant 8 : index
    %c33_396 = arith.constant 33 : index
    %421 = vector.load %arg1[%c0_394, %c8_395, %c33_396] : memref<1x32x256xf32, #tpu.memory_space<vmem>>, vector<1x8x192xf32>
    %422 = vector.shape_cast %421 : vector<1x8x192xf32> to vector<8x192xf32>
    %423 = tpu.concatenate %420, %422 in 0 : vector<8x192xf32>, vector<8x192xf32> -> vector<16x192xf32>
    %424 = arith.truncf %423 : vector<16x192xf32> to vector<16x192xbf16>
    %c3_397 = arith.constant 3 : index
    %c64_398 = arith.constant 64 : index
    %c0_399 = arith.constant 0 : index
    %425 = vector.load %arg16[%c3_397, %c64_398, %c0_399] : memref<4x200x192xbf16, #tpu.memory_space<vmem>>, vector<1x16x192xbf16>
    %426 = vector.shape_cast %425 : vector<1x16x192xbf16> to vector<16x192xbf16>
    %427 = vector.shape_cast %424 : vector<16x192xbf16> to vector<1x16x192xbf16>
    tpu.vector_store %arg16[%c3_397, %c64_398, %c0_399], %427 {strides = array<i32>} : memref<4x200x192xbf16, #tpu.memory_space<vmem>>, vector<1x16x192xbf16>,
    %c0_400 = arith.constant 0 : index
    %c24_401 = arith.constant 24 : index
    %c31_402 = arith.constant 31 : index
    %428 = vector.load %arg1[%c0_400, %c24_401, %c31_402] : memref<1x32x256xf32, #tpu.memory_space<vmem>>, vector<1x8x192xf32>
    %429 = vector.shape_cast %428 : vector<1x8x192xf32> to vector<8x192xf32>
    %c0_403 = arith.constant 0 : index
    %c16_404 = arith.constant 16 : index
    %c32_405 = arith.constant 32 : index
    %430 = vector.load %arg1[%c0_403, %c16_404, %c32_405] : memref<1x32x256xf32, #tpu.memory_space<vmem>>, vector<1x8x192xf32>
    %431 = vector.shape_cast %430 : vector<1x8x192xf32> to vector<8x192xf32>
    %432 = tpu.concatenate %429, %431 in 0 : vector<8x192xf32>, vector<8x192xf32> -> vector<16x192xf32>
    %433 = arith.truncf %432 : vector<16x192xf32> to vector<16x192xbf16>
    %c3_406 = arith.constant 3 : index
    %c80_407 = arith.constant 80 : index
    %c0_408 = arith.constant 0 : index
    %434 = vector.load %arg16[%c3_406, %c80_407, %c0_408] : memref<4x200x192xbf16, #tpu.memory_space<vmem>>, vector<1x16x192xbf16>
    %435 = vector.shape_cast %434 : vector<1x16x192xbf16> to vector<16x192xbf16>
    %436 = vector.shape_cast %433 : vector<16x192xbf16> to vector<1x16x192xbf16>
    tpu.vector_store %arg16[%c3_406, %c80_407, %c0_408], %436 {strides = array<i32>} : memref<4x200x192xbf16, #tpu.memory_space<vmem>>, vector<1x16x192xbf16>,
    %c0_409 = arith.constant 0 : index
    %c24_410 = arith.constant 24 : index
    %c32_411 = arith.constant 32 : index
    %437 = vector.load %arg1[%c0_409, %c24_410, %c32_411] : memref<1x32x256xf32, #tpu.memory_space<vmem>>, vector<1x8x192xf32>
    %438 = vector.shape_cast %437 : vector<1x8x192xf32> to vector<8x192xf32>
    %c0_412 = arith.constant 0 : index
    %c16_413 = arith.constant 16 : index
    %c33_414 = arith.constant 33 : index
    %439 = vector.load %arg1[%c0_412, %c16_413, %c33_414] : memref<1x32x256xf32, #tpu.memory_space<vmem>>, vector<1x8x192xf32>
    %440 = vector.shape_cast %439 : vector<1x8x192xf32> to vector<8x192xf32>
    %441 = tpu.concatenate %438, %440 in 0 : vector<8x192xf32>, vector<8x192xf32> -> vector<16x192xf32>
    %442 = arith.truncf %441 : vector<16x192xf32> to vector<16x192xbf16>
    %c3_415 = arith.constant 3 : index
    %c96_416 = arith.constant 96 : index
    %c0_417 = arith.constant 0 : index
    %443 = vector.load %arg16[%c3_415, %c96_416, %c0_417] : memref<4x200x192xbf16, #tpu.memory_space<vmem>>, vector<1x16x192xbf16>
    %444 = vector.shape_cast %443 : vector<1x16x192xbf16> to vector<16x192xbf16>
    %445 = vector.shape_cast %442 : vector<16x192xbf16> to vector<1x16x192xbf16>
    tpu.vector_store %arg16[%c3_415, %c96_416, %c0_417], %445 {strides = array<i32>} : memref<4x200x192xbf16, #tpu.memory_space<vmem>>, vector<1x16x192xbf16>,
    %c0_418 = arith.constant 0 : index
    %c24_419 = arith.constant 24 : index
    %c33_420 = arith.constant 33 : index
    %446 = vector.load %arg1[%c0_418, %c24_419, %c33_420] : memref<1x32x256xf32, #tpu.memory_space<vmem>>, vector<1x8x192xf32>
    %447 = vector.shape_cast %446 : vector<1x8x192xf32> to vector<8x192xf32>
    %c0_421 = arith.constant 0 : index
    %c8_422 = arith.constant 8 : index
    %c47_423 = arith.constant 47 : index
    %448 = vector.load %arg1[%c0_421, %c8_422, %c47_423] : memref<1x32x256xf32, #tpu.memory_space<vmem>>, vector<1x8x192xf32>
    %449 = vector.shape_cast %448 : vector<1x8x192xf32> to vector<8x192xf32>
    %450 = tpu.concatenate %447, %449 in 0 : vector<8x192xf32>, vector<8x192xf32> -> vector<16x192xf32>
    %451 = arith.truncf %450 : vector<16x192xf32> to vector<16x192xbf16>
    %c3_424 = arith.constant 3 : index
    %c112_425 = arith.constant 112 : index
    %c0_426 = arith.constant 0 : index
    %452 = vector.load %arg16[%c3_424, %c112_425, %c0_426] : memref<4x200x192xbf16, #tpu.memory_space<vmem>>, vector<1x16x192xbf16>
    %453 = vector.shape_cast %452 : vector<1x16x192xbf16> to vector<16x192xbf16>
    %454 = vector.shape_cast %451 : vector<16x192xbf16> to vector<1x16x192xbf16>
    tpu.vector_store %arg16[%c3_424, %c112_425, %c0_426], %454 {strides = array<i32>} : memref<4x200x192xbf16, #tpu.memory_space<vmem>>, vector<1x16x192xbf16>,
    %c0_427 = arith.constant 0 : index
    %c0_428 = arith.constant 0 : index
    %c48_429 = arith.constant 48 : index
    %455 = vector.load %arg1[%c0_427, %c0_428, %c48_429] : memref<1x32x256xf32, #tpu.memory_space<vmem>>, vector<1x8x192xf32>
    %456 = vector.shape_cast %455 : vector<1x8x192xf32> to vector<8x192xf32>
    %c0_430 = arith.constant 0 : index
    %c8_431 = arith.constant 8 : index
    %c48_432 = arith.constant 48 : index
    %457 = vector.load %arg1[%c0_430, %c8_431, %c48_432] : memref<1x32x256xf32, #tpu.memory_space<vmem>>, vector<1x8x192xf32>
    %458 = vector.shape_cast %457 : vector<1x8x192xf32> to vector<8x192xf32>
    %459 = tpu.concatenate %456, %458 in 0 : vector<8x192xf32>, vector<8x192xf32> -> vector<16x192xf32>
    %460 = arith.truncf %459 : vector<16x192xf32> to vector<16x192xbf16>
    %c3_433 = arith.constant 3 : index
    %c128_434 = arith.constant 128 : index
    %c0_435 = arith.constant 0 : index
    %461 = vector.load %arg16[%c3_433, %c128_434, %c0_435] : memref<4x200x192xbf16, #tpu.memory_space<vmem>>, vector<1x16x192xbf16>
    %462 = vector.shape_cast %461 : vector<1x16x192xbf16> to vector<16x192xbf16>
    %463 = vector.shape_cast %460 : vector<16x192xbf16> to vector<1x16x192xbf16>
    tpu.vector_store %arg16[%c3_433, %c128_434, %c0_435], %463 {strides = array<i32>} : memref<4x200x192xbf16, #tpu.memory_space<vmem>>, vector<1x16x192xbf16>,
    %c0_436 = arith.constant 0 : index
    %c0_437 = arith.constant 0 : index
    %c49_438 = arith.constant 49 : index
    %464 = vector.load %arg1[%c0_436, %c0_437, %c49_438] : memref<1x32x256xf32, #tpu.memory_space<vmem>>, vector<1x8x192xf32>
    %465 = vector.shape_cast %464 : vector<1x8x192xf32> to vector<8x192xf32>
    %c0_439 = arith.constant 0 : index
    %c8_440 = arith.constant 8 : index
    %c49_441 = arith.constant 49 : index
    %466 = vector.load %arg1[%c0_439, %c8_440, %c49_441] : memref<1x32x256xf32, #tpu.memory_space<vmem>>, vector<1x8x192xf32>
    %467 = vector.shape_cast %466 : vector<1x8x192xf32> to vector<8x192xf32>
    %468 = tpu.concatenate %465, %467 in 0 : vector<8x192xf32>, vector<8x192xf32> -> vector<16x192xf32>
    %469 = arith.truncf %468 : vector<16x192xf32> to vector<16x192xbf16>
    %c3_442 = arith.constant 3 : index
    %c144_443 = arith.constant 144 : index
    %c0_444 = arith.constant 0 : index
    %470 = vector.load %arg16[%c3_442, %c144_443, %c0_444] : memref<4x200x192xbf16, #tpu.memory_space<vmem>>, vector<1x16x192xbf16>
    %471 = vector.shape_cast %470 : vector<1x16x192xbf16> to vector<16x192xbf16>
    %472 = vector.shape_cast %469 : vector<16x192xbf16> to vector<1x16x192xbf16>
    tpu.vector_store %arg16[%c3_442, %c144_443, %c0_444], %472 {strides = array<i32>} : memref<4x200x192xbf16, #tpu.memory_space<vmem>>, vector<1x16x192xbf16>,
    %c0_445 = arith.constant 0 : index
    %c24_446 = arith.constant 24 : index
    %c47_447 = arith.constant 47 : index
    %473 = vector.load %arg1[%c0_445, %c24_446, %c47_447] : memref<1x32x256xf32, #tpu.memory_space<vmem>>, vector<1x8x192xf32>
    %474 = vector.shape_cast %473 : vector<1x8x192xf32> to vector<8x192xf32>
    %c0_448 = arith.constant 0 : index
    %c16_449 = arith.constant 16 : index
    %c48_450 = arith.constant 48 : index
    %475 = vector.load %arg1[%c0_448, %c16_449, %c48_450] : memref<1x32x256xf32, #tpu.memory_space<vmem>>, vector<1x8x192xf32>
    %476 = vector.shape_cast %475 : vector<1x8x192xf32> to vector<8x192xf32>
    %477 = tpu.concatenate %474, %476 in 0 : vector<8x192xf32>, vector<8x192xf32> -> vector<16x192xf32>
    %478 = arith.truncf %477 : vector<16x192xf32> to vector<16x192xbf16>
    %c3_451 = arith.constant 3 : index
    %c160_452 = arith.constant 160 : index
    %c0_453 = arith.constant 0 : index
    %479 = vector.load %arg16[%c3_451, %c160_452, %c0_453] : memref<4x200x192xbf16, #tpu.memory_space<vmem>>, vector<1x16x192xbf16>
    %480 = vector.shape_cast %479 : vector<1x16x192xbf16> to vector<16x192xbf16>
    %481 = vector.shape_cast %478 : vector<16x192xbf16> to vector<1x16x192xbf16>
    tpu.vector_store %arg16[%c3_451, %c160_452, %c0_453], %481 {strides = array<i32>} : memref<4x200x192xbf16, #tpu.memory_space<vmem>>, vector<1x16x192xbf16>,
    %c0_454 = arith.constant 0 : index
    %c24_455 = arith.constant 24 : index
    %c48_456 = arith.constant 48 : index
    %482 = vector.load %arg1[%c0_454, %c24_455, %c48_456] : memref<1x32x256xf32, #tpu.memory_space<vmem>>, vector<1x8x192xf32>
    %483 = vector.shape_cast %482 : vector<1x8x192xf32> to vector<8x192xf32>
    %c0_457 = arith.constant 0 : index
    %c16_458 = arith.constant 16 : index
    %c49_459 = arith.constant 49 : index
    %484 = vector.load %arg1[%c0_457, %c16_458, %c49_459] : memref<1x32x256xf32, #tpu.memory_space<vmem>>, vector<1x8x192xf32>
    %485 = vector.shape_cast %484 : vector<1x8x192xf32> to vector<8x192xf32>
    %486 = tpu.concatenate %483, %485 in 0 : vector<8x192xf32>, vector<8x192xf32> -> vector<16x192xf32>
    %487 = arith.truncf %486 : vector<16x192xf32> to vector<16x192xbf16>
    %c3_460 = arith.constant 3 : index
    %c176_461 = arith.constant 176 : index
    %c0_462 = arith.constant 0 : index
    %488 = vector.load %arg16[%c3_460, %c176_461, %c0_462] : memref<4x200x192xbf16, #tpu.memory_space<vmem>>, vector<1x16x192xbf16>
    %489 = vector.shape_cast %488 : vector<1x16x192xbf16> to vector<16x192xbf16>
    %490 = vector.shape_cast %487 : vector<16x192xbf16> to vector<1x16x192xbf16>
    tpu.vector_store %arg16[%c3_460, %c176_461, %c0_462], %490 {strides = array<i32>} : memref<4x200x192xbf16, #tpu.memory_space<vmem>>, vector<1x16x192xbf16>,
    %c0_463 = arith.constant 0 : index
    %c24_464 = arith.constant 24 : index
    %c49_465 = arith.constant 49 : index
    %491 = vector.load %arg1[%c0_463, %c24_464, %c49_465] : memref<1x32x256xf32, #tpu.memory_space<vmem>>, vector<1x8x192xf32>
    %492 = vector.shape_cast %491 : vector<1x8x192xf32> to vector<8x192xf32>
    %493 = arith.truncf %492 : vector<8x192xf32> to vector<8x192xbf16>
    %c3_466 = arith.constant 3 : index
    %c192_467 = arith.constant 192 : index
    %c0_468 = arith.constant 0 : index
    %494 = vector.load %arg16[%c3_466, %c192_467, %c0_468] : memref<4x200x192xbf16, #tpu.memory_space<vmem>>, vector<1x8x192xbf16>
    %495 = vector.shape_cast %494 : vector<1x8x192xbf16> to vector<8x192xbf16>
    %496 = vector.shape_cast %493 : vector<8x192xbf16> to vector<1x8x192xbf16>
    tpu.vector_store %arg16[%c3_466, %c192_467, %c0_468], %496 {strides = array<i32>} : memref<4x200x192xbf16, #tpu.memory_space<vmem>>, vector<1x8x192xbf16>,
    %c0_469 = arith.constant 0 : index
    %c0_470 = arith.constant 0 : index
    %497 = vector.load %arg2[%c0_469, %c0_470] : memref<8x200xbf16, #tpu.memory_space<vmem>>, vector<8x200xbf16>
    %c3_471 = arith.constant 3 : index
    %c0_472 = arith.constant 0 : index
    %c0_473 = arith.constant 0 : index
    %498 = vector.load %arg16[%c3_471, %c0_472, %c0_473] : memref<4x200x192xbf16, #tpu.memory_space<vmem>>, vector<1x200x192xbf16>
    %499 = vector.shape_cast %498 : vector<1x200x192xbf16> to vector<200x192xbf16>
    %cst_474 = arith.constant dense<0.000000e+00> : vector<8x192xf32>
    %500 = tpu.matmul %497, %499, %cst_474 {dimension_numbers = #tpu.dot_dimension_numbers<[1], [0], [0], [1], [0, 0, 1, 1], [], []>} : vector<8x200xbf16>, vector<200x192xbf16>, vector<8x192xf32> -> vector<8x192xf32>
    %c0_475 = arith.constant 0 : index
    %c0_476 = arith.constant 0 : index
    %501 = vector.load %arg3[%c0_475, %c0_476] : memref<8x1xf32, #tpu.memory_space<vmem>>, vector<8x1xf32>
    %502 = vector.broadcast %501 : vector<8x1xf32> to vector<8x192xf32>
    %503 = arith.mulf %500, %502 : vector<8x192xf32>
    %c0_477 = arith.constant 0 : index
    %c0_478 = arith.constant 0 : index
    %504 = vector.load %arg4[%c0_477, %c0_478] : memref<8x1xf32, #tpu.memory_space<vmem>>, vector<8x1xf32>
    %505 = vector.broadcast %504 : vector<8x1xf32> to vector<8x192xf32>
    %506 = arith.addf %503, %505 : vector<8x192xf32>
    %cst_479 = arith.constant 0.000000e+00 : f32
    %507 = vector.broadcast %cst_479 : f32 to vector<8x192xf32>
    %508 = arith.maximumf %506, %507 : vector<8x192xf32>
    %509 = arith.maximumf %382, %508 : vector<8x192xf32>
    %510 = vector.broadcast %0 : vector<1x192xf32> to vector<8x192xf32>
    %511 = arith.mulf %509, %510 : vector<8x192xf32>
    %c0_480 = arith.constant 0 : index
    %c0_481 = arith.constant 0 : index
    %512 = vector.load %arg12[%c0_480, %c0_481] : memref<192x100xf32, #tpu.memory_space<vmem>>, vector<192x100xf32>
    %cst_482 = arith.constant dense<0.000000e+00> : vector<8x100xf32>
    %513 = tpu.matmul %511, %512, %cst_482 {dimension_numbers = #tpu.dot_dimension_numbers<[1], [0], [0], [1], [0, 0, 1, 1], [], []>} : vector<8x192xf32>, vector<192x100xf32>, vector<8x100xf32> -> vector<8x100xf32>
    %514 = vector.extract_strided_slice %513 {offsets = [0, 0], sizes = [8, 25], strides = [1, 1]} : vector<8x100xf32> to vector<8x25xf32>
    %515 = vector.extract_strided_slice %513 {offsets = [0, 25], sizes = [8, 25], strides = [1, 1]} : vector<8x100xf32> to vector<8x25xf32>
    %516 = arith.addf %514, %515 : vector<8x25xf32>
    %517 = vector.extract_strided_slice %513 {offsets = [0, 50], sizes = [8, 25], strides = [1, 1]} : vector<8x100xf32> to vector<8x25xf32>
    %518 = arith.addf %516, %517 : vector<8x25xf32>
    %519 = vector.extract_strided_slice %513 {offsets = [0, 75], sizes = [8, 25], strides = [1, 1]} : vector<8x100xf32> to vector<8x25xf32>
    %520 = arith.addf %518, %519 : vector<8x25xf32>
    %cst_483 = arith.constant 2.500000e-01 : f32
    %521 = vector.broadcast %cst_483 : f32 to vector<8x25xf32>
    %522 = arith.mulf %521, %520 : vector<8x25xf32>
    %c0_484 = arith.constant 0 : index
    %c0_485 = arith.constant 0 : index
    %c0_486 = arith.constant 0 : index
    %523 = vector.load %arg13[%c0_484, %c0_485, %c0_486] : memref<3x8x25xf32, #tpu.memory_space<vmem>>, vector<3x8x25xf32>
    %524 = vector.shape_cast %522 : vector<8x25xf32> to vector<1x8x25xf32>
    %525 = vector.broadcast %524 : vector<1x8x25xf32> to vector<3x8x25xf32>
    %526 = arith.mulf %523, %525 : vector<3x8x25xf32>
    %cst_487 = arith.constant dense<0.000000e+00> : vector<3x25xf32>
    %527 = vector.multi_reduction <add>, %526, %cst_487 [1] : vector<3x8x25xf32> to vector<3x25xf32>
    %cst_488 = arith.constant 8.000000e+00 : f32
    %528 = vector.broadcast %cst_488 : f32 to vector<3x25xf32>
    %529 = arith.divf %527, %528 : vector<3x25xf32>
    %cst_489 = arith.constant dense<0x7F800000> : vector<3xf32>
    %530 = vector.multi_reduction <minimumf>, %529, %cst_489 [1] : vector<3x25xf32> to vector<3xf32>
    %531 = vector.shape_cast %530 : vector<3xf32> to vector<3x1xf32>
    %532 = vector.broadcast %531 : vector<3x1xf32> to vector<3x25xf32>
    %533 = arith.subf %529, %532 : vector<3x25xf32>
    %cst_490 = arith.constant dense<0xFF800000> : vector<3xf32>
    %534 = vector.multi_reduction <maximumf>, %533, %cst_490 [1] : vector<3x25xf32> to vector<3xf32>
    %535 = vector.shape_cast %534 : vector<3xf32> to vector<3x1xf32>
    %536 = vector.broadcast %535 : vector<3x1xf32> to vector<3x25xf32>
    %537 = arith.divf %533, %536 : vector<3x25xf32>
    %cst_491 = arith.constant dense<0.000000e+00> : vector<25xf32>
    %538 = vector.multi_reduction <add>, %537, %cst_491 [0] : vector<3x25xf32> to vector<25xf32>
    %539 = vector.shape_cast %538 : vector<25xf32> to vector<1x25xf32>
    %cst_492 = arith.constant 3.000000e+00 : f32
    %540 = vector.broadcast %cst_492 : f32 to vector<1x25xf32>
    %541 = arith.divf %539, %540 : vector<1x25xf32>
    %c0_493 = arith.constant 0 : index
    %c0_494 = arith.constant 0 : index
    %542 = vector.load %arg5[%c0_493, %c0_494] : memref<8x8xbf16, #tpu.memory_space<vmem>>, vector<8x8xbf16>
    %543 = arith.truncf %511 : vector<8x192xf32> to vector<8x192xbf16>
    %cst_495 = arith.constant dense<0.000000e+00> : vector<8x192xf32>
    %544 = tpu.matmul %542, %543, %cst_495 {dimension_numbers = #tpu.dot_dimension_numbers<[1], [0], [0], [1], [0, 0, 1, 1], [], []>} : vector<8x8xbf16>, vector<8x192xbf16>, vector<8x192xf32> -> vector<8x192xf32>
    %c0_496 = arith.constant 0 : index
    %c0_497 = arith.constant 0 : index
    %545 = vector.load %arg6[%c0_496, %c0_497] : memref<8x1xf32, #tpu.memory_space<vmem>>, vector<8x1xf32>
    %546 = vector.broadcast %545 : vector<8x1xf32> to vector<8x192xf32>
    %547 = arith.mulf %544, %546 : vector<8x192xf32>
    %c0_498 = arith.constant 0 : index
    %c0_499 = arith.constant 0 : index
    %548 = vector.load %arg7[%c0_498, %c0_499] : memref<8x1xf32, #tpu.memory_space<vmem>>, vector<8x1xf32>
    %549 = vector.broadcast %548 : vector<8x1xf32> to vector<8x192xf32>
    %550 = arith.addf %547, %549 : vector<8x192xf32>
    %cst_500 = arith.constant 0.000000e+00 : f32
    %551 = vector.broadcast %cst_500 : f32 to vector<8x192xf32>
    %552 = arith.maximumf %550, %551 : vector<8x192xf32>
    %553 = vector.broadcast %0 : vector<1x192xf32> to vector<8x192xf32>
    %554 = arith.mulf %552, %553 : vector<8x192xf32>
    %555 = arith.addf %511, %554 : vector<8x192xf32>
    %556 = arith.truncf %555 : vector<8x192xf32> to vector<8x192xbf16>
    %c0_501 = arith.constant 0 : index
    %c32_502 = arith.constant 32 : index
    %557 = vector.load %arg17[%c0_501, %c32_502] : memref<8x256xbf16, #tpu.memory_space<vmem>>, vector<8x192xbf16>
    tpu.vector_store %arg17[%c0_501, %c32_502], %556 {strides = array<i32>} : memref<8x256xbf16, #tpu.memory_space<vmem>>, vector<8x192xbf16>,
    %c0_503 = arith.constant 0 : index
    %c0_504 = arith.constant 0 : index
    %c0_505 = arith.constant 0 : index
    %558 = vector.load %arg8[%c0_503, %c0_504, %c0_505] : memref<9x8x8xbf16, #tpu.memory_space<vmem>>, vector<1x8x8xbf16>
    %559 = vector.shape_cast %558 : vector<1x8x8xbf16> to vector<8x8xbf16>
    %c0_506 = arith.constant 0 : index
    %c15_507 = arith.constant 15 : index
    %560 = vector.load %arg17[%c0_506, %c15_507] : memref<8x256xbf16, #tpu.memory_space<vmem>>, vector<8x192xbf16>
    %cst_508 = arith.constant dense<0.000000e+00> : vector<8x192xf32>
    %561 = tpu.matmul %559, %560, %cst_508 {dimension_numbers = #tpu.dot_dimension_numbers<[1], [0], [0], [1], [0, 0, 1, 1], [], []>} : vector<8x8xbf16>, vector<8x192xbf16>, vector<8x192xf32> -> vector<8x192xf32>
    %c1_509 = arith.constant 1 : index
    %c0_510 = arith.constant 0 : index
    %c0_511 = arith.constant 0 : index
    %562 = vector.load %arg8[%c1_509, %c0_510, %c0_511] : memref<9x8x8xbf16, #tpu.memory_space<vmem>>, vector<1x8x8xbf16>
    %563 = vector.shape_cast %562 : vector<1x8x8xbf16> to vector<8x8xbf16>
    %c0_512 = arith.constant 0 : index
    %c16_513 = arith.constant 16 : index
    %564 = vector.load %arg17[%c0_512, %c16_513] : memref<8x256xbf16, #tpu.memory_space<vmem>>, vector<8x192xbf16>
    %cst_514 = arith.constant dense<0.000000e+00> : vector<8x192xf32>
    %565 = tpu.matmul %563, %564, %cst_514 {dimension_numbers = #tpu.dot_dimension_numbers<[1], [0], [0], [1], [0, 0, 1, 1], [], []>} : vector<8x8xbf16>, vector<8x192xbf16>, vector<8x192xf32> -> vector<8x192xf32>
    %566 = arith.addf %561, %565 : vector<8x192xf32>
    %c2_515 = arith.constant 2 : index
    %c0_516 = arith.constant 0 : index
    %c0_517 = arith.constant 0 : index
    %567 = vector.load %arg8[%c2_515, %c0_516, %c0_517] : memref<9x8x8xbf16, #tpu.memory_space<vmem>>, vector<1x8x8xbf16>
    %568 = vector.shape_cast %567 : vector<1x8x8xbf16> to vector<8x8xbf16>
    %c0_518 = arith.constant 0 : index
    %c17_519 = arith.constant 17 : index
    %569 = vector.load %arg17[%c0_518, %c17_519] : memref<8x256xbf16, #tpu.memory_space<vmem>>, vector<8x192xbf16>
    %cst_520 = arith.constant dense<0.000000e+00> : vector<8x192xf32>
    %570 = tpu.matmul %568, %569, %cst_520 {dimension_numbers = #tpu.dot_dimension_numbers<[1], [0], [0], [1], [0, 0, 1, 1], [], []>} : vector<8x8xbf16>, vector<8x192xbf16>, vector<8x192xf32> -> vector<8x192xf32>
    %571 = arith.addf %566, %570 : vector<8x192xf32>
    %c3_521 = arith.constant 3 : index
    %c0_522 = arith.constant 0 : index
    %c0_523 = arith.constant 0 : index
    %572 = vector.load %arg8[%c3_521, %c0_522, %c0_523] : memref<9x8x8xbf16, #tpu.memory_space<vmem>>, vector<1x8x8xbf16>
    %573 = vector.shape_cast %572 : vector<1x8x8xbf16> to vector<8x8xbf16>
    %c0_524 = arith.constant 0 : index
    %c31_525 = arith.constant 31 : index
    %574 = vector.load %arg17[%c0_524, %c31_525] : memref<8x256xbf16, #tpu.memory_space<vmem>>, vector<8x192xbf16>
    %cst_526 = arith.constant dense<0.000000e+00> : vector<8x192xf32>
    %575 = tpu.matmul %573, %574, %cst_526 {dimension_numbers = #tpu.dot_dimension_numbers<[1], [0], [0], [1], [0, 0, 1, 1], [], []>} : vector<8x8xbf16>, vector<8x192xbf16>, vector<8x192xf32> -> vector<8x192xf32>
    %576 = arith.addf %571, %575 : vector<8x192xf32>
    %c4 = arith.constant 4 : index
    %c0_527 = arith.constant 0 : index
    %c0_528 = arith.constant 0 : index
    %577 = vector.load %arg8[%c4, %c0_527, %c0_528] : memref<9x8x8xbf16, #tpu.memory_space<vmem>>, vector<1x8x8xbf16>
    %578 = vector.shape_cast %577 : vector<1x8x8xbf16> to vector<8x8xbf16>
    %c0_529 = arith.constant 0 : index
    %c32_530 = arith.constant 32 : index
    %579 = vector.load %arg17[%c0_529, %c32_530] : memref<8x256xbf16, #tpu.memory_space<vmem>>, vector<8x192xbf16>
    %cst_531 = arith.constant dense<0.000000e+00> : vector<8x192xf32>
    %580 = tpu.matmul %578, %579, %cst_531 {dimension_numbers = #tpu.dot_dimension_numbers<[1], [0], [0], [1], [0, 0, 1, 1], [], []>} : vector<8x8xbf16>, vector<8x192xbf16>, vector<8x192xf32> -> vector<8x192xf32>
    %581 = arith.addf %576, %580 : vector<8x192xf32>
    %c5 = arith.constant 5 : index
    %c0_532 = arith.constant 0 : index
    %c0_533 = arith.constant 0 : index
    %582 = vector.load %arg8[%c5, %c0_532, %c0_533] : memref<9x8x8xbf16, #tpu.memory_space<vmem>>, vector<1x8x8xbf16>
    %583 = vector.shape_cast %582 : vector<1x8x8xbf16> to vector<8x8xbf16>
    %c0_534 = arith.constant 0 : index
    %c33_535 = arith.constant 33 : index
    %584 = vector.load %arg17[%c0_534, %c33_535] : memref<8x256xbf16, #tpu.memory_space<vmem>>, vector<8x192xbf16>
    %cst_536 = arith.constant dense<0.000000e+00> : vector<8x192xf32>
    %585 = tpu.matmul %583, %584, %cst_536 {dimension_numbers = #tpu.dot_dimension_numbers<[1], [0], [0], [1], [0, 0, 1, 1], [], []>} : vector<8x8xbf16>, vector<8x192xbf16>, vector<8x192xf32> -> vector<8x192xf32>
    %586 = arith.addf %581, %585 : vector<8x192xf32>
    %c6 = arith.constant 6 : index
    %c0_537 = arith.constant 0 : index
    %c0_538 = arith.constant 0 : index
    %587 = vector.load %arg8[%c6, %c0_537, %c0_538] : memref<9x8x8xbf16, #tpu.memory_space<vmem>>, vector<1x8x8xbf16>
    %588 = vector.shape_cast %587 : vector<1x8x8xbf16> to vector<8x8xbf16>
    %c0_539 = arith.constant 0 : index
    %c47_540 = arith.constant 47 : index
    %589 = vector.load %arg17[%c0_539, %c47_540] : memref<8x256xbf16, #tpu.memory_space<vmem>>, vector<8x192xbf16>
    %cst_541 = arith.constant dense<0.000000e+00> : vector<8x192xf32>
    %590 = tpu.matmul %588, %589, %cst_541 {dimension_numbers = #tpu.dot_dimension_numbers<[1], [0], [0], [1], [0, 0, 1, 1], [], []>} : vector<8x8xbf16>, vector<8x192xbf16>, vector<8x192xf32> -> vector<8x192xf32>
    %591 = arith.addf %586, %590 : vector<8x192xf32>
    %c7 = arith.constant 7 : index
    %c0_542 = arith.constant 0 : index
    %c0_543 = arith.constant 0 : index
    %592 = vector.load %arg8[%c7, %c0_542, %c0_543] : memref<9x8x8xbf16, #tpu.memory_space<vmem>>, vector<1x8x8xbf16>
    %593 = vector.shape_cast %592 : vector<1x8x8xbf16> to vector<8x8xbf16>
    %c0_544 = arith.constant 0 : index
    %c48_545 = arith.constant 48 : index
    %594 = vector.load %arg17[%c0_544, %c48_545] : memref<8x256xbf16, #tpu.memory_space<vmem>>, vector<8x192xbf16>
    %cst_546 = arith.constant dense<0.000000e+00> : vector<8x192xf32>
    %595 = tpu.matmul %593, %594, %cst_546 {dimension_numbers = #tpu.dot_dimension_numbers<[1], [0], [0], [1], [0, 0, 1, 1], [], []>} : vector<8x8xbf16>, vector<8x192xbf16>, vector<8x192xf32> -> vector<8x192xf32>
    %596 = arith.addf %591, %595 : vector<8x192xf32>
    %c8_547 = arith.constant 8 : index
    %c0_548 = arith.constant 0 : index
    %c0_549 = arith.constant 0 : index
    %597 = vector.load %arg8[%c8_547, %c0_548, %c0_549] : memref<9x8x8xbf16, #tpu.memory_space<vmem>>, vector<1x8x8xbf16>
    %598 = vector.shape_cast %597 : vector<1x8x8xbf16> to vector<8x8xbf16>
    %c0_550 = arith.constant 0 : index
    %c49_551 = arith.constant 49 : index
    %599 = vector.load %arg17[%c0_550, %c49_551] : memref<8x256xbf16, #tpu.memory_space<vmem>>, vector<8x192xbf16>
    %cst_552 = arith.constant dense<0.000000e+00> : vector<8x192xf32>
    %600 = tpu.matmul %598, %599, %cst_552 {dimension_numbers = #tpu.dot_dimension_numbers<[1], [0], [0], [1], [0, 0, 1, 1], [], []>} : vector<8x8xbf16>, vector<8x192xbf16>, vector<8x192xf32> -> vector<8x192xf32>
    %601 = arith.addf %596, %600 : vector<8x192xf32>
    %c0_553 = arith.constant 0 : index
    %c0_554 = arith.constant 0 : index
    %602 = vector.load %arg9[%c0_553, %c0_554] : memref<8x1xf32, #tpu.memory_space<vmem>>, vector<8x1xf32>
    %603 = vector.broadcast %602 : vector<8x1xf32> to vector<8x192xf32>
    %604 = arith.mulf %601, %603 : vector<8x192xf32>
    %c0_555 = arith.constant 0 : index
    %c0_556 = arith.constant 0 : index
    %605 = vector.load %arg10[%c0_555, %c0_556] : memref<8x1xf32, #tpu.memory_space<vmem>>, vector<8x1xf32>
    %606 = vector.broadcast %605 : vector<8x1xf32> to vector<8x192xf32>
    %607 = arith.addf %604, %606 : vector<8x192xf32>
    %cst_557 = arith.constant 0.000000e+00 : f32
    %608 = vector.broadcast %cst_557 : f32 to vector<8x192xf32>
    %609 = arith.maximumf %607, %608 : vector<8x192xf32>
    %610 = vector.broadcast %0 : vector<1x192xf32> to vector<8x192xf32>
    %611 = arith.mulf %609, %610 : vector<8x192xf32>
    %612 = arith.addf %511, %611 : vector<8x192xf32>
    %613 = arith.truncf %612 : vector<8x192xf32> to vector<8x192xbf16>
    %c0_558 = arith.constant 0 : index
    %c32_559 = arith.constant 32 : index
    %614 = vector.load %arg17[%c0_558, %c32_559] : memref<8x256xbf16, #tpu.memory_space<vmem>>, vector<8x192xbf16>
    tpu.vector_store %arg17[%c0_558, %c32_559], %613 {strides = array<i32>} : memref<8x256xbf16, #tpu.memory_space<vmem>>, vector<8x192xbf16>,
    %c0_560 = arith.constant 0 : index
    %c0_561 = arith.constant 0 : index
    %c0_562 = arith.constant 0 : index
    %615 = vector.load %arg8[%c0_560, %c0_561, %c0_562] : memref<9x8x8xbf16, #tpu.memory_space<vmem>>, vector<1x8x8xbf16>
    %616 = vector.shape_cast %615 : vector<1x8x8xbf16> to vector<8x8xbf16>
    %c0_563 = arith.constant 0 : index
    %c15_564 = arith.constant 15 : index
    %617 = vector.load %arg17[%c0_563, %c15_564] : memref<8x256xbf16, #tpu.memory_space<vmem>>, vector<8x192xbf16>
    %cst_565 = arith.constant dense<0.000000e+00> : vector<8x192xf32>
    %618 = tpu.matmul %616, %617, %cst_565 {dimension_numbers = #tpu.dot_dimension_numbers<[1], [0], [0], [1], [0, 0, 1, 1], [], []>} : vector<8x8xbf16>, vector<8x192xbf16>, vector<8x192xf32> -> vector<8x192xf32>
    %c1_566 = arith.constant 1 : index
    %c0_567 = arith.constant 0 : index
    %c0_568 = arith.constant 0 : index
    %619 = vector.load %arg8[%c1_566, %c0_567, %c0_568] : memref<9x8x8xbf16, #tpu.memory_space<vmem>>, vector<1x8x8xbf16>
    %620 = vector.shape_cast %619 : vector<1x8x8xbf16> to vector<8x8xbf16>
    %c0_569 = arith.constant 0 : index
    %c16_570 = arith.constant 16 : index
    %621 = vector.load %arg17[%c0_569, %c16_570] : memref<8x256xbf16, #tpu.memory_space<vmem>>, vector<8x192xbf16>
    %cst_571 = arith.constant dense<0.000000e+00> : vector<8x192xf32>
    %622 = tpu.matmul %620, %621, %cst_571 {dimension_numbers = #tpu.dot_dimension_numbers<[1], [0], [0], [1], [0, 0, 1, 1], [], []>} : vector<8x8xbf16>, vector<8x192xbf16>, vector<8x192xf32> -> vector<8x192xf32>
    %623 = arith.addf %618, %622 : vector<8x192xf32>
    %c2_572 = arith.constant 2 : index
    %c0_573 = arith.constant 0 : index
    %c0_574 = arith.constant 0 : index
    %624 = vector.load %arg8[%c2_572, %c0_573, %c0_574] : memref<9x8x8xbf16, #tpu.memory_space<vmem>>, vector<1x8x8xbf16>
    %625 = vector.shape_cast %624 : vector<1x8x8xbf16> to vector<8x8xbf16>
    %c0_575 = arith.constant 0 : index
    %c17_576 = arith.constant 17 : index
    %626 = vector.load %arg17[%c0_575, %c17_576] : memref<8x256xbf16, #tpu.memory_space<vmem>>, vector<8x192xbf16>
    %cst_577 = arith.constant dense<0.000000e+00> : vector<8x192xf32>
    %627 = tpu.matmul %625, %626, %cst_577 {dimension_numbers = #tpu.dot_dimension_numbers<[1], [0], [0], [1], [0, 0, 1, 1], [], []>} : vector<8x8xbf16>, vector<8x192xbf16>, vector<8x192xf32> -> vector<8x192xf32>
    %628 = arith.addf %623, %627 : vector<8x192xf32>
    %c3_578 = arith.constant 3 : index
    %c0_579 = arith.constant 0 : index
    %c0_580 = arith.constant 0 : index
    %629 = vector.load %arg8[%c3_578, %c0_579, %c0_580] : memref<9x8x8xbf16, #tpu.memory_space<vmem>>, vector<1x8x8xbf16>
    %630 = vector.shape_cast %629 : vector<1x8x8xbf16> to vector<8x8xbf16>
    %c0_581 = arith.constant 0 : index
    %c31_582 = arith.constant 31 : index
    %631 = vector.load %arg17[%c0_581, %c31_582] : memref<8x256xbf16, #tpu.memory_space<vmem>>, vector<8x192xbf16>
    %cst_583 = arith.constant dense<0.000000e+00> : vector<8x192xf32>
    %632 = tpu.matmul %630, %631, %cst_583 {dimension_numbers = #tpu.dot_dimension_numbers<[1], [0], [0], [1], [0, 0, 1, 1], [], []>} : vector<8x8xbf16>, vector<8x192xbf16>, vector<8x192xf32> -> vector<8x192xf32>
    %633 = arith.addf %628, %632 : vector<8x192xf32>
    %c4_584 = arith.constant 4 : index
    %c0_585 = arith.constant 0 : index
    %c0_586 = arith.constant 0 : index
    %634 = vector.load %arg8[%c4_584, %c0_585, %c0_586] : memref<9x8x8xbf16, #tpu.memory_space<vmem>>, vector<1x8x8xbf16>
    %635 = vector.shape_cast %634 : vector<1x8x8xbf16> to vector<8x8xbf16>
    %c0_587 = arith.constant 0 : index
    %c32_588 = arith.constant 32 : index
    %636 = vector.load %arg17[%c0_587, %c32_588] : memref<8x256xbf16, #tpu.memory_space<vmem>>, vector<8x192xbf16>
    %cst_589 = arith.constant dense<0.000000e+00> : vector<8x192xf32>
    %637 = tpu.matmul %635, %636, %cst_589 {dimension_numbers = #tpu.dot_dimension_numbers<[1], [0], [0], [1], [0, 0, 1, 1], [], []>} : vector<8x8xbf16>, vector<8x192xbf16>, vector<8x192xf32> -> vector<8x192xf32>
    %638 = arith.addf %633, %637 : vector<8x192xf32>
    %c5_590 = arith.constant 5 : index
    %c0_591 = arith.constant 0 : index
    %c0_592 = arith.constant 0 : index
    %639 = vector.load %arg8[%c5_590, %c0_591, %c0_592] : memref<9x8x8xbf16, #tpu.memory_space<vmem>>, vector<1x8x8xbf16>
    %640 = vector.shape_cast %639 : vector<1x8x8xbf16> to vector<8x8xbf16>
    %c0_593 = arith.constant 0 : index
    %c33_594 = arith.constant 33 : index
    %641 = vector.load %arg17[%c0_593, %c33_594] : memref<8x256xbf16, #tpu.memory_space<vmem>>, vector<8x192xbf16>
    %cst_595 = arith.constant dense<0.000000e+00> : vector<8x192xf32>
    %642 = tpu.matmul %640, %641, %cst_595 {dimension_numbers = #tpu.dot_dimension_numbers<[1], [0], [0], [1], [0, 0, 1, 1], [], []>} : vector<8x8xbf16>, vector<8x192xbf16>, vector<8x192xf32> -> vector<8x192xf32>
    %643 = arith.addf %638, %642 : vector<8x192xf32>
    %c6_596 = arith.constant 6 : index
    %c0_597 = arith.constant 0 : index
    %c0_598 = arith.constant 0 : index
    %644 = vector.load %arg8[%c6_596, %c0_597, %c0_598] : memref<9x8x8xbf16, #tpu.memory_space<vmem>>, vector<1x8x8xbf16>
    %645 = vector.shape_cast %644 : vector<1x8x8xbf16> to vector<8x8xbf16>
    %c0_599 = arith.constant 0 : index
    %c47_600 = arith.constant 47 : index
    %646 = vector.load %arg17[%c0_599, %c47_600] : memref<8x256xbf16, #tpu.memory_space<vmem>>, vector<8x192xbf16>
    %cst_601 = arith.constant dense<0.000000e+00> : vector<8x192xf32>
    %647 = tpu.matmul %645, %646, %cst_601 {dimension_numbers = #tpu.dot_dimension_numbers<[1], [0], [0], [1], [0, 0, 1, 1], [], []>} : vector<8x8xbf16>, vector<8x192xbf16>, vector<8x192xf32> -> vector<8x192xf32>
    %648 = arith.addf %643, %647 : vector<8x192xf32>
    %c7_602 = arith.constant 7 : index
    %c0_603 = arith.constant 0 : index
    %c0_604 = arith.constant 0 : index
    %649 = vector.load %arg8[%c7_602, %c0_603, %c0_604] : memref<9x8x8xbf16, #tpu.memory_space<vmem>>, vector<1x8x8xbf16>
    %650 = vector.shape_cast %649 : vector<1x8x8xbf16> to vector<8x8xbf16>
    %c0_605 = arith.constant 0 : index
    %c48_606 = arith.constant 48 : index
    %651 = vector.load %arg17[%c0_605, %c48_606] : memref<8x256xbf16, #tpu.memory_space<vmem>>, vector<8x192xbf16>
    %cst_607 = arith.constant dense<0.000000e+00> : vector<8x192xf32>
    %652 = tpu.matmul %650, %651, %cst_607 {dimension_numbers = #tpu.dot_dimension_numbers<[1], [0], [0], [1], [0, 0, 1, 1], [], []>} : vector<8x8xbf16>, vector<8x192xbf16>, vector<8x192xf32> -> vector<8x192xf32>
    %653 = arith.addf %648, %652 : vector<8x192xf32>
    %c8_608 = arith.constant 8 : index
    %c0_609 = arith.constant 0 : index
    %c0_610 = arith.constant 0 : index
    %654 = vector.load %arg8[%c8_608, %c0_609, %c0_610] : memref<9x8x8xbf16, #tpu.memory_space<vmem>>, vector<1x8x8xbf16>
    %655 = vector.shape_cast %654 : vector<1x8x8xbf16> to vector<8x8xbf16>
    %c0_611 = arith.constant 0 : index
    %c49_612 = arith.constant 49 : index
    %656 = vector.load %arg17[%c0_611, %c49_612] : memref<8x256xbf16, #tpu.memory_space<vmem>>, vector<8x192xbf16>
    %cst_613 = arith.constant dense<0.000000e+00> : vector<8x192xf32>
    %657 = tpu.matmul %655, %656, %cst_613 {dimension_numbers = #tpu.dot_dimension_numbers<[1], [0], [0], [1], [0, 0, 1, 1], [], []>} : vector<8x8xbf16>, vector<8x192xbf16>, vector<8x192xf32> -> vector<8x192xf32>
    %658 = arith.addf %653, %657 : vector<8x192xf32>
    %c0_614 = arith.constant 0 : index
    %c0_615 = arith.constant 0 : index
    %659 = vector.load %arg9[%c0_614, %c0_615] : memref<8x1xf32, #tpu.memory_space<vmem>>, vector<8x1xf32>
    %660 = vector.broadcast %659 : vector<8x1xf32> to vector<8x192xf32>
    %661 = arith.mulf %658, %660 : vector<8x192xf32>
    %c0_616 = arith.constant 0 : index
    %c0_617 = arith.constant 0 : index
    %662 = vector.load %arg10[%c0_616, %c0_617] : memref<8x1xf32, #tpu.memory_space<vmem>>, vector<8x1xf32>
    %663 = vector.broadcast %662 : vector<8x1xf32> to vector<8x192xf32>
    %664 = arith.addf %661, %663 : vector<8x192xf32>
    %cst_618 = arith.constant 0.000000e+00 : f32
    %665 = vector.broadcast %cst_618 : f32 to vector<8x192xf32>
    %666 = arith.maximumf %664, %665 : vector<8x192xf32>
    %c0_619 = arith.constant 0 : index
    %c0_620 = arith.constant 0 : index
    %667 = vector.load %arg12[%c0_619, %c0_620] : memref<192x100xf32, #tpu.memory_space<vmem>>, vector<192x100xf32>
    %cst_621 = arith.constant dense<0.000000e+00> : vector<8x100xf32>
    %668 = tpu.matmul %666, %667, %cst_621 {dimension_numbers = #tpu.dot_dimension_numbers<[1], [0], [0], [1], [0, 0, 1, 1], [], []>} : vector<8x192xf32>, vector<192x100xf32>, vector<8x100xf32> -> vector<8x100xf32>
    %669 = vector.extract_strided_slice %668 {offsets = [0, 0], sizes = [8, 25], strides = [1, 1]} : vector<8x100xf32> to vector<8x25xf32>
    %670 = vector.extract_strided_slice %668 {offsets = [0, 25], sizes = [8, 25], strides = [1, 1]} : vector<8x100xf32> to vector<8x25xf32>
    %671 = arith.maximumf %669, %670 : vector<8x25xf32>
    %672 = vector.extract_strided_slice %668 {offsets = [0, 50], sizes = [8, 25], strides = [1, 1]} : vector<8x100xf32> to vector<8x25xf32>
    %673 = vector.extract_strided_slice %668 {offsets = [0, 75], sizes = [8, 25], strides = [1, 1]} : vector<8x100xf32> to vector<8x25xf32>
    %674 = arith.maximumf %672, %673 : vector<8x25xf32>
    %675 = arith.maximumf %671, %674 : vector<8x25xf32>
    %676 = vector.broadcast %541 : vector<1x25xf32> to vector<8x25xf32>
    %677 = arith.mulf %675, %676 : vector<8x25xf32>
    %678 = vector.shape_cast %677 : vector<8x25xf32> to vector<1x8x25xf32>
    %679 = vector.broadcast %678 : vector<1x8x25xf32> to vector<3x8x25xf32>
    %680 = arith.mulf %523, %679 : vector<3x8x25xf32>
    %cst_622 = arith.constant dense<0.000000e+00> : vector<3x8xf32>
    %681 = vector.multi_reduction <add>, %680, %cst_622 [2] : vector<3x8x25xf32> to vector<3x8xf32>
    %cst_623 = arith.constant dense<0.000000e+00> : vector<3xf32>
    %682 = vector.multi_reduction <add>, %681, %cst_623 [1] : vector<3x8xf32> to vector<3xf32>
    %683 = vector.shape_cast %682 : vector<3xf32> to vector<3x1xf32>
    %c0_624 = arith.constant 0 : index
    %c0_625 = arith.constant 0 : index
    %684 = vector.load %arg14[%c0_624, %c0_625] : memref<3x1xf32, #tpu.memory_space<vmem>>, vector<3x1xf32>
    %685 = arith.addf %683, %684 : vector<3x1xf32>
    %686 = vector.shape_cast %685 : vector<3x1xf32> to vector<1x3x1xf32>
    %c0_626 = arith.constant 0 : index
    %c0_627 = arith.constant 0 : index
    %c0_628 = arith.constant 0 : index
    %687 = vector.load %arg15[%c0_626, %c0_627, %c0_628] : memref<1x3x1xf32, #tpu.memory_space<vmem>>, vector<1x3x1xf32>
    tpu.vector_store %arg15[%c0_626, %c0_627, %c0_628], %686 {strides = array<i32>} : memref<1x3x1xf32, #tpu.memory_space<vmem>>, vector<1x3x1xf32>,
    return
  }
  func.func @transform_0(%arg0: i32) -> (i32, i32, i32) {
    %c0_i32 = arith.constant 0 : i32
    %c0_i32_0 = arith.constant 0 : i32
    %c0_i32_1 = arith.constant 0 : i32
    return %arg0, %c0_i32, %c0_i32_0 : i32, i32, i32
  }
  func.func @transform_1(%arg0: i32) -> (i32, i32) {
    %c0_i32 = arith.constant 0 : i32
    %c0_i32_0 = arith.constant 0 : i32
    %c0_i32_1 = arith.constant 0 : i32
    return %c0_i32, %c0_i32_0 : i32, i32
  }
  func.func @transform_2(%arg0: i32) -> (i32, i32) {
    %c0_i32 = arith.constant 0 : i32
    %c0_i32_0 = arith.constant 0 : i32
    %c0_i32_1 = arith.constant 0 : i32
    return %c0_i32, %c0_i32_0 : i32, i32
  }
  func.func @transform_3(%arg0: i32) -> (i32, i32) {
    %c0_i32 = arith.constant 0 : i32
    %c0_i32_0 = arith.constant 0 : i32
    %c0_i32_1 = arith.constant 0 : i32
    return %c0_i32, %c0_i32_0 : i32, i32
  }
  func.func @transform_4(%arg0: i32) -> (i32, i32) {
    %c0_i32 = arith.constant 0 : i32
    %c0_i32_0 = arith.constant 0 : i32
    %c0_i32_1 = arith.constant 0 : i32
    return %c0_i32, %c0_i32_0 : i32, i32
  }
  func.func @transform_5(%arg0: i32) -> (i32, i32) {
    %c0_i32 = arith.constant 0 : i32
    %c0_i32_0 = arith.constant 0 : i32
    %c0_i32_1 = arith.constant 0 : i32
    return %c0_i32, %c0_i32_0 : i32, i32
  }
  func.func @transform_6(%arg0: i32) -> (i32, i32) {
    %c0_i32 = arith.constant 0 : i32
    %c0_i32_0 = arith.constant 0 : i32
    %c0_i32_1 = arith.constant 0 : i32
    return %c0_i32, %c0_i32_0 : i32, i32
  }
  func.func @transform_7(%arg0: i32) -> (i32, i32, i32) {
    %c0_i32 = arith.constant 0 : i32
    %c0_i32_0 = arith.constant 0 : i32
    %c0_i32_1 = arith.constant 0 : i32
    %c0_i32_2 = arith.constant 0 : i32
    return %c0_i32, %c0_i32_0, %c0_i32_1 : i32, i32, i32
  }
  func.func @transform_8(%arg0: i32) -> (i32, i32) {
    %c0_i32 = arith.constant 0 : i32
    %c0_i32_0 = arith.constant 0 : i32
    %c0_i32_1 = arith.constant 0 : i32
    return %c0_i32, %c0_i32_0 : i32, i32
  }
  func.func @transform_9(%arg0: i32) -> (i32, i32) {
    %c0_i32 = arith.constant 0 : i32
    %c0_i32_0 = arith.constant 0 : i32
    %c0_i32_1 = arith.constant 0 : i32
    return %c0_i32, %c0_i32_0 : i32, i32
  }
  func.func @transform_10(%arg0: i32) -> (i32, i32) {
    %c0_i32 = arith.constant 0 : i32
    %c0_i32_0 = arith.constant 0 : i32
    %c0_i32_1 = arith.constant 0 : i32
    return %c0_i32, %c0_i32_0 : i32, i32
  }
  func.func @transform_11(%arg0: i32) -> (i32, i32) {
    %c0_i32 = arith.constant 0 : i32
    %c0_i32_0 = arith.constant 0 : i32
    %c0_i32_1 = arith.constant 0 : i32
    return %c0_i32, %c0_i32_0 : i32, i32
  }
  func.func @transform_12(%arg0: i32) -> (i32, i32, i32) {
    %c0_i32 = arith.constant 0 : i32
    %c0_i32_0 = arith.constant 0 : i32
    %c0_i32_1 = arith.constant 0 : i32
    %c0_i32_2 = arith.constant 0 : i32
    return %c0_i32, %c0_i32_0, %c0_i32_1 : i32, i32, i32
  }
  func.func @transform_13(%arg0: i32) -> (i32, i32) {
    %c0_i32 = arith.constant 0 : i32
    %c0_i32_0 = arith.constant 0 : i32
    %c0_i32_1 = arith.constant 0 : i32
    return %c0_i32, %c0_i32_0 : i32, i32
  }
  func.func @transform_14(%arg0: i32) -> (i32, i32, i32) {
    %c0_i32 = arith.constant 0 : i32
    %c0_i32_0 = arith.constant 0 : i32
    %c0_i32_1 = arith.constant 0 : i32
    return %arg0, %c0_i32, %c0_i32_0 : i32, i32, i32
  }
}

</mosaic_0001>

<llo_original>
// kernel: rcn_a_forward.1
$region0: #{rcn_a_forward.1}
  #allocation0 [shape = 'u32[]', space=smem, size = 0x4, offset = 0x4, fixed_abs, tag = 'smem constant byte address 0x4 - core index']
  #allocation1 [shape = 'u32[144,128]{1,0:T(1,128)}', space=vmem, size = 0x12000, scoped, tag = 'internal scratch']
  #allocation2 [shape = 'bf16[4,200,192]{2,1,0:T(8,128)(2,1)}', space=vmem, size = 0x64000, scoped, tag = 'scratch operand']
  #allocation3 [shape = 'bf16[8,256]{1,0:T(8,128)(2,1)}', space=vmem, size = 0x1000, scoped, tag = 'scratch operand']
  %s0 = inlined_call_operand.vmem [shape: f32[2,32,256], index: 0, kind: input, shape index: {}]
  %s1 = inlined_call_operand.vmem [shape: bf16[8,200], index: 1, kind: input, shape index: {}]
  %s2 = inlined_call_operand.vmem [shape: f32[8,1], index: 2, kind: input, shape index: {}]
  %s3 = inlined_call_operand.vmem [shape: f32[8,1], index: 3, kind: input, shape index: {}]
  %s4 = inlined_call_operand.vmem [shape: bf16[8,8], index: 4, kind: input, shape index: {}]
  %s5 = inlined_call_operand.vmem [shape: f32[8,1], index: 5, kind: input, shape index: {}]
  %s6 = inlined_call_operand.vmem [shape: f32[8,1], index: 6, kind: input, shape index: {}]
  %s7 = inlined_call_operand.vmem [shape: bf16[9,8,8], index: 7, kind: input, shape index: {}]
  %s8 = inlined_call_operand.vmem [shape: f32[8,1], index: 8, kind: input, shape index: {}]
  %s9 = inlined_call_operand.vmem [shape: f32[8,1], index: 9, kind: input, shape index: {}]
  %s10 = inlined_call_operand.vmem [shape: f32[1,192], index: 10, kind: input, shape index: {}]
  %s11 = inlined_call_operand.vmem [shape: f32[192,100], index: 11, kind: input, shape index: {}]
  %s12 = inlined_call_operand.vmem [shape: f32[3,8,25], index: 12, kind: input, shape index: {}]
  %s13 = inlined_call_operand.vmem [shape: f32[3,1], index: 13, kind: input, shape index: {}]
  %s14 = inlined_call_operand.vmem [shape: f32[2,3,1], index: 14, kind: output, shape index: {}]
  %s15 = sld [smem:[#allocation0]]
  $region89: #{rcn_a_forward.1} parent=0
    _
  %s17 = ssub.s32 1, %s15
  %s18 = scalar_select 0, %s17, %s15
  loop: start=0, step=1, limit=4
  $region2: #{rcn_a_forward.1} parent=0 // loop_pre_header
    _
  $region3: #{rcn_a_forward.1} parent=0 // loop_header
    %s20 = sphi 0, %s24
    %p21 = scmp.ge.s32.totalorder %s20, 4
    %s30 = sphi 0, %s32
    %s33 = sphi 0, %s30
    %s34 = sphi 0, %s33
    %s50 = sphi 0, %s34
    %s54 = sphi 0, %s54
    %s56 = sphi 0, %s54
    %s57 = sphi 0, %s56
    %s71 = sphi 0, %s57
    %s75 = sphi 0, %s75
    %s77 = sphi 0, %s75
    %s78 = sphi 0, %s77
    %s92 = sphi 0, %s78
    %s96 = sphi 0, %s96
    %s98 = sphi 0, %s96
    %s99 = sphi 0, %s98
    %s113 = sphi 0, %s99
    %s117 = sphi 0, %s117
    %s119 = sphi 0, %s117
    %s120 = sphi 0, %s119
    %s134 = sphi 0, %s120
    %s138 = sphi 0, %s138
    %s140 = sphi 0, %s138
    %s141 = sphi 0, %s140
    %s155 = sphi 0, %s141
    %s159 = sphi 0, %s159
    %s161 = sphi 0, %s159
    %s162 = sphi 0, %s161
    %s176 = sphi 0, %s162
    %s180 = sphi 0, %s180
    %s182 = sphi 0, %s180
    %s183 = sphi 0, %s182
    %s197 = sphi 0, %s183
    %s201 = sphi 0, %s201
    %s203 = sphi 0, %s201
    %s204 = sphi 0, %s203
    %s218 = sphi 0, %s204
    %s222 = sphi 0, %s222
    %s224 = sphi 0, %s222
    %s225 = sphi 0, %s224
    %s239 = sphi 0, %s225
    %s243 = sphi 0, %s243
    %s245 = sphi 0, %s243
    %s246 = sphi 0, %s245
    %s260 = sphi 0, %s246
    %s264 = sphi 0, %s264
    %s266 = sphi 0, %s264
    %s267 = sphi 0, %s266
    %s281 = sphi 0, %s267
    %s285 = sphi 0, %s285
    %s287 = sphi 0, %s285
    %s288 = sphi 0, %s287
    %s302 = sphi 0, %s288
    %s306 = sphi 0, %s306
    %s308 = sphi 0, %s306
    %s309 = sphi 0, %s308
    %s323 = sphi 0, %s309
    %s329 = sphi 0, %s331
    %s332 = sphi 0, %s329
    %s333 = sphi 0, %s332
    %s349 = sphi 0, %s333
  $region4: #{rcn_a_forward.1} parent=0 // loop_header_branch
    %23 = sbr.rel (%p21) target = $region8
  $region5: #{rcn_a_forward.1} parent=0 // loop_body
    %s25 = ssub.s32 %s20, 1
    %s26 = ssub.s32 %s20, 2
    %s27 = sadd.s32 %s20, 1
    %s28 = ssub.s32 %s20, %s27
    %p29 = scmp.eq.s32.totalorder %s28, 0
    %s31 = sadd.s32 %s30, 1
    %s32 = scalar_select %p29, %s30, %s31
    %p35 = pneg %p29
    %p36 = scmp.eq.s32.totalorder %s20, 1
    %p37 = por %p35, %p36
    %p38 = scmp.ne.s32.totalorder %s30, %s33
    %p39 = scmp.eq.s32.totalorder %s20, 0
    %p40 = por %p38, %p39
    %p41 = scmp.ne.s32.totalorder %s30, %s33
    %p42 = scmp.eq.s32.totalorder %s25, 1
    %p43 = por %p41, %p42
    %p44 = scmp.ne.s32.totalorder %s33, %s34
    %p45 = scmp.eq.s32.totalorder %s25, 0
    %p46 = por %p44, %p45
    %p47 = scmp.ne.s32.totalorder %s33, %s34
    %p48 = scmp.eq.s32.totalorder %s26, 1
    %p49 = por %p47, %p48
    %p51 = scmp.ne.s32.totalorder %s34, %s50
    %p52 = scmp.eq.s32.totalorder %s26, 0
    %p53 = por %p51, %p52
    %s55 = sadd.s32 %s54, 1
    %p58 = scmp.eq.s32.totalorder %s20, 1
    %p59 = scmp.ne.s32.totalorder %s54, %s56
    %p60 = scmp.eq.s32.totalorder %s20, 0
    %p61 = por %p59, %p60
    %p62 = scmp.ne.s32.totalorder %s54, %s56
    %p63 = scmp.eq.s32.totalorder %s25, 1
    %p64 = por %p62, %p63
    %p65 = scmp.ne.s32.totalorder %s56, %s57
    %p66 = scmp.eq.s32.totalorder %s25, 0
    %p67 = por %p65, %p66
    %p68 = scmp.ne.s32.totalorder %s56, %s57
    %p69 = scmp.eq.s32.totalorder %s26, 1
    %p70 = por %p68, %p69
    %p72 = scmp.ne.s32.totalorder %s57, %s71
    %p73 = scmp.eq.s32.totalorder %s26, 0
    %p74 = por %p72, %p73
    %s76 = sadd.s32 %s75, 1
    %p79 = scmp.eq.s32.totalorder %s20, 1
    %p80 = scmp.ne.s32.totalorder %s75, %s77
    %p81 = scmp.eq.s32.totalorder %s20, 0
    %p82 = por %p80, %p81
    %p83 = scmp.ne.s32.totalorder %s75, %s77
    %p84 = scmp.eq.s32.totalorder %s25, 1
    %p85 = por %p83, %p84
    %p86 = scmp.ne.s32.totalorder %s77, %s78
    %p87 = scmp.eq.s32.totalorder %s25, 0
    %p88 = por %p86, %p87
    %p89 = scmp.ne.s32.totalorder %s77, %s78
    %p90 = scmp.eq.s32.totalorder %s26, 1
    %p91 = por %p89, %p90
    %p93 = scmp.ne.s32.totalorder %s78, %s92
    %p94 = scmp.eq.s32.totalorder %s26, 0
    %p95 = por %p93, %p94
    %s97 = sadd.s32 %s96, 1
    %p100 = scmp.eq.s32.totalorder %s20, 1
    %p101 = scmp.ne.s32.totalorder %s96, %s98
    %p102 = scmp.eq.s32.totalorder %s20, 0
    %p103 = por %p101, %p102
    %p104 = scmp.ne.s32.totalorder %s96, %s98
    %p105 = scmp.eq.s32.totalorder %s25, 1
    %p106 = por %p104, %p105
    %p107 = scmp.ne.s32.totalorder %s98, %s99
    %p108 = scmp.eq.s32.totalorder %s25, 0
    %p109 = por %p107, %p108
    %p110 = scmp.ne.s32.totalorder %s98, %s99
    %p111 = scmp.eq.s32.totalorder %s26, 1
    %p112 = por %p110, %p111
    %p114 = scmp.ne.s32.totalorder %s99, %s113
    %p115 = scmp.eq.s32.totalorder %s26, 0
    %p116 = por %p114, %p115
    %s118 = sadd.s32 %s117, 1
    %p121 = scmp.eq.s32.totalorder %s20, 1
    %p122 = scmp.ne.s32.totalorder %s117, %s119
    %p123 = scmp.eq.s32.totalorder %s20, 0
    %p124 = por %p122, %p123
    %p125 = scmp.ne.s32.totalorder %s117, %s119
    %p126 = scmp.eq.s32.totalorder %s25, 1
    %p127 = por %p125, %p126
    %p128 = scmp.ne.s32.totalorder %s119, %s120
    %p129 = scmp.eq.s32.totalorder %s25, 0
    %p130 = por %p128, %p129
    %p131 = scmp.ne.s32.totalorder %s119, %s120
    %p132 = scmp.eq.s32.totalorder %s26, 1
    %p133 = por %p131, %p132
    %p135 = scmp.ne.s32.totalorder %s120, %s134
    %p136 = scmp.eq.s32.totalorder %s26, 0
    %p137 = por %p135, %p136
    %s139 = sadd.s32 %s138, 1
    %p142 = scmp.eq.s32.totalorder %s20, 1
    %p143 = scmp.ne.s32.totalorder %s138, %s140
    %p144 = scmp.eq.s32.totalorder %s20, 0
    %p145 = por %p143, %p144
    %p146 = scmp.ne.s32.totalorder %s138, %s140
    %p147 = scmp.eq.s32.totalorder %s25, 1
    %p148 = por %p146, %p147
    %p149 = scmp.ne.s32.totalorder %s140, %s141
    %p150 = scmp.eq.s32.totalorder %s25, 0
    %p151 = por %p149, %p150
    %p152 = scmp.ne.s32.totalorder %s140, %s141
    %p153 = scmp.eq.s32.totalorder %s26, 1
    %p154 = por %p152, %p153
    %p156 = scmp.ne.s32.totalorder %s141, %s155
    %p157 = scmp.eq.s32.totalorder %s26, 0
    %p158 = por %p156, %p157
    %s160 = sadd.s32 %s159, 1
    %p163 = scmp.eq.s32.totalorder %s20, 1
    %p164 = scmp.ne.s32.totalorder %s159, %s161
    %p165 = scmp.eq.s32.totalorder %s20, 0
    %p166 = por %p164, %p165
    %p167 = scmp.ne.s32.totalorder %s159, %s161
    %p168 = scmp.eq.s32.totalorder %s25, 1
    %p169 = por %p167, %p168
    %p170 = scmp.ne.s32.totalorder %s161, %s162
    %p171 = scmp.eq.s32.totalorder %s25, 0
    %p172 = por %p170, %p171
    %p173 = scmp.ne.s32.totalorder %s161, %s162
    %p174 = scmp.eq.s32.totalorder %s26, 1
    %p175 = por %p173, %p174
    %p177 = scmp.ne.s32.totalorder %s162, %s176
    %p178 = scmp.eq.s32.totalorder %s26, 0
    %p179 = por %p177, %p178
    %s181 = sadd.s32 %s180, 1
    %p184 = scmp.eq.s32.totalorder %s20, 1
    %p185 = scmp.ne.s32.totalorder %s180, %s182
    %p186 = scmp.eq.s32.totalorder %s20, 0
    %p187 = por %p185, %p186
    %p188 = scmp.ne.s32.totalorder %s180, %s182
    %p189 = scmp.eq.s32.totalorder %s25, 1
    %p190 = por %p188, %p189
    %p191 = scmp.ne.s32.totalorder %s182, %s183
    %p192 = scmp.eq.s32.totalorder %s25, 0
    %p193 = por %p191, %p192
    %p194 = scmp.ne.s32.totalorder %s182, %s183
    %p195 = scmp.eq.s32.totalorder %s26, 1
    %p196 = por %p194, %p195
    %p198 = scmp.ne.s32.totalorder %s183, %s197
    %p199 = scmp.eq.s32.totalorder %s26, 0
    %p200 = por %p198, %p199
    %s202 = sadd.s32 %s201, 1
    %p205 = scmp.eq.s32.totalorder %s20, 1
    %p206 = scmp.ne.s32.totalorder %s201, %s203
    %p207 = scmp.eq.s32.totalorder %s20, 0
    %p208 = por %p206, %p207
    %p209 = scmp.ne.s32.totalorder %s201, %s203
    %p210 = scmp.eq.s32.totalorder %s25, 1
    %p211 = por %p209, %p210
    %p212 = scmp.ne.s32.totalorder %s203, %s204
    %p213 = scmp.eq.s32.totalorder %s25, 0
    %p214 = por %p212, %p213
    %p215 = scmp.ne.s32.totalorder %s203, %s204
    %p216 = scmp.eq.s32.totalorder %s26, 1
    %p217 = por %p215, %p216
    %p219 = scmp.ne.s32.totalorder %s204, %s218
    %p220 = scmp.eq.s32.totalorder %s26, 0
    %p221 = por %p219, %p220
    %s223 = sadd.s32 %s222, 1
    %p226 = scmp.eq.s32.totalorder %s20, 1
    %p227 = scmp.ne.s32.totalorder %s222, %s224
    %p228 = scmp.eq.s32.totalorder %s20, 0
    %p229 = por %p227, %p228
    %p230 = scmp.ne.s32.totalorder %s222, %s224
    %p231 = scmp.eq.s32.totalorder %s25, 1
    %p232 = por %p230, %p231
    %p233 = scmp.ne.s32.totalorder %s224, %s225
    %p234 = scmp.eq.s32.totalorder %s25, 0
    %p235 = por %p233, %p234
    %p236 = scmp.ne.s32.totalorder %s224, %s225
    %p237 = scmp.eq.s32.totalorder %s26, 1
    %p238 = por %p236, %p237
    %p240 = scmp.ne.s32.totalorder %s225, %s239
    %p241 = scmp.eq.s32.totalorder %s26, 0
    %p242 = por %p240, %p241
    %s244 = sadd.s32 %s243, 1
    %p247 = scmp.eq.s32.totalorder %s20, 1
    %p248 = scmp.ne.s32.totalorder %s243, %s245
    %p249 = scmp.eq.s32.totalorder %s20, 0
    %p250 = por %p248, %p249
    %p251 = scmp.ne.s32.totalorder %s243, %s245
    %p252 = scmp.eq.s32.totalorder %s25, 1
    %p253 = por %p251, %p252
    %p254 = scmp.ne.s32.totalorder %s245, %s246
    %p255 = scmp.eq.s32.totalorder %s25, 0
    %p256 = por %p254, %p255
    %p257 = scmp.ne.s32.totalorder %s245, %s246
    %p258 = scmp.eq.s32.totalorder %s26, 1
    %p259 = por %p257, %p258
    %p261 = scmp.ne.s32.totalorder %s246, %s260
    %p262 = scmp.eq.s32.totalorder %s26, 0
    %p263 = por %p261, %p262
    %s265 = sadd.s32 %s264, 1
    %p268 = scmp.eq.s32.totalorder %s20, 1
    %p269 = scmp.ne.s32.totalorder %s264, %s266
    %p270 = scmp.eq.s32.totalorder %s20, 0
    %p271 = por %p269, %p270
    %p272 = scmp.ne.s32.totalorder %s264, %s266
    %p273 = scmp.eq.s32.totalorder %s25, 1
    %p274 = por %p272, %p273
    %p275 = scmp.ne.s32.totalorder %s266, %s267
    %p276 = scmp.eq.s32.totalorder %s25, 0
    %p277 = por %p275, %p276
    %p278 = scmp.ne.s32.totalorder %s266, %s267
    %p279 = scmp.eq.s32.totalorder %s26, 1
    %p280 = por %p278, %p279
    %p282 = scmp.ne.s32.totalorder %s267, %s281
    %p283 = scmp.eq.s32.totalorder %s26, 0
    %p284 = por %p282, %p283
    %s286 = sadd.s32 %s285, 1
    %p289 = scmp.eq.s32.totalorder %s20, 1
    %p290 = scmp.ne.s32.totalorder %s285, %s287
    %p291 = scmp.eq.s32.totalorder %s20, 0
    %p292 = por %p290, %p291
    %p293 = scmp.ne.s32.totalorder %s285, %s287
    %p294 = scmp.eq.s32.totalorder %s25, 1
    %p295 = por %p293, %p294
    %p296 = scmp.ne.s32.totalorder %s287, %s288
    %p297 = scmp.eq.s32.totalorder %s25, 0
    %p298 = por %p296, %p297
    %p299 = scmp.ne.s32.totalorder %s287, %s288
    %p300 = scmp.eq.s32.totalorder %s26, 1
    %p301 = por %p299, %p300
    %p303 = scmp.ne.s32.totalorder %s288, %s302
    %p304 = scmp.eq.s32.totalorder %s26, 0
    %p305 = por %p303, %p304
    %s307 = sadd.s32 %s306, 1
    %p310 = scmp.eq.s32.totalorder %s20, 1
    %p311 = scmp.ne.s32.totalorder %s306, %s308
    %p312 = scmp.eq.s32.totalorder %s20, 0
    %p313 = por %p311, %p312
    %p314 = scmp.ne.s32.totalorder %s306, %s308
    %p315 = scmp.eq.s32.totalorder %s25, 1
    %p316 = por %p314, %p315
    %p317 = scmp.ne.s32.totalorder %s308, %s309
    %p318 = scmp.eq.s32.totalorder %s25, 0
    %p319 = por %p317, %p318
    %p320 = scmp.ne.s32.totalorder %s308, %s309
    %p321 = scmp.eq.s32.totalorder %s26, 1
    %p322 = por %p320, %p321
    %p324 = scmp.ne.s32.totalorder %s309, %s323
    %p325 = scmp.eq.s32.totalorder %s26, 0
    %p326 = por %p324, %p325
    %s327 = ssub.s32 %s20, %s27
    %p328 = scmp.eq.s32.totalorder %s327, 0
    %s330 = sadd.s32 %s329, 1
    %s331 = scalar_select %p328, %s329, %s330
    %p334 = pneg %p328
    %p335 = scmp.eq.s32.totalorder %s20, 1
    %p336 = por %p334, %p335
    %p337 = scmp.ne.s32.totalorder %s329, %s332
    %p338 = scmp.eq.s32.totalorder %s20, 0
    %p339 = por %p337, %p338
    %p340 = scmp.ne.s32.totalorder %s329, %s332
    %p341 = scmp.eq.s32.totalorder %s25, 1
    %p342 = por %p340, %p341
    %p343 = scmp.ne.s32.totalorder %s332, %s333
    %p344 = scmp.eq.s32.totalorder %s25, 0
    %p345 = por %p343, %p344
    %p346 = scmp.ne.s32.totalorder %s332, %s333
    %p347 = scmp.eq.s32.totalorder %s26, 1
    %p348 = por %p346, %p347
    %p350 = scmp.ne.s32.totalorder %s333, %s349
    %p351 = scmp.eq.s32.totalorder %s26, 0
    %p352 = por %p350, %p351
    %p353 = scmp.le.s32.totalorder 1, %s20
    %p354 = scmp.lt.s32.totalorder %s20, 3
    %p355 = pnand %p353, %p354
    %p356 = pneg %p355
    // Predicated region
    $region9: #{rcn_a_forward.1} parent=5 // pred_check
      _
    $region10: #{rcn_a_forward.1} parent=5 // pred_check_branch
      %358 = sbr.rel (%p355) target = $region12
    $region11: #{rcn_a_forward.1} parent=5 // pred_region
      %s359 = ssub.s32 %s20, 1
      // Predicated region
      $region13: #{rcn_a_forward.1} parent=11 // pred_check
        %p360 = pneg %p67
      $region14: #{rcn_a_forward.1} parent=11 // pred_check_branch
        %362 = sbr.rel (%p360) target = $region16
      $region15: #{rcn_a_forward.1} parent=11 // pred_region
        _
      $region16: #{rcn_a_forward.1} parent=11 // pred_fallthru
        _
      // Predicated region
      $region17: #{rcn_a_forward.1} parent=11 // pred_check
        %p363 = pneg %p88
      $region18: #{rcn_a_forward.1} parent=11 // pred_check_branch
        %365 = sbr.rel (%p363) target = $region20
      $region19: #{rcn_a_forward.1} parent=11 // pred_region
        _
      $region20: #{rcn_a_forward.1} parent=11 // pred_fallthru
        _
      // Predicated region
      $region21: #{rcn_a_forward.1} parent=11 // pred_check
        %p366 = pneg %p109
      $region22: #{rcn_a_forward.1} parent=11 // pred_check_branch
        %368 = sbr.rel (%p366) target = $region24
      $region23: #{rcn_a_forward.1} parent=11 // pred_region
        _
      $region24: #{rcn_a_forward.1} parent=11 // pred_fallthru
        _
      // Predicated region
      $region25: #{rcn_a_forward.1} parent=11 // pred_check
        %p369 = pneg %p130
      $region26: #{rcn_a_forward.1} parent=11 // pred_check_branch
        %371 = sbr.rel (%p369) target = $region28
      $region27: #{rcn_a_forward.1} parent=11 // pred_region
        _
      $region28: #{rcn_a_forward.1} parent=11 // pred_fallthru
        _
      // Predicated region
      $region29: #{rcn_a_forward.1} parent=11 // pred_check
        %p372 = pneg %p151
      $region30: #{rcn_a_forward.1} parent=11 // pred_check_branch
        %374 = sbr.rel (%p372) target = $region32
      $region31: #{rcn_a_forward.1} parent=11 // pred_region
        _
      $region32: #{rcn_a_forward.1} parent=11 // pred_fallthru
        _
      // Predicated region
      $region33: #{rcn_a_forward.1} parent=11 // pred_check
        %p375 = pneg %p172
      $region34: #{rcn_a_forward.1} parent=11 // pred_check_branch
        %377 = sbr.rel (%p375) target = $region36
      $region35: #{rcn_a_forward.1} parent=11 // pred_region
        _
      $region36: #{rcn_a_forward.1} parent=11 // pred_fallthru
        _
      // Predicated region
      $region37: #{rcn_a_forward.1} parent=11 // pred_check
        %p378 = pneg %p193
      $region38: #{rcn_a_forward.1} parent=11 // pred_check_branch
        %380 = sbr.rel (%p378) target = $region40
      $region39: #{rcn_a_forward.1} parent=11 // pred_region
        _
      $region40: #{rcn_a_forward.1} parent=11 // pred_fallthru
        _
      // Predicated region
      $region41: #{rcn_a_forward.1} parent=11 // pred_check
        %p381 = pneg %p214
      $region42: #{rcn_a_forward.1} parent=11 // pred_check_branch
        %383 = sbr.rel (%p381) target = $region44
      $region43: #{rcn_a_forward.1} parent=11 // pred_region
        _
      $region44: #{rcn_a_forward.1} parent=11 // pred_fallthru
        _
      // Predicated region
      $region45: #{rcn_a_forward.1} parent=11 // pred_check
        %p384 = pneg %p235
      $region46: #{rcn_a_forward.1} parent=11 // pred_check_branch
        %386 = sbr.rel (%p384) target = $region48
      $region47: #{rcn_a_forward.1} parent=11 // pred_region
        _
      $region48: #{rcn_a_forward.1} parent=11 // pred_fallthru
        _
      // Predicated region
      $region49: #{rcn_a_forward.1} parent=11 // pred_check
        %p387 = pneg %p256
      $region50: #{rcn_a_forward.1} parent=11 // pred_check_branch
        %389 = sbr.rel (%p387) target = $region52
      $region51: #{rcn_a_forward.1} parent=11 // pred_region
        _
      $region52: #{rcn_a_forward.1} parent=11 // pred_fallthru
        _
      // Predicated region
      $region53: #{rcn_a_forward.1} parent=11 // pred_check
        %p390 = pneg %p277
      $region54: #{rcn_a_forward.1} parent=11 // pred_check_branch
        %392 = sbr.rel (%p390) target = $region56
      $region55: #{rcn_a_forward.1} parent=11 // pred_region
        _
      $region56: #{rcn_a_forward.1} parent=11 // pred_fallthru
        _
      // Predicated region
      $region57: #{rcn_a_forward.1} parent=11 // pred_check
        %p393 = pneg %p298
      $region58: #{rcn_a_forward.1} parent=11 // pred_check_branch
        %395 = sbr.rel (%p393) target = $region60
      $region59: #{rcn_a_forward.1} parent=11 // pred_region
        _
      $region60: #{rcn_a_forward.1} parent=11 // pred_fallthru
        _
      // Predicated region
      $region61: #{rcn_a_forward.1} parent=11 // pred_check
        %p396 = pneg %p319
      $region62: #{rcn_a_forward.1} parent=11 // pred_check_branch
        %398 = sbr.rel (%p396) target = $region64
      $region63: #{rcn_a_forward.1} parent=11 // pred_region
        _
      $region64: #{rcn_a_forward.1} parent=11 // pred_fallthru
        _
    $region12: #{rcn_a_forward.1} parent=5 // pred_fallthru
      _
    %p399 = scmp.lt.s32.totalorder %s20, 2
    // Predicated region
    $region65: #{rcn_a_forward.1} parent=5 // pred_check
      %p400 = pneg %p399
    $region66: #{rcn_a_forward.1} parent=5 // pred_check_branch
      %402 = sbr.rel (%p400) target = $region68
    $region67: #{rcn_a_forward.1} parent=5 // pred_region
      // Predicated region
      $region69: #{rcn_a_forward.1} parent=67 // pred_check
        %p403 = pneg %p40
      $region70: #{rcn_a_forward.1} parent=67 // pred_check_branch
        %405 = sbr.rel (%p403) target = $region72
      $region71: #{rcn_a_forward.1} parent=67 // pred_region
        %p406 = scmp.lt.s32.totalorder %s20, 1
        %s407 = scalar_select %p406, %s20, 1
        %s408 = smul.addr %s407, 8
        %s409 = smul.addr %s408, 8
        %s410 = scalar_lea.vmem %s0, %s409
      $region72: #{rcn_a_forward.1} parent=67 // pred_fallthru
        _
    $region68: #{rcn_a_forward.1} parent=5 // pred_fallthru
      _
    %p411 = scmp.le.s32.totalorder 1, %s20
    %p412 = scmp.lt.s32.totalorder %s20, 3
    %p413 = pnand %p411, %p412
    %p414 = pneg %p413
    // Predicated region
    $region73: #{rcn_a_forward.1} parent=5 // pred_check
      _
    $region74: #{rcn_a_forward.1} parent=5 // pred_check_branch
      %416 = sbr.rel (%p413) target = $region76
    $region75: #{rcn_a_forward.1} parent=5 // pred_region
      %s417 = ssub.s32 %s20, 1
      %p418 = scmp.lt.s32.totalorder %s25, 1
      %s419 = scalar_select %p418, %s25, 1
      %s420 = smul.addr %s419, 8
      %s421 = smul.addr %s420, 8
      %s422 = scalar_lea.vmem %s0, %s421
      %p423 = pneg %p46
      %p424 = pneg %p43
      %p425 = pneg %p67
      %p426 = pneg %p64
      %p427 = pneg %p88
      %p428 = pneg %p85
      %p429 = pneg %p109
      %p430 = pneg %p106
      %p431 = pneg %p130
      %p432 = pneg %p127
      %p433 = pneg %p151
      %p434 = pneg %p148
      %p435 = pneg %p172
      %p436 = pneg %p169
      %p437 = pneg %p193
      %p438 = pneg %p190
      %p439 = pneg %p214
      %p440 = pneg %p211
      %p441 = pneg %p235
      %p442 = pneg %p232
      %p443 = pneg %p256
      %p444 = pneg %p253
      %p445 = pneg %p277
      %p446 = pneg %p274
      %p447 = pneg %p298
      %p448 = pneg %p295
      %p449 = pneg %p319
      %p450 = pneg %p316
      %p451 = pneg %p345
      %p452 = pneg %p342
      %p453 = scmp.lt.s32.totalorder %s25, 1
      %s454 = scalar_select %p453, %s25, 1
      %s455 = smul.addr %s454, 4
      %s456 = scalar_lea.vmem %s14, %s455
      %p457 = scmp.lt.s32.totalorder %s25, 1
      %s458 = scalar_select %p457, %s25, 1
      %s459 = smul.addr %s458, 8
      %s460 = smul.addr %s459, 8
      %s461 = scalar_lea.vmem %s0, %s460
      %p462 = scmp.lt.s32.totalorder %s25, 1
      %s463 = scalar_select %p462, %s25, 1
      %s464 = smul.addr %s463, 4
      %s465 = scalar_lea.vmem %s14, %s464
      %v467 = vld [vmem:[%s10] sm:$0x3]
      %468 = vst [vmem:[#allocation3] sm:$0xff] 0
      %v469 = vld [vmem:[%s461] sm:$0xff]
      %v470 = vld [vmem:[%s461 + $0x8] sm:$0xff]
      %v471 = vld [vmem:[%s461 + $0x10] sm:$0xff]
      %v472 = vld [vmem:[%s461 + $0x18] sm:$0xff]
      %v473 = vpack.c.bf16 %v471, %v469
      %v474 = vpack.c.bf16 %v472, %v470
      %v477 = vunpack.c.l.b16 %v473
      %v478 = vunpack.c.l.b16 %v474
      %v479 = vunpack.c.h.b16 %v473
      %v480 = vunpack.c.h.b16 %v474
      %v481 = vpack.c.b16 %v478, %v477
      %v482 = vpack.c.b16 %v480, %v479
      %483 = vrot.lane.b32.xlu0 %v481, 113
      %v484 = vpop.permute.xlu0 %483
      %485 = vrot.lane.b32.xlu0 %v482, 113
      %v486 = vpop.permute.xlu0 %485
      %v487 = vrot.slane %v484, 4
      %v488 = vrot.slane %v486, 4
      %vm489 = vcmask 924672
      %v490 = vsel %vm489, %v484, %v487
      %v491 = vsel %vm489, %v486, %v488
      %vm494 = vcmask 1043456
      %vm495 = vcmask 523268
      %vm496 = vmor %vm495, %vm494
      %497 = vst.msk [vmem:[#allocation2] sm:$0xff] %vm496, %v490
      %498 = vst.msk [vmem:[#allocation2 + $0x8] sm:$0xff] %vm496, %v491
      %v499 = vld [vmem:[%s461] sm:$0xff]
      %v500 = vld [vmem:[%s461 + $0x8] sm:$0xff]
      %v501 = vld [vmem:[%s461 + $0x10] sm:$0xff]
      %v502 = vld [vmem:[%s461 + $0x18] sm:$0xff]
      %v503 = vpack.c.bf16 %v501, %v499
      %v504 = vpack.c.bf16 %v502, %v500
      %v507 = vunpack.c.l.b16 %v503
      %v508 = vunpack.c.l.b16 %v504
      %v509 = vunpack.c.h.b16 %v503
      %v510 = vunpack.c.h.b16 %v504
      %v511 = vpack.c.b16 %v508, %v507
      %v512 = vpack.c.b16 %v510, %v509
      %513 = vrot.lane.b32.xlu0 %v511, 112
      %v514 = vpop.permute.xlu0 %513
      %515 = vrot.lane.b32.xlu0 %v512, 112
      %v516 = vpop.permute.xlu0 %515
      %v517 = vrot.slane %v514, 4
      %v518 = vrot.slane %v516, 4
      %vm519 = vcmask 916480
      %v520 = vsel %vm519, %v514, %v517
      %v521 = vsel %vm519, %v516, %v518
      %524 = vst.msk [vmem:[#allocation2 + $0x10] sm:$0xff] %vm496, %v520
      %525 = vst.msk [vmem:[#allocation2 + $0x18] sm:$0xff] %vm496, %v521
      %v526 = vld [vmem:[%s461] sm:$0xff]
      %v527 = vld [vmem:[%s461 + $0x8] sm:$0xff]
      %v528 = vld [vmem:[%s461 + $0x20] sm:$0xff]
      %v529 = vld [vmem:[%s461 + $0x28] sm:$0xff]
      %532 = vrot.lane.b32.xlu0 %v528, 2
      %v533 = vpop.permute.xlu0 %532
      %534 = vrot.lane.b32.xlu0 %v529, 2
      %v535 = vpop.permute.xlu0 %534
      %vm536 = vcmask 15360
      %v537 = vsel %vm536, %v533, %v535
      %v540 = vpack.c.bf16 %v533, %v526
      %v541 = vpack.c.bf16 %v537, %v527
      %v544 = vunpack.c.l.b16 %v540
      %v545 = vunpack.c.l.b16 %v541
      %v546 = vunpack.c.h.b16 %v540
      %v547 = vunpack.c.h.b16 %v541
      %v548 = vpack.c.b16 %v545, %v544
      %v549 = vpack.c.b16 %v547, %v546
      %550 = vrot.lane.b32.xlu0 %v548, 111
      %v551 = vpop.permute.xlu0 %550
      %552 = vrot.lane.b32.xlu0 %v549, 111
      %v553 = vpop.permute.xlu0 %552
      %v554 = vrot.slane %v551, 4
      %v555 = vrot.slane %v553, 4
      %vm556 = vcmask 908288
      %v557 = vsel %vm556, %v551, %v554
      %v558 = vsel %vm556, %v553, %v555
      %561 = vst.msk [vmem:[#allocation2 + $0x20] sm:$0xff] %vm496, %v557
      %562 = vst.msk [vmem:[#allocation2 + $0x28] sm:$0xff] %vm496, %v558
      %v563 = vld [vmem:[%s461 + $0x30] sm:$0xff]
      %v564 = vld [vmem:[%s461 + $0x38] sm:$0xff]
      %v565 = vld [vmem:[%s461 + $0x20] sm:$0xff]
      %v566 = vld [vmem:[%s461 + $0x28] sm:$0xff]
      %569 = vrot.lane.b32.xlu0 %v565, 127
      %v570 = vpop.permute.xlu0 %569
      %571 = vrot.lane.b32.xlu0 %v566, 127
      %v572 = vpop.permute.xlu0 %571
      %vm573 = vcmask 1039360
      %v574 = vsel %vm573, %v570, %v572
      %v577 = vpack.c.bf16 %v574, %v563
      %v578 = vpack.c.bf16 %v572, %v564
      %v581 = vunpack.c.l.b16 %v577
      %v582 = vunpack.c.l.b16 %v578
      %v583 = vunpack.c.h.b16 %v577
      %v584 = vunpack.c.h.b16 %v578
      %v585 = vpack.c.b16 %v582, %v581
      %v586 = vpack.c.b16 %v584, %v583
      %587 = vrot.lane.b32.xlu0 %v585, 113
      %v588 = vpop.permute.xlu0 %587
      %589 = vrot.lane.b32.xlu0 %v586, 113
      %v590 = vpop.permute.xlu0 %589
      %v591 = vrot.slane %v588, 4
      %v592 = vrot.slane %v590, 4
      %v593 = vsel %vm489, %v588, %v591
      %v594 = vsel %vm489, %v590, %v592
      %597 = vst.msk [vmem:[#allocation2 + $0x30] sm:$0xff] %vm496, %v593
      %598 = vst.msk [vmem:[#allocation2 + $0x38] sm:$0xff] %vm496, %v594
      %v599 = vld [vmem:[%s461 + $0x30] sm:$0xff]
      %v600 = vld [vmem:[%s461 + $0x38] sm:$0xff]
      %v601 = vld [vmem:[%s461 + $0x20] sm:$0xff]
      %v602 = vld [vmem:[%s461 + $0x28] sm:$0xff]
      %605 = vrot.lane.b32.xlu0 %v601, 127
      %v606 = vpop.permute.xlu0 %605
      %607 = vrot.lane.b32.xlu0 %v602, 127
      %v608 = vpop.permute.xlu0 %607
      %v609 = vsel %vm573, %v606, %v608
      %v612 = vpack.c.bf16 %v609, %v599
      %v613 = vpack.c.bf16 %v608, %v600
      %v616 = vunpack.c.l.b16 %v612
      %v617 = vunpack.c.l.b16 %v613
      %v618 = vunpack.c.h.b16 %v612
      %v619 = vunpack.c.h.b16 %v613
      %v620 = vpack.c.b16 %v617, %v616
      %v621 = vpack.c.b16 %v619, %v618
      %622 = vrot.lane.b32.xlu0 %v620, 112
      %v623 = vpop.permute.xlu0 %622
      %624 = vrot.lane.b32.xlu0 %v621, 112
      %v625 = vpop.permute.xlu0 %624
      %v626 = vrot.slane %v623, 4
      %v627 = vrot.slane %v625, 4
      %v628 = vsel %vm519, %v623, %v626
      %v629 = vsel %vm519, %v625, %v627
      %632 = vst.msk [vmem:[#allocation2 + $0x40] sm:$0xff] %vm496, %v628
      %633 = vst.msk [vmem:[#allocation2 + $0x48] sm:$0xff] %vm496, %v629
      %v634 = vld [vmem:[%s461] sm:$0xff]
      %v635 = vld [vmem:[%s461 + $0x8] sm:$0xff]
      %v636 = vld [vmem:[%s461 + $0x10] sm:$0xff]
      %v637 = vld [vmem:[%s461 + $0x18] sm:$0xff]
      %v638 = vpack.c.bf16 %v636, %v634
      %v639 = vpack.c.bf16 %v637, %v635
      %v642 = vunpack.c.l.b16 %v638
      %v643 = vunpack.c.l.b16 %v639
      %v644 = vunpack.c.h.b16 %v638
      %v645 = vunpack.c.h.b16 %v639
      %v646 = vpack.c.b16 %v643, %v642
      %v647 = vpack.c.b16 %v645, %v644
      %648 = vrot.lane.b32.xlu0 %v646, 97
      %v649 = vpop.permute.xlu0 %648
      %650 = vrot.lane.b32.xlu0 %v647, 97
      %v651 = vpop.permute.xlu0 %650
      %v652 = vrot.slane %v649, 4
      %v653 = vrot.slane %v651, 4
      %vm654 = vcmask 793600
      %v655 = vsel %vm654, %v649, %v652
      %v656 = vsel %vm654, %v651, %v653
      %659 = vst.msk [vmem:[#allocation2 + $0x50] sm:$0xff] %vm496, %v655
      %660 = vst.msk [vmem:[#allocation2 + $0x58] sm:$0xff] %vm496, %v656
      %v661 = vld [vmem:[%s461] sm:$0xff]
      %v662 = vld [vmem:[%s461 + $0x8] sm:$0xff]
      %v663 = vld [vmem:[%s461 + $0x10] sm:$0xff]
      %v664 = vld [vmem:[%s461 + $0x18] sm:$0xff]
      %v665 = vpack.c.bf16 %v663, %v661
      %v666 = vpack.c.bf16 %v664, %v662
      %v669 = vunpack.c.l.b16 %v665
      %v670 = vunpack.c.l.b16 %v666
      %v671 = vunpack.c.h.b16 %v665
      %v672 = vunpack.c.h.b16 %v666
      %v673 = vpack.c.b16 %v670, %v669
      %v674 = vpack.c.b16 %v672, %v671
      %675 = vrot.lane.b32.xlu0 %v673, 96
      %v676 = vpop.permute.xlu0 %675
      %677 = vrot.lane.b32.xlu0 %v674, 96
      %v678 = vpop.permute.xlu0 %677
      %v679 = vrot.slane %v676, 4
      %v680 = vrot.slane %v678, 4
      %vm681 = vcmask 785408
      %v682 = vsel %vm681, %v676, %v679
      %v683 = vsel %vm681, %v678, %v680
      %686 = vst.msk [vmem:[#allocation2 + $0x60] sm:$0xff] %vm496, %v682
      %687 = vst.msk [vmem:[#allocation2 + $0x68] sm:$0xff] %vm496, %v683
      %v688 = vld [vmem:[%s461] sm:$0xff]
      %v689 = vld [vmem:[%s461 + $0x8] sm:$0xff]
      %v690 = vld [vmem:[%s461 + $0x20] sm:$0xff]
      %v691 = vld [vmem:[%s461 + $0x28] sm:$0xff]
      %694 = vrot.lane.b32.xlu0 %v690, 2
      %v695 = vpop.permute.xlu0 %694
      %696 = vrot.lane.b32.xlu0 %v691, 2
      %v697 = vpop.permute.xlu0 %696
      %v698 = vsel %vm536, %v695, %v697
      %v701 = vpack.c.bf16 %v695, %v688
      %v702 = vpack.c.bf16 %v698, %v689
      %v705 = vunpack.c.l.b16 %v701
      %v706 = vunpack.c.l.b16 %v702
      %v707 = vunpack.c.h.b16 %v701
      %v708 = vunpack.c.h.b16 %v702
      %v709 = vpack.c.b16 %v706, %v705
      %v710 = vpack.c.b16 %v708, %v707
      %711 = vrot.lane.b32.xlu0 %v709, 95
      %v712 = vpop.permute.xlu0 %711
      %713 = vrot.lane.b32.xlu0 %v710, 95
      %v714 = vpop.permute.xlu0 %713
      %v715 = vrot.slane %v712, 4
      %v716 = vrot.slane %v714, 4
      %vm717 = vcmask 777216
      %v718 = vsel %vm717, %v712, %v715
      %v719 = vsel %vm717, %v714, %v716
      %722 = vst.msk [vmem:[#allocation2 + $0x70] sm:$0xff] %vm496, %v718
      %723 = vst.msk [vmem:[#allocation2 + $0x78] sm:$0xff] %vm496, %v719
      %v724 = vld [vmem:[%s461 + $0x30] sm:$0xff]
      %v725 = vld [vmem:[%s461 + $0x38] sm:$0xff]
      %v726 = vld [vmem:[%s461 + $0x20] sm:$0xff]
      %v727 = vld [vmem:[%s461 + $0x28] sm:$0xff]
      %730 = vrot.lane.b32.xlu0 %v726, 127
      %v731 = vpop.permute.xlu0 %730
      %732 = vrot.lane.b32.xlu0 %v727, 127
      %v733 = vpop.permute.xlu0 %732
      %v734 = vsel %vm573, %v731, %v733
      %v737 = vpack.c.bf16 %v734, %v724
      %v738 = vpack.c.bf16 %v733, %v725
      %v741 = vunpack.c.l.b16 %v737
      %v742 = vunpack.c.l.b16 %v738
      %v743 = vunpack.c.h.b16 %v737
      %v744 = vunpack.c.h.b16 %v738
      %v745 = vpack.c.b16 %v742, %v741
      %v746 = vpack.c.b16 %v744, %v743
      %747 = vrot.lane.b32.xlu0 %v745, 97
      %v748 = vpop.permute.xlu0 %747
      %749 = vrot.lane.b32.xlu0 %v746, 97
      %v750 = vpop.permute.xlu0 %749
      %v751 = vrot.slane %v748, 4
      %v752 = vrot.slane %v750, 4
      %v753 = vsel %vm654, %v748, %v751
      %v754 = vsel %vm654, %v750, %v752
      %757 = vst.msk [vmem:[#allocation2 + $0x80] sm:$0xff] %vm496, %v753
      %758 = vst.msk [vmem:[#allocation2 + $0x88] sm:$0xff] %vm496, %v754
      %v759 = vld [vmem:[%s461 + $0x30] sm:$0xff]
      %v760 = vld [vmem:[%s461 + $0x38] sm:$0xff]
      %v761 = vld [vmem:[%s461 + $0x20] sm:$0xff]
      %v762 = vld [vmem:[%s461 + $0x28] sm:$0xff]
      %765 = vrot.lane.b32.xlu0 %v761, 127
      %v766 = vpop.permute.xlu0 %765
      %767 = vrot.lane.b32.xlu0 %v762, 127
      %v768 = vpop.permute.xlu0 %767
      %v769 = vsel %vm573, %v766, %v768
      %v772 = vpack.c.bf16 %v769, %v759
      %v773 = vpack.c.bf16 %v768, %v760
      %v776 = vunpack.c.l.b16 %v772
      %v777 = vunpack.c.l.b16 %v773
      %v778 = vunpack.c.h.b16 %v772
      %v779 = vunpack.c.h.b16 %v773
      %v780 = vpack.c.b16 %v777, %v776
      %v781 = vpack.c.b16 %v779, %v778
      %782 = vrot.lane.b32.xlu0 %v780, 96
      %v783 = vpop.permute.xlu0 %782
      %784 = vrot.lane.b32.xlu0 %v781, 96
      %v785 = vpop.permute.xlu0 %784
      %v786 = vrot.slane %v783, 4
      %v787 = vrot.slane %v785, 4
      %v788 = vsel %vm681, %v783, %v786
      %v789 = vsel %vm681, %v785, %v787
      %792 = vst.msk [vmem:[#allocation2 + $0x90] sm:$0xff] %vm496, %v788
      %793 = vst.msk [vmem:[#allocation2 + $0x98] sm:$0xff] %vm496, %v789
      %v794 = vld [vmem:[%s461] sm:$0xff]
      %v795 = vld [vmem:[%s461 + $0x8] sm:$0xff]
      %v796 = vld [vmem:[%s461 + $0x10] sm:$0xff]
      %v797 = vld [vmem:[%s461 + $0x18] sm:$0xff]
      %v798 = vpack.c.bf16 %v796, %v794
      %v799 = vpack.c.bf16 %v797, %v795
      %v802 = vunpack.c.l.b16 %v798
      %v803 = vunpack.c.l.b16 %v799
      %v804 = vunpack.c.h.b16 %v798
      %v805 = vunpack.c.h.b16 %v799
      %v806 = vpack.c.b16 %v803, %v802
      %v807 = vpack.c.b16 %v805, %v804
      %808 = vrot.lane.b32.xlu0 %v806, 81
      %v809 = vpop.permute.xlu0 %808
      %810 = vrot.lane.b32.xlu0 %v807, 81
      %v811 = vpop.permute.xlu0 %810
      %v812 = vrot.slane %v809, 4
      %v813 = vrot.slane %v811, 4
      %vm814 = vcmask 662528
      %v815 = vsel %vm814, %v809, %v812
      %v816 = vsel %vm814, %v811, %v813
      %819 = vst.msk [vmem:[#allocation2 + $0xa0] sm:$0xff] %vm496, %v815
      %820 = vst.msk [vmem:[#allocation2 + $0xa8] sm:$0xff] %vm496, %v816
      %v821 = vld [vmem:[%s461] sm:$0xff]
      %v822 = vld [vmem:[%s461 + $0x8] sm:$0xff]
      %v823 = vld [vmem:[%s461 + $0x10] sm:$0xff]
      %v824 = vld [vmem:[%s461 + $0x18] sm:$0xff]
      %v825 = vpack.c.bf16 %v823, %v821
      %v826 = vpack.c.bf16 %v824, %v822
      %v829 = vunpack.c.l.b16 %v825
      %v830 = vunpack.c.l.b16 %v826
      %v831 = vunpack.c.h.b16 %v825
      %v832 = vunpack.c.h.b16 %v826
      %v833 = vpack.c.b16 %v830, %v829
      %v834 = vpack.c.b16 %v832, %v831
      %835 = vrot.lane.b32.xlu0 %v833, 80
      %v836 = vpop.permute.xlu0 %835
      %837 = vrot.lane.b32.xlu0 %v834, 80
      %v838 = vpop.permute.xlu0 %837
      %v839 = vrot.slane %v836, 4
      %v840 = vrot.slane %v838, 4
      %vm841 = vcmask 654336
      %v842 = vsel %vm841, %v836, %v839
      %v843 = vsel %vm841, %v838, %v840
      %846 = vst.msk [vmem:[#allocation2 + $0xb0] sm:$0xff] %vm496, %v842
      %847 = vst.msk [vmem:[#allocation2 + $0xb8] sm:$0xff] %vm496, %v843
      %v848 = vld [vmem:[%s461] sm:$0xff]
      %v849 = vld [vmem:[%s461 + $0x8] sm:$0xff]
      %v850 = vpack.c.bf16 %v848, %v848
      %v851 = vpack.c.bf16 %v849, %v849
      %v854 = vunpack.c.l.b16 %v850
      %v855 = vunpack.c.l.b16 %v851
      %v856 = vpack.c.b16 %v855, %v854
      %857 = vrot.lane.b32.xlu0 %v856, 79
      %v858 = vpop.permute.xlu0 %857
      %v859 = vrot.slane %v858, 4
      %vm860 = vcmask 646144
      %v861 = vsel %vm860, %v858, %v859
      %863 = vst.msk [vmem:[#allocation2 + $0xc0] sm:$0xff] %vm496, %v861
      %v864 = vld [vmem:[%s1] sm:$0xff]
      %v865 = vld [vmem:[#allocation2] sm:$0xff]
      %v866 = vld [vmem:[#allocation2 + $0x8] sm:$0xff]
      %v867 = vld [vmem:[#allocation2 + $0x10] sm:$0xff]
      %v868 = vld [vmem:[#allocation2 + $0x18] sm:$0xff]
      %v869 = vld [vmem:[#allocation2 + $0x20] sm:$0xff]
      %v870 = vld [vmem:[#allocation2 + $0x28] sm:$0xff]
      %v871 = vld [vmem:[#allocation2 + $0x30] sm:$0xff]
      %v872 = vld [vmem:[#allocation2 + $0x38] sm:$0xff]
      %v873 = vld [vmem:[#allocation2 + $0x40] sm:$0xff]
      %v874 = vld [vmem:[#allocation2 + $0x48] sm:$0xff]
      %v875 = vld [vmem:[#allocation2 + $0x50] sm:$0xff]
      %v876 = vld [vmem:[#allocation2 + $0x58] sm:$0xff]
      %v877 = vld [vmem:[#allocation2 + $0x60] sm:$0xff]
      %v878 = vld [vmem:[#allocation2 + $0x68] sm:$0xff]
      %v879 = vld [vmem:[#allocation2 + $0x70] sm:$0xff]
      %v880 = vld [vmem:[#allocation2 + $0x78] sm:$0xff]
      %v881 = vld [vmem:[#allocation2 + $0x80] sm:$0xff]
      %v882 = vld [vmem:[#allocation2 + $0x88] sm:$0xff]
      %v883 = vld [vmem:[#allocation2 + $0x90] sm:$0xff]
      %v884 = vld [vmem:[#allocation2 + $0x98] sm:$0xff]
      %v885 = vld [vmem:[#allocation2 + $0xa0] sm:$0xff]
      %v886 = vld [vmem:[#allocation2 + $0xa8] sm:$0xff]
      %v887 = vld [vmem:[#allocation2 + $0xb0] sm:$0xff]
      %v888 = vld [vmem:[#allocation2 + $0xb8] sm:$0xff]
      %v889 = vld [vmem:[#allocation2 + $0xc0] sm:$0xff]
      %v891 = vunpack.c.l.b16 %v864
      %v892 = vunpack.c.h.b16 %v864
      %v893 = vpack.c.b16 %v891, %v891
      %v894 = vpack.c.b16 %v892, %v892
      %v921 = vunpack.c.l.b16 %v865
      %v922 = vunpack.c.h.b16 %v865
      %v923 = vunpack.c.l.b16 %v866
      %v924 = vunpack.c.h.b16 %v866
      %v925 = vunpack.c.l.b16 %v867
      %v926 = vunpack.c.h.b16 %v867
      %v927 = vunpack.c.l.b16 %v868
      %v928 = vunpack.c.h.b16 %v868
      %v929 = vunpack.c.l.b16 %v869
      %v930 = vunpack.c.h.b16 %v869
      %v931 = vunpack.c.l.b16 %v870
      %v932 = vunpack.c.h.b16 %v870
      %v933 = vunpack.c.l.b16 %v871
      %v934 = vunpack.c.h.b16 %v871
      %v935 = vunpack.c.l.b16 %v872
      %v936 = vunpack.c.h.b16 %v872
      %v937 = vunpack.c.l.b16 %v873
      %v938 = vunpack.c.h.b16 %v873
      %v939 = vunpack.c.l.b16 %v874
      %v940 = vunpack.c.h.b16 %v874
      %v941 = vunpack.c.l.b16 %v875
      %v942 = vunpack.c.h.b16 %v875
      %v943 = vunpack.c.l.b16 %v876
      %v944 = vunpack.c.h.b16 %v876
      %v945 = vunpack.c.l.b16 %v877
      %v946 = vunpack.c.h.b16 %v877
      %v947 = vunpack.c.l.b16 %v878
      %v948 = vunpack.c.h.b16 %v878
      %v949 = vunpack.c.l.b16 %v879
      %v950 = vunpack.c.h.b16 %v879
      %v951 = vunpack.c.l.b16 %v880
      %v952 = vunpack.c.h.b16 %v880
      %v953 = vunpack.c.l.b16 %v881
      %v954 = vunpack.c.h.b16 %v881
      %v955 = vunpack.c.l.b16 %v882
      %v956 = vunpack.c.h.b16 %v882
      %v957 = vunpack.c.l.b16 %v883
      %v958 = vunpack.c.h.b16 %v883
      %v959 = vunpack.c.l.b16 %v884
      %v960 = vunpack.c.h.b16 %v884
      %v961 = vunpack.c.l.b16 %v885
      %v962 = vunpack.c.h.b16 %v885
      %v963 = vunpack.c.l.b16 %v886
      %v964 = vunpack.c.h.b16 %v886
      %v965 = vunpack.c.l.b16 %v887
      %v966 = vunpack.c.h.b16 %v887
      %v967 = vunpack.c.l.b16 %v888
      %v968 = vunpack.c.h.b16 %v888
      %v969 = vunpack.c.l.b16 %v889
      %v970 = vunpack.c.h.b16 %v889
      %v971 = vpack.c.b16 %v923, %v921
      %v972 = vpack.c.b16 %v924, %v922
      %v973 = vpack.c.b16 %v927, %v925
      %v974 = vpack.c.b16 %v928, %v926
      %v975 = vpack.c.b16 %v931, %v929
      %v976 = vpack.c.b16 %v932, %v930
      %v977 = vpack.c.b16 %v935, %v933
      %v978 = vpack.c.b16 %v936, %v934
      %v979 = vpack.c.b16 %v939, %v937
      %v980 = vpack.c.b16 %v940, %v938
      %v981 = vpack.c.b16 %v943, %v941
      %v982 = vpack.c.b16 %v944, %v942
      %v983 = vpack.c.b16 %v947, %v945
      %v984 = vpack.c.b16 %v948, %v946
      %v985 = vpack.c.b16 %v951, %v949
      %v986 = vpack.c.b16 %v952, %v950
      %v987 = vpack.c.b16 %v955, %v953
      %v988 = vpack.c.b16 %v956, %v954
      %v989 = vpack.c.b16 %v959, %v957
      %v990 = vpack.c.b16 %v960, %v958
      %v991 = vpack.c.b16 %v963, %v961
      %v992 = vpack.c.b16 %v964, %v962
      %v993 = vpack.c.b16 %v967, %v965
      %v994 = vpack.c.b16 %v968, %v966
      %v995 = vpack.c.b16 %v969, %v969
      %v996 = vpack.c.b16 %v970, %v970
      %vm1021 = vcmask 588800
      %v1023 = vsel %vm1021, %v894, 0
      %v1026 = vsel %vm494, %v995, 0
      %v1029 = vsel %vm494, %v996, 0
      %1031 = vmatprep.subr.bf16.mxu0 %v972
      %1032 = vmatpush1.bf16.msra.mxu0 %v971
      %1033 = vmatprep.subr.bf16.mxu0 %v974
      %1034 = vmatpush1.bf16.msra.mxu0 %v973
      %1035 = vmatprep.subr.bf16.mxu0 %v976
      %1036 = vmatpush1.bf16.msra.mxu0 %v975
      %1037 = vmatprep.subr.bf16.mxu0 %v978
      %1038 = vmatpush1.bf16.msra.mxu0 %v977
      %1039 = vmatprep.subr.bf16.mxu0 %v980
      %1040 = vmatpush1.bf16.msra.mxu0 %v979
      %1041 = vmatprep.subr.bf16.mxu0 %v982
      %1042 = vmatpush1.bf16.msra.mxu0 %v981
      %1043 = vmatprep.subr.bf16.mxu0 %v984
      %1044 = vmatpush1.bf16.msra.mxu0 %v983
      %1045 = vmatprep.subr.bf16.mxu0 %v986
      %1046 = vmatpush1.bf16.msra.mxu0 %v985
      %1047 = vmatprep.subr.bf16.mxu0 %v988
      %1048 = vmatpush1.bf16.msra.mxu0 %v987
      %1049 = vmatprep.subr.bf16.mxu0 %v990
      %1050 = vmatpush1.bf16.msra.mxu0 %v989
      %1051 = vmatprep.subr.bf16.mxu0 %v992
      %1052 = vmatpush1.bf16.msra.mxu0 %v991
      %1053 = vmatprep.subr.bf16.mxu0 %v994
      %1054 = vmatpush1.bf16.msra.mxu0 %v993
      %1055 = vmatprep.subr.bf16.mxu0 %v1029
      %1056 = vmatpush1.bf16.msra.mxu0 %v1026
      %1057 = vmatprep.subr.bf16.mxu0 0
      %1058 = vmatpush1.bf16.msra.mxu0 0
      %1059 = vmatprep.subr.bf16.mxu0 0
      %1060 = vmatpush1.bf16.msra.mxu0 0
      %1061 = vmatprep.subr.bf16.mxu0 0
      %1062 = vmatpush1.bf16.msra.mxu0 0
      %1063 = vmatprep.mubr.bf16.mxu0 %v1023
      %1064 = vmatmul.mubr.bf16.gmra.mrb[0].mxu0 %v893
      %v1065 = vpop.f32.mrb[0].mxu0
      %v1066 = vadd.f32 0.0, %v1065
      %v1067 = vpop.f32.mrb[0].mxu0
      %v1068 = vadd.f32 0.0, %v1067
      %v1069 = vpop.f32.mrb[0].mxu0
      %v1070 = vpop.f32.mrb[0].mxu0
      %1071 = vdwg.mxu0
      %v1072 = vld [vmem:[%s2] sm:$0xff]
      %1074 = vset.pattern.permute.xlu0 0
      %1075 = vperm.xlu0 %1074, %v1072
      %v1076 = vpop.permute.xlu0 %1075
      %v1078 = vmul.f32 %v1066, %v1076
      %v1079 = vmul.f32 %v1068, %v1076
      %v1080 = vld [vmem:[%s3] sm:$0xff]
      %1082 = vset.pattern.permute.xlu0 0
      %1083 = vperm.xlu0 %1082, %v1080
      %v1084 = vpop.permute.xlu0 %1083
      %v1086 = vadd.f32 %v1078, %v1084
      %v1087 = vadd.f32 %v1079, %v1084
      %v1088 = vmax.f32 %v1086, 0.0
      %v1089 = vmax.f32 %v1087, 0.0
      %v1090 = vld [vmem:[%s461 + $0x10] sm:$0xff]
      %v1091 = vld [vmem:[%s461 + $0x18] sm:$0xff]
      %v1092 = vld [vmem:[%s461] sm:$0xff]
      %v1093 = vld [vmem:[%s461 + $0x8] sm:$0xff]
      %1096 = vrot.lane.b32.xlu0 %v1092, 127
      %v1097 = vpop.permute.xlu0 %1096
      %1098 = vrot.lane.b32.xlu0 %v1093, 127
      %v1099 = vpop.permute.xlu0 %1098
      %v1100 = vsel %vm573, %v1097, %v1099
      %v1103 = vpack.c.bf16 %v1100, %v1090
      %v1104 = vpack.c.bf16 %v1099, %v1091
      %v1107 = vunpack.c.l.b16 %v1103
      %v1108 = vunpack.c.l.b16 %v1104
      %v1109 = vunpack.c.h.b16 %v1103
      %v1110 = vunpack.c.h.b16 %v1104
      %v1111 = vpack.c.b16 %v1108, %v1107
      %v1112 = vpack.c.b16 %v1110, %v1109
      %1113 = vrot.lane.b32.xlu0 %v1111, 113
      %v1114 = vpop.permute.xlu0 %1113
      %1115 = vrot.lane.b32.xlu0 %v1112, 113
      %v1116 = vpop.permute.xlu0 %1115
      %v1117 = vrot.slane %v1114, 4
      %v1118 = vrot.slane %v1116, 4
      %v1119 = vsel %vm489, %v1114, %v1117
      %v1120 = vsel %vm489, %v1116, %v1118
      %s1123 = scalar_lea.vmem [#allocation2], 200
      %1124 = vst.msk [vmem:[%s1123] sm:$0xff] %vm496, %v1119
      %1125 = vst.msk [vmem:[%s1123 + $0x8] sm:$0xff] %vm496, %v1120
      %v1126 = vld [vmem:[%s461 + $0x10] sm:$0xff]
      %v1127 = vld [vmem:[%s461 + $0x18] sm:$0xff]
      %v1128 = vld [vmem:[%s461] sm:$0xff]
      %v1129 = vld [vmem:[%s461 + $0x8] sm:$0xff]
      %1132 = vrot.lane.b32.xlu0 %v1128, 127
      %v1133 = vpop.permute.xlu0 %1132
      %1134 = vrot.lane.b32.xlu0 %v1129, 127
      %v1135 = vpop.permute.xlu0 %1134
      %v1136 = vsel %vm573, %v1133, %v1135
      %v1139 = vpack.c.bf16 %v1136, %v1126
      %v1140 = vpack.c.bf16 %v1135, %v1127
      %v1143 = vunpack.c.l.b16 %v1139
      %v1144 = vunpack.c.l.b16 %v1140
      %v1145 = vunpack.c.h.b16 %v1139
      %v1146 = vunpack.c.h.b16 %v1140
      %v1147 = vpack.c.b16 %v1144, %v1143
      %v1148 = vpack.c.b16 %v1146, %v1145
      %1149 = vrot.lane.b32.xlu0 %v1147, 112
      %v1150 = vpop.permute.xlu0 %1149
      %1151 = vrot.lane.b32.xlu0 %v1148, 112
      %v1152 = vpop.permute.xlu0 %1151
      %v1153 = vrot.slane %v1150, 4
      %v1154 = vrot.slane %v1152, 4
      %v1155 = vsel %vm519, %v1150, %v1153
      %v1156 = vsel %vm519, %v1152, %v1154
      %1159 = vst.msk [vmem:[%s1123 + $0x10] sm:$0xff] %vm496, %v1155
      %1160 = vst.msk [vmem:[%s1123 + $0x18] sm:$0xff] %vm496, %v1156
      %v1161 = vld [vmem:[%s461 + $0x10] sm:$0xff]
      %v1162 = vld [vmem:[%s461 + $0x18] sm:$0xff]
      %v1163 = vld [vmem:[%s461 + $0x30] sm:$0xff]
      %v1164 = vld [vmem:[%s461 + $0x38] sm:$0xff]
      %1167 = vrot.lane.b32.xlu0 %v1163, 2
      %v1168 = vpop.permute.xlu0 %1167
      %1169 = vrot.lane.b32.xlu0 %v1164, 2
      %v1170 = vpop.permute.xlu0 %1169
      %v1171 = vsel %vm536, %v1168, %v1170
      %v1174 = vpack.c.bf16 %v1168, %v1161
      %v1175 = vpack.c.bf16 %v1171, %v1162
      %v1178 = vunpack.c.l.b16 %v1174
      %v1179 = vunpack.c.l.b16 %v1175
      %v1180 = vunpack.c.h.b16 %v1174
      %v1181 = vunpack.c.h.b16 %v1175
      %v1182 = vpack.c.b16 %v1179, %v1178
      %v1183 = vpack.c.b16 %v1181, %v1180
      %1184 = vrot.lane.b32.xlu0 %v1182, 111
      %v1185 = vpop.permute.xlu0 %1184
      %1186 = vrot.lane.b32.xlu0 %v1183, 111
      %v1187 = vpop.permute.xlu0 %1186
      %v1188 = vrot.slane %v1185, 4
      %v1189 = vrot.slane %v1187, 4
      %v1190 = vsel %vm556, %v1185, %v1188
      %v1191 = vsel %vm556, %v1187, %v1189
      %1194 = vst.msk [vmem:[%s1123 + $0x20] sm:$0xff] %vm496, %v1190
      %1195 = vst.msk [vmem:[%s1123 + $0x28] sm:$0xff] %vm496, %v1191
      %v1196 = vld [vmem:[%s461 + $0x20] sm:$0xff]
      %v1197 = vld [vmem:[%s461 + $0x28] sm:$0xff]
      %v1198 = vld [vmem:[%s461 + $0x30] sm:$0xff]
      %v1199 = vld [vmem:[%s461 + $0x38] sm:$0xff]
      %v1200 = vpack.c.bf16 %v1198, %v1196
      %v1201 = vpack.c.bf16 %v1199, %v1197
      %v1204 = vunpack.c.l.b16 %v1200
      %v1205 = vunpack.c.l.b16 %v1201
      %v1206 = vunpack.c.h.b16 %v1200
      %v1207 = vunpack.c.h.b16 %v1201
      %v1208 = vpack.c.b16 %v1205, %v1204
      %v1209 = vpack.c.b16 %v1207, %v1206
      %1210 = vrot.lane.b32.xlu0 %v1208, 112
      %v1211 = vpop.permute.xlu0 %1210
      %1212 = vrot.lane.b32.xlu0 %v1209, 112
      %v1213 = vpop.permute.xlu0 %1212
      %v1214 = vrot.slane %v1211, 4
      %v1215 = vrot.slane %v1213, 4
      %v1216 = vsel %vm519, %v1211, %v1214
      %v1217 = vsel %vm519, %v1213, %v1215
      %1220 = vst.msk [vmem:[%s1123 + $0x30] sm:$0xff] %vm496, %v1216
      %1221 = vst.msk [vmem:[%s1123 + $0x38] sm:$0xff] %vm496, %v1217
      %v1222 = vld [vmem:[%s461 + $0x20] sm:$0xff]
      %v1223 = vld [vmem:[%s461 + $0x28] sm:$0xff]
      %v1224 = vld [vmem:[%s461 + $0x30] sm:$0xff]
      %v1225 = vld [vmem:[%s461 + $0x38] sm:$0xff]
      %v1226 = vpack.c.bf16 %v1224, %v1222
      %v1227 = vpack.c.bf16 %v1225, %v1223
      %v1230 = vunpack.c.l.b16 %v1226
      %v1231 = vunpack.c.l.b16 %v1227
      %v1232 = vunpack.c.h.b16 %v1226
      %v1233 = vunpack.c.h.b16 %v1227
      %v1234 = vpack.c.b16 %v1231, %v1230
      %v1235 = vpack.c.b16 %v1233, %v1232
      %1236 = vrot.lane.b32.xlu0 %v1234, 111
      %v1237 = vpop.permute.xlu0 %1236
      %1238 = vrot.lane.b32.xlu0 %v1235, 111
      %v1239 = vpop.permute.xlu0 %1238
      %v1240 = vrot.slane %v1237, 4
      %v1241 = vrot.slane %v1239, 4
      %v1242 = vsel %vm556, %v1237, %v1240
      %v1243 = vsel %vm556, %v1239, %v1241
      %1246 = vst.msk [vmem:[%s1123 + $0x40] sm:$0xff] %vm496, %v1242
      %1247 = vst.msk [vmem:[%s1123 + $0x48] sm:$0xff] %vm496, %v1243
      %v1248 = vld [vmem:[%s461 + $0x10] sm:$0xff]
      %v1249 = vld [vmem:[%s461 + $0x18] sm:$0xff]
      %v1250 = vld [vmem:[%s461] sm:$0xff]
      %v1251 = vld [vmem:[%s461 + $0x8] sm:$0xff]
      %1254 = vrot.lane.b32.xlu0 %v1250, 127
      %v1255 = vpop.permute.xlu0 %1254
      %1256 = vrot.lane.b32.xlu0 %v1251, 127
      %v1257 = vpop.permute.xlu0 %1256
      %v1258 = vsel %vm573, %v1255, %v1257
      %v1261 = vpack.c.bf16 %v1258, %v1248
      %v1262 = vpack.c.bf16 %v1257, %v1249
      %v1265 = vunpack.c.l.b16 %v1261
      %v1266 = vunpack.c.l.b16 %v1262
      %v1267 = vunpack.c.h.b16 %v1261
      %v1268 = vunpack.c.h.b16 %v1262
      %v1269 = vpack.c.b16 %v1266, %v1265
      %v1270 = vpack.c.b16 %v1268, %v1267
      %1271 = vrot.lane.b32.xlu0 %v1269, 97
      %v1272 = vpop.permute.xlu0 %1271
      %1273 = vrot.lane.b32.xlu0 %v1270, 97
      %v1274 = vpop.permute.xlu0 %1273
      %v1275 = vrot.slane %v1272, 4
      %v1276 = vrot.slane %v1274, 4
      %v1277 = vsel %vm654, %v1272, %v1275
      %v1278 = vsel %vm654, %v1274, %v1276
      %1281 = vst.msk [vmem:[%s1123 + $0x50] sm:$0xff] %vm496, %v1277
      %1282 = vst.msk [vmem:[%s1123 + $0x58] sm:$0xff] %vm496, %v1278
      %v1283 = vld [vmem:[%s461 + $0x10] sm:$0xff]
      %v1284 = vld [vmem:[%s461 + $0x18] sm:$0xff]
      %v1285 = vld [vmem:[%s461] sm:$0xff]
      %v1286 = vld [vmem:[%s461 + $0x8] sm:$0xff]
      %1289 = vrot.lane.b32.xlu0 %v1285, 127
      %v1290 = vpop.permute.xlu0 %1289
      %1291 = vrot.lane.b32.xlu0 %v1286, 127
      %v1292 = vpop.permute.xlu0 %1291
      %v1293 = vsel %vm573, %v1290, %v1292
      %v1296 = vpack.c.bf16 %v1293, %v1283
      %v1297 = vpack.c.bf16 %v1292, %v1284
      %v1300 = vunpack.c.l.b16 %v1296
      %v1301 = vunpack.c.l.b16 %v1297
      %v1302 = vunpack.c.h.b16 %v1296
      %v1303 = vunpack.c.h.b16 %v1297
      %v1304 = vpack.c.b16 %v1301, %v1300
      %v1305 = vpack.c.b16 %v1303, %v1302
      %1306 = vrot.lane.b32.xlu0 %v1304, 96
      %v1307 = vpop.permute.xlu0 %1306
      %1308 = vrot.lane.b32.xlu0 %v1305, 96
      %v1309 = vpop.permute.xlu0 %1308
      %v1310 = vrot.slane %v1307, 4
      %v1311 = vrot.slane %v1309, 4
      %v1312 = vsel %vm681, %v1307, %v1310
      %v1313 = vsel %vm681, %v1309, %v1311
      %1316 = vst.msk [vmem:[%s1123 + $0x60] sm:$0xff] %vm496, %v1312
      %1317 = vst.msk [vmem:[%s1123 + $0x68] sm:$0xff] %vm496, %v1313
      %v1318 = vld [vmem:[%s461 + $0x10] sm:$0xff]
      %v1319 = vld [vmem:[%s461 + $0x18] sm:$0xff]
      %v1320 = vld [vmem:[%s461 + $0x30] sm:$0xff]
      %v1321 = vld [vmem:[%s461 + $0x38] sm:$0xff]
      %1324 = vrot.lane.b32.xlu0 %v1320, 2
      %v1325 = vpop.permute.xlu0 %1324
      %1326 = vrot.lane.b32.xlu0 %v1321, 2
      %v1327 = vpop.permute.xlu0 %1326
      %v1328 = vsel %vm536, %v1325, %v1327
      %v1331 = vpack.c.bf16 %v1325, %v1318
      %v1332 = vpack.c.bf16 %v1328, %v1319
      %v1335 = vunpack.c.l.b16 %v1331
      %v1336 = vunpack.c.l.b16 %v1332
      %v1337 = vunpack.c.h.b16 %v1331
      %v1338 = vunpack.c.h.b16 %v1332
      %v1339 = vpack.c.b16 %v1336, %v1335
      %v1340 = vpack.c.b16 %v1338, %v1337
      %1341 = vrot.lane.b32.xlu0 %v1339, 95
      %v1342 = vpop.permute.xlu0 %1341
      %1343 = vrot.lane.b32.xlu0 %v1340, 95
      %v1344 = vpop.permute.xlu0 %1343
      %v1345 = vrot.slane %v1342, 4
      %v1346 = vrot.slane %v1344, 4
      %v1347 = vsel %vm717, %v1342, %v1345
      %v1348 = vsel %vm717, %v1344, %v1346
      %1351 = vst.msk [vmem:[%s1123 + $0x70] sm:$0xff] %vm496, %v1347
      %1352 = vst.msk [vmem:[%s1123 + $0x78] sm:$0xff] %vm496, %v1348
      %v1353 = vld [vmem:[%s461 + $0x20] sm:$0xff]
      %v1354 = vld [vmem:[%s461 + $0x28] sm:$0xff]
      %v1355 = vld [vmem:[%s461 + $0x30] sm:$0xff]
      %v1356 = vld [vmem:[%s461 + $0x38] sm:$0xff]
      %v1357 = vpack.c.bf16 %v1355, %v1353
      %v1358 = vpack.c.bf16 %v1356, %v1354
      %v1361 = vunpack.c.l.b16 %v1357
      %v1362 = vunpack.c.l.b16 %v1358
      %v1363 = vunpack.c.h.b16 %v1357
      %v1364 = vunpack.c.h.b16 %v1358
      %v1365 = vpack.c.b16 %v1362, %v1361
      %v1366 = vpack.c.b16 %v1364, %v1363
      %1367 = vrot.lane.b32.xlu0 %v1365, 96
      %v1368 = vpop.permute.xlu0 %1367
      %1369 = vrot.lane.b32.xlu0 %v1366, 96
      %v1370 = vpop.permute.xlu0 %1369
      %v1371 = vrot.slane %v1368, 4
      %v1372 = vrot.slane %v1370, 4
      %v1373 = vsel %vm681, %v1368, %v1371
      %v1374 = vsel %vm681, %v1370, %v1372
      %1377 = vst.msk [vmem:[%s1123 + $0x80] sm:$0xff] %vm496, %v1373
      %1378 = vst.msk [vmem:[%s1123 + $0x88] sm:$0xff] %vm496, %v1374
      %v1379 = vld [vmem:[%s461 + $0x20] sm:$0xff]
      %v1380 = vld [vmem:[%s461 + $0x28] sm:$0xff]
      %v1381 = vld [vmem:[%s461 + $0x30] sm:$0xff]
      %v1382 = vld [vmem:[%s461 + $0x38] sm:$0xff]
      %v1383 = vpack.c.bf16 %v1381, %v1379
      %v1384 = vpack.c.bf16 %v1382, %v1380
      %v1387 = vunpack.c.l.b16 %v1383
      %v1388 = vunpack.c.l.b16 %v1384
      %v1389 = vunpack.c.h.b16 %v1383
      %v1390 = vunpack.c.h.b16 %v1384
      %v1391 = vpack.c.b16 %v1388, %v1387
      %v1392 = vpack.c.b16 %v1390, %v1389
      %1393 = vrot.lane.b32.xlu0 %v1391, 95
      %v1394 = vpop.permute.xlu0 %1393
      %1395 = vrot.lane.b32.xlu0 %v1392, 95
      %v1396 = vpop.permute.xlu0 %1395
      %v1397 = vrot.slane %v1394, 4
      %v1398 = vrot.slane %v1396, 4
      %v1399 = vsel %vm717, %v1394, %v1397
      %v1400 = vsel %vm717, %v1396, %v1398
      %1403 = vst.msk [vmem:[%s1123 + $0x90] sm:$0xff] %vm496, %v1399
      %1404 = vst.msk [vmem:[%s1123 + $0x98] sm:$0xff] %vm496, %v1400
      %v1405 = vld [vmem:[%s461 + $0x10] sm:$0xff]
      %v1406 = vld [vmem:[%s461 + $0x18] sm:$0xff]
      %v1407 = vld [vmem:[%s461] sm:$0xff]
      %v1408 = vld [vmem:[%s461 + $0x8] sm:$0xff]
      %1411 = vrot.lane.b32.xlu0 %v1407, 127
      %v1412 = vpop.permute.xlu0 %1411
      %1413 = vrot.lane.b32.xlu0 %v1408, 127
      %v1414 = vpop.permute.xlu0 %1413
      %v1415 = vsel %vm573, %v1412, %v1414
      %v1418 = vpack.c.bf16 %v1415, %v1405
      %v1419 = vpack.c.bf16 %v1414, %v1406
      %v1422 = vunpack.c.l.b16 %v1418
      %v1423 = vunpack.c.l.b16 %v1419
      %v1424 = vunpack.c.h.b16 %v1418
      %v1425 = vunpack.c.h.b16 %v1419
      %v1426 = vpack.c.b16 %v1423, %v1422
      %v1427 = vpack.c.b16 %v1425, %v1424
      %1428 = vrot.lane.b32.xlu0 %v1426, 81
      %v1429 = vpop.permute.xlu0 %1428
      %1430 = vrot.lane.b32.xlu0 %v1427, 81
      %v1431 = vpop.permute.xlu0 %1430
      %v1432 = vrot.slane %v1429, 4
      %v1433 = vrot.slane %v1431, 4
      %v1434 = vsel %vm814, %v1429, %v1432
      %v1435 = vsel %vm814, %v1431, %v1433
      %1438 = vst.msk [vmem:[%s1123 + $0xa0] sm:$0xff] %vm496, %v1434
      %1439 = vst.msk [vmem:[%s1123 + $0xa8] sm:$0xff] %vm496, %v1435
      %v1440 = vld [vmem:[%s461 + $0x10] sm:$0xff]
      %v1441 = vld [vmem:[%s461 + $0x18] sm:$0xff]
      %v1442 = vld [vmem:[%s461] sm:$0xff]
      %v1443 = vld [vmem:[%s461 + $0x8] sm:$0xff]
      %1446 = vrot.lane.b32.xlu0 %v1442, 127
      %v1447 = vpop.permute.xlu0 %1446
      %1448 = vrot.lane.b32.xlu0 %v1443, 127
      %v1449 = vpop.permute.xlu0 %1448
      %v1450 = vsel %vm573, %v1447, %v1449
      %v1453 = vpack.c.bf16 %v1450, %v1440
      %v1454 = vpack.c.bf16 %v1449, %v1441
      %v1457 = vunpack.c.l.b16 %v1453
      %v1458 = vunpack.c.l.b16 %v1454
      %v1459 = vunpack.c.h.b16 %v1453
      %v1460 = vunpack.c.h.b16 %v1454
      %v1461 = vpack.c.b16 %v1458, %v1457
      %v1462 = vpack.c.b16 %v1460, %v1459
      %1463 = vrot.lane.b32.xlu0 %v1461, 80
      %v1464 = vpop.permute.xlu0 %1463
      %1465 = vrot.lane.b32.xlu0 %v1462, 80
      %v1466 = vpop.permute.xlu0 %1465
      %v1467 = vrot.slane %v1464, 4
      %v1468 = vrot.slane %v1466, 4
      %v1469 = vsel %vm841, %v1464, %v1467
      %v1470 = vsel %vm841, %v1466, %v1468
      %1473 = vst.msk [vmem:[%s1123 + $0xb0] sm:$0xff] %vm496, %v1469
      %1474 = vst.msk [vmem:[%s1123 + $0xb8] sm:$0xff] %vm496, %v1470
      %v1475 = vld [vmem:[%s461 + $0x10] sm:$0xff]
      %v1476 = vld [vmem:[%s461 + $0x18] sm:$0xff]
      %v1477 = vpack.c.bf16 %v1475, %v1475
      %v1478 = vpack.c.bf16 %v1476, %v1476
      %v1481 = vunpack.c.l.b16 %v1477
      %v1482 = vunpack.c.l.b16 %v1478
      %v1483 = vpack.c.b16 %v1482, %v1481
      %1484 = vrot.lane.b32.xlu0 %v1483, 79
      %v1485 = vpop.permute.xlu0 %1484
      %v1486 = vrot.slane %v1485, 4
      %v1487 = vsel %vm860, %v1485, %v1486
      %1489 = vst.msk [vmem:[%s1123 + $0xc0] sm:$0xff] %vm496, %v1487
      %v1490 = vld [vmem:[%s1] sm:$0xff]
      %v1491 = vld [vmem:[%s1123] sm:$0xff]
      %v1492 = vld [vmem:[%s1123 + $0x8] sm:$0xff]
      %v1493 = vld [vmem:[%s1123 + $0x10] sm:$0xff]
      %v1494 = vld [vmem:[%s1123 + $0x18] sm:$0xff]
      %v1495 = vld [vmem:[%s1123 + $0x20] sm:$0xff]
      %v1496 = vld [vmem:[%s1123 + $0x28] sm:$0xff]
      %v1497 = vld [vmem:[%s1123 + $0x30] sm:$0xff]
      %v1498 = vld [vmem:[%s1123 + $0x38] sm:$0xff]
      %v1499 = vld [vmem:[%s1123 + $0x40] sm:$0xff]
      %v1500 = vld [vmem:[%s1123 + $0x48] sm:$0xff]
      %v1501 = vld [vmem:[%s1123 + $0x50] sm:$0xff]
      %v1502 = vld [vmem:[%s1123 + $0x58] sm:$0xff]
      %v1503 = vld [vmem:[%s1123 + $0x60] sm:$0xff]
      %v1504 = vld [vmem:[%s1123 + $0x68] sm:$0xff]
      %v1505 = vld [vmem:[%s1123 + $0x70] sm:$0xff]
      %v1506 = vld [vmem:[%s1123 + $0x78] sm:$0xff]
      %v1507 = vld [vmem:[%s1123 + $0x80] sm:$0xff]
      %v1508 = vld [vmem:[%s1123 + $0x88] sm:$0xff]
      %v1509 = vld [vmem:[%s1123 + $0x90] sm:$0xff]
      %v1510 = vld [vmem:[%s1123 + $0x98] sm:$0xff]
      %v1511 = vld [vmem:[%s1123 + $0xa0] sm:$0xff]
      %v1512 = vld [vmem:[%s1123 + $0xa8] sm:$0xff]
      %v1513 = vld [vmem:[%s1123 + $0xb0] sm:$0xff]
      %v1514 = vld [vmem:[%s1123 + $0xb8] sm:$0xff]
      %v1515 = vld [vmem:[%s1123 + $0xc0] sm:$0xff]
      %v1517 = vunpack.c.l.b16 %v1490
      %v1518 = vunpack.c.h.b16 %v1490
      %v1519 = vpack.c.b16 %v1517, %v1517
      %v1520 = vpack.c.b16 %v1518, %v1518
      %v1547 = vunpack.c.l.b16 %v1491
      %v1548 = vunpack.c.h.b16 %v1491
      %v1549 = vunpack.c.l.b16 %v1492
      %v1550 = vunpack.c.h.b16 %v1492
      %v1551 = vunpack.c.l.b16 %v1493
      %v1552 = vunpack.c.h.b16 %v1493
      %v1553 = vunpack.c.l.b16 %v1494
      %v1554 = vunpack.c.h.b16 %v1494
      %v1555 = vunpack.c.l.b16 %v1495
      %v1556 = vunpack.c.h.b16 %v1495
      %v1557 = vunpack.c.l.b16 %v1496
      %v1558 = vunpack.c.h.b16 %v1496
      %v1559 = vunpack.c.l.b16 %v1497
      %v1560 = vunpack.c.h.b16 %v1497
      %v1561 = vunpack.c.l.b16 %v1498
      %v1562 = vunpack.c.h.b16 %v1498
      %v1563 = vunpack.c.l.b16 %v1499
      %v1564 = vunpack.c.h.b16 %v1499
      %v1565 = vunpack.c.l.b16 %v1500
      %v1566 = vunpack.c.h.b16 %v1500
      %v1567 = vunpack.c.l.b16 %v1501
      %v1568 = vunpack.c.h.b16 %v1501
      %v1569 = vunpack.c.l.b16 %v1502
      %v1570 = vunpack.c.h.b16 %v1502
      %v1571 = vunpack.c.l.b16 %v1503
      %v1572 = vunpack.c.h.b16 %v1503
      %v1573 = vunpack.c.l.b16 %v1504
      %v1574 = vunpack.c.h.b16 %v1504
      %v1575 = vunpack.c.l.b16 %v1505
      %v1576 = vunpack.c.h.b16 %v1505
      %v1577 = vunpack.c.l.b16 %v1506
      %v1578 = vunpack.c.h.b16 %v1506
      %v1579 = vunpack.c.l.b16 %v1507
      %v1580 = vunpack.c.h.b16 %v1507
      %v1581 = vunpack.c.l.b16 %v1508
      %v1582 = vunpack.c.h.b16 %v1508
      %v1583 = vunpack.c.l.b16 %v1509
      %v1584 = vunpack.c.h.b16 %v1509
      %v1585 = vunpack.c.l.b16 %v1510
      %v1586 = vunpack.c.h.b16 %v1510
      %v1587 = vunpack.c.l.b16 %v1511
      %v1588 = vunpack.c.h.b16 %v1511
      %v1589 = vunpack.c.l.b16 %v1512
      %v1590 = vunpack.c.h.b16 %v1512
      %v1591 = vunpack.c.l.b16 %v1513
      %v1592 = vunpack.c.h.b16 %v1513
      %v1593 = vunpack.c.l.b16 %v1514
      %v1594 = vunpack.c.h.b16 %v1514
      %v1595 = vunpack.c.l.b16 %v1515
      %v1596 = vunpack.c.h.b16 %v1515
      %v1597 = vpack.c.b16 %v1549, %v1547
      %v1598 = vpack.c.b16 %v1550, %v1548
      %v1599 = vpack.c.b16 %v1553, %v1551
      %v1600 = vpack.c.b16 %v1554, %v1552
      %v1601 = vpack.c.b16 %v1557, %v1555
      %v1602 = vpack.c.b16 %v1558, %v1556
      %v1603 = vpack.c.b16 %v1561, %v1559
      %v1604 = vpack.c.b16 %v1562, %v1560
      %v1605 = vpack.c.b16 %v1565, %v1563
      %v1606 = vpack.c.b16 %v1566, %v1564
      %v1607 = vpack.c.b16 %v1569, %v1567
      %v1608 = vpack.c.b16 %v1570, %v1568
      %v1609 = vpack.c.b16 %v1573, %v1571
      %v1610 = vpack.c.b16 %v1574, %v1572
      %v1611 = vpack.c.b16 %v1577, %v1575
      %v1612 = vpack.c.b16 %v1578, %v1576
      %v1613 = vpack.c.b16 %v1581, %v1579
      %v1614 = vpack.c.b16 %v1582, %v1580
      %v1615 = vpack.c.b16 %v1585, %v1583
      %v1616 = vpack.c.b16 %v1586, %v1584
      %v1617 = vpack.c.b16 %v1589, %v1587
      %v1618 = vpack.c.b16 %v1590, %v1588
      %v1619 = vpack.c.b16 %v1593, %v1591
      %v1620 = vpack.c.b16 %v1594, %v1592
      %v1621 = vpack.c.b16 %v1595, %v1595
      %v1622 = vpack.c.b16 %v1596, %v1596
      %v1648 = vsel %vm1021, %v1520, 0
      %v1651 = vsel %vm494, %v1621, 0
      %v1654 = vsel %vm494, %v1622, 0
      %1656 = vmatprep.subr.bf16.mxu0 %v1598
      %1657 = vmatpush1.bf16.msra.mxu0 %v1597
      %1658 = vmatprep.subr.bf16.mxu0 %v1600
      %1659 = vmatpush1.bf16.msra.mxu0 %v1599
      %1660 = vmatprep.subr.bf16.mxu0 %v1602
      %1661 = vmatpush1.bf16.msra.mxu0 %v1601
      %1662 = vmatprep.subr.bf16.mxu0 %v1604
      %1663 = vmatpush1.bf16.msra.mxu0 %v1603
      %1664 = vmatprep.subr.bf16.mxu0 %v1606
      %1665 = vmatpush1.bf16.msra.mxu0 %v1605
      %1666 = vmatprep.subr.bf16.mxu0 %v1608
      %1667 = vmatpush1.bf16.msra.mxu0 %v1607
      %1668 = vmatprep.subr.bf16.mxu0 %v1610
      %1669 = vmatpush1.bf16.msra.mxu0 %v1609
      %1670 = vmatprep.subr.bf16.mxu0 %v1612
      %1671 = vmatpush1.bf16.msra.mxu0 %v1611
      %1672 = vmatprep.subr.bf16.mxu0 %v1614
      %1673 = vmatpush1.bf16.msra.mxu0 %v1613
      %1674 = vmatprep.subr.bf16.mxu0 %v1616
      %1675 = vmatpush1.bf16.msra.mxu0 %v1615
      %1676 = vmatprep.subr.bf16.mxu0 %v1618
      %1677 = vmatpush1.bf16.msra.mxu0 %v1617
      %1678 = vmatprep.subr.bf16.mxu0 %v1620
      %1679 = vmatpush1.bf16.msra.mxu0 %v1619
      %1680 = vmatprep.subr.bf16.mxu0 %v1654
      %1681 = vmatpush1.bf16.msra.mxu0 %v1651
      %1682 = vmatprep.subr.bf16.mxu0 0
      %1683 = vmatpush1.bf16.msra.mxu0 0
      %1684 = vmatprep.subr.bf16.mxu0 0
      %1685 = vmatpush1.bf16.msra.mxu0 0
      %1686 = vmatprep.subr.bf16.mxu0 0
      %1687 = vmatpush1.bf16.msra.mxu0 0
      %1688 = vmatprep.mubr.bf16.mxu0 %v1648
      %1689 = vmatmul.mubr.bf16.gmra.mrb[0].mxu0 %v1519
      %v1690 = vpop.f32.mrb[0].mxu0
      %v1691 = vadd.f32 0.0, %v1690
      %v1692 = vpop.f32.mrb[0].mxu0
      %v1693 = vadd.f32 0.0, %v1692
      %v1694 = vpop.f32.mrb[0].mxu0
      %v1695 = vpop.f32.mrb[0].mxu0
      %1696 = vdwg.mxu0
      %v1697 = vld [vmem:[%s2] sm:$0xff]
      %1699 = vset.pattern.permute.xlu0 0
      %1700 = vperm.xlu0 %1699, %v1697
      %v1701 = vpop.permute.xlu0 %1700
      %v1703 = vmul.f32 %v1691, %v1701
      %v1704 = vmul.f32 %v1693, %v1701
      %v1705 = vld [vmem:[%s3] sm:$0xff]
      %1707 = vset.pattern.permute.xlu0 0
      %1708 = vperm.xlu0 %1707, %v1705
      %v1709 = vpop.permute.xlu0 %1708
      %v1711 = vadd.f32 %v1703, %v1709
      %v1712 = vadd.f32 %v1704, %v1709
      %v1713 = vmax.f32 %v1711, 0.0
      %v1714 = vmax.f32 %v1712, 0.0
      %v1715 = vmax.f32 %v1088, %v1713
      %v1716 = vmax.f32 %v1089, %v1714
      %v1717 = vld [vmem:[%s461 + $0x20] sm:$0xff]
      %v1718 = vld [vmem:[%s461 + $0x28] sm:$0xff]
      %v1719 = vld [vmem:[%s461 + $0x30] sm:$0xff]
      %v1720 = vld [vmem:[%s461 + $0x38] sm:$0xff]
      %v1721 = vpack.c.bf16 %v1719, %v1717
      %v1722 = vpack.c.bf16 %v1720, %v1718
      %v1725 = vunpack.c.l.b16 %v1721
      %v1726 = vunpack.c.l.b16 %v1722
      %v1727 = vunpack.c.h.b16 %v1721
      %v1728 = vunpack.c.h.b16 %v1722
      %v1729 = vpack.c.b16 %v1726, %v1725
      %v1730 = vpack.c.b16 %v1728, %v1727
      %1731 = vrot.lane.b32.xlu0 %v1729, 113
      %v1732 = vpop.permute.xlu0 %1731
      %1733 = vrot.lane.b32.xlu0 %v1730, 113
      %v1734 = vpop.permute.xlu0 %1733
      %v1735 = vrot.slane %v1732, 4
      %v1736 = vrot.slane %v1734, 4
      %v1737 = vsel %vm489, %v1732, %v1735
      %v1738 = vsel %vm489, %v1734, %v1736
      %s1741 = scalar_lea.vmem [#allocation2], 400
      %1742 = vst.msk [vmem:[%s1741] sm:$0xff] %vm496, %v1737
      %1743 = vst.msk [vmem:[%s1741 + $0x8] sm:$0xff] %vm496, %v1738
      %v1744 = vld [vmem:[%s461 + $0x20] sm:$0xff]
      %v1745 = vld [vmem:[%s461 + $0x28] sm:$0xff]
      %v1746 = vld [vmem:[%s461 + $0x30] sm:$0xff]
      %v1747 = vld [vmem:[%s461 + $0x38] sm:$0xff]
      %v1748 = vpack.c.bf16 %v1746, %v1744
      %v1749 = vpack.c.bf16 %v1747, %v1745
      %v1752 = vunpack.c.l.b16 %v1748
      %v1753 = vunpack.c.l.b16 %v1749
      %v1754 = vunpack.c.h.b16 %v1748
      %v1755 = vunpack.c.h.b16 %v1749
      %v1756 = vpack.c.b16 %v1753, %v1752
      %v1757 = vpack.c.b16 %v1755, %v1754
      %1758 = vrot.lane.b32.xlu0 %v1756, 112
      %v1759 = vpop.permute.xlu0 %1758
      %1760 = vrot.lane.b32.xlu0 %v1757, 112
      %v1761 = vpop.permute.xlu0 %1760
      %v1762 = vrot.slane %v1759, 4
      %v1763 = vrot.slane %v1761, 4
      %v1764 = vsel %vm519, %v1759, %v1762
      %v1765 = vsel %vm519, %v1761, %v1763
      %1768 = vst.msk [vmem:[%s1741 + $0x10] sm:$0xff] %vm496, %v1764
      %1769 = vst.msk [vmem:[%s1741 + $0x18] sm:$0xff] %vm496, %v1765
      %v1770 = vld [vmem:[%s461 + $0x20] sm:$0xff]
      %v1771 = vld [vmem:[%s461 + $0x28] sm:$0xff]
      %v1772 = vld [vmem:[%s461] sm:$0xff]
      %v1773 = vld [vmem:[%s461 + $0x8] sm:$0xff]
      %1776 = vrot.lane.b32.xlu0 %v1772, 114
      %v1777 = vpop.permute.xlu0 %1776
      %1778 = vrot.lane.b32.xlu0 %v1773, 114
      %v1779 = vpop.permute.xlu0 %1778
      %vm1780 = vcmask 932864
      %v1781 = vsel %vm1780, %v1777, %v1779
      %v1784 = vpack.c.bf16 %v1781, %v1770
      %v1785 = vpack.c.bf16 %v1779, %v1771
      %v1788 = vunpack.c.l.b16 %v1784
      %v1789 = vunpack.c.l.b16 %v1785
      %v1790 = vunpack.c.h.b16 %v1784
      %v1791 = vunpack.c.h.b16 %v1785
      %v1792 = vpack.c.b16 %v1789, %v1788
      %v1793 = vpack.c.b16 %v1791, %v1790
      %1794 = vrot.lane.b32.xlu0 %v1792, 111
      %v1795 = vpop.permute.xlu0 %1794
      %1796 = vrot.lane.b32.xlu0 %v1793, 111
      %v1797 = vpop.permute.xlu0 %1796
      %v1798 = vrot.slane %v1795, 4
      %v1799 = vrot.slane %v1797, 4
      %v1800 = vsel %vm556, %v1795, %v1798
      %v1801 = vsel %vm556, %v1797, %v1799
      %1804 = vst.msk [vmem:[%s1741 + $0x20] sm:$0xff] %vm496, %v1800
      %1805 = vst.msk [vmem:[%s1741 + $0x28] sm:$0xff] %vm496, %v1801
      %v1806 = vld [vmem:[%s461 + $0x10] sm:$0xff]
      %v1807 = vld [vmem:[%s461 + $0x18] sm:$0xff]
      %v1808 = vld [vmem:[%s461] sm:$0xff]
      %v1809 = vld [vmem:[%s461 + $0x8] sm:$0xff]
      %1812 = vrot.lane.b32.xlu0 %v1808, 127
      %v1813 = vpop.permute.xlu0 %1812
      %1814 = vrot.lane.b32.xlu0 %v1809, 127
      %v1815 = vpop.permute.xlu0 %1814
      %v1816 = vsel %vm573, %v1813, %v1815
      %v1819 = vpack.c.bf16 %v1816, %v1806
      %v1820 = vpack.c.bf16 %v1815, %v1807
      %v1823 = vunpack.c.l.b16 %v1819
      %v1824 = vunpack.c.l.b16 %v1820
      %v1825 = vunpack.c.h.b16 %v1819
      %v1826 = vunpack.c.h.b16 %v1820
      %v1827 = vpack.c.b16 %v1824, %v1823
      %v1828 = vpack.c.b16 %v1826, %v1825
      %1829 = vrot.lane.b32.xlu0 %v1827, 97
      %v1830 = vpop.permute.xlu0 %1829
      %1831 = vrot.lane.b32.xlu0 %v1828, 97
      %v1832 = vpop.permute.xlu0 %1831
      %v1833 = vrot.slane %v1830, 4
      %v1834 = vrot.slane %v1832, 4
      %v1835 = vsel %vm654, %v1830, %v1833
      %v1836 = vsel %vm654, %v1832, %v1834
      %1839 = vst.msk [vmem:[%s1741 + $0x30] sm:$0xff] %vm496, %v1835
      %1840 = vst.msk [vmem:[%s1741 + $0x38] sm:$0xff] %vm496, %v1836
      %v1841 = vld [vmem:[%s461 + $0x10] sm:$0xff]
      %v1842 = vld [vmem:[%s461 + $0x18] sm:$0xff]
      %v1843 = vld [vmem:[%s461] sm:$0xff]
      %v1844 = vld [vmem:[%s461 + $0x8] sm:$0xff]
      %1847 = vrot.lane.b32.xlu0 %v1843, 127
      %v1848 = vpop.permute.xlu0 %1847
      %1849 = vrot.lane.b32.xlu0 %v1844, 127
      %v1850 = vpop.permute.xlu0 %1849
      %v1851 = vsel %vm573, %v1848, %v1850
      %v1854 = vpack.c.bf16 %v1851, %v1841
      %v1855 = vpack.c.bf16 %v1850, %v1842
      %v1858 = vunpack.c.l.b16 %v1854
      %v1859 = vunpack.c.l.b16 %v1855
      %v1860 = vunpack.c.h.b16 %v1854
      %v1861 = vunpack.c.h.b16 %v1855
      %v1862 = vpack.c.b16 %v1859, %v1858
      %v1863 = vpack.c.b16 %v1861, %v1860
      %1864 = vrot.lane.b32.xlu0 %v1862, 96
      %v1865 = vpop.permute.xlu0 %1864
      %1866 = vrot.lane.b32.xlu0 %v1863, 96
      %v1867 = vpop.permute.xlu0 %1866
      %v1868 = vrot.slane %v1865, 4
      %v1869 = vrot.slane %v1867, 4
      %v1870 = vsel %vm681, %v1865, %v1868
      %v1871 = vsel %vm681, %v1867, %v1869
      %1874 = vst.msk [vmem:[%s1741 + $0x40] sm:$0xff] %vm496, %v1870
      %1875 = vst.msk [vmem:[%s1741 + $0x48] sm:$0xff] %vm496, %v1871
      %v1876 = vld [vmem:[%s461 + $0x20] sm:$0xff]
      %v1877 = vld [vmem:[%s461 + $0x28] sm:$0xff]
      %v1878 = vld [vmem:[%s461 + $0x30] sm:$0xff]
      %v1879 = vld [vmem:[%s461 + $0x38] sm:$0xff]
      %v1880 = vpack.c.bf16 %v1878, %v1876
      %v1881 = vpack.c.bf16 %v1879, %v1877
      %v1884 = vunpack.c.l.b16 %v1880
      %v1885 = vunpack.c.l.b16 %v1881
      %v1886 = vunpack.c.h.b16 %v1880
      %v1887 = vunpack.c.h.b16 %v1881
      %v1888 = vpack.c.b16 %v1885, %v1884
      %v1889 = vpack.c.b16 %v1887, %v1886
      %1890 = vrot.lane.b32.xlu0 %v1888, 97
      %v1891 = vpop.permute.xlu0 %1890
      %1892 = vrot.lane.b32.xlu0 %v1889, 97
      %v1893 = vpop.permute.xlu0 %1892
      %v1894 = vrot.slane %v1891, 4
      %v1895 = vrot.slane %v1893, 4
      %v1896 = vsel %vm654, %v1891, %v1894
      %v1897 = vsel %vm654, %v1893, %v1895
      %1900 = vst.msk [vmem:[%s1741 + $0x50] sm:$0xff] %vm496, %v1896
      %1901 = vst.msk [vmem:[%s1741 + $0x58] sm:$0xff] %vm496, %v1897
      %v1902 = vld [vmem:[%s461 + $0x20] sm:$0xff]
      %v1903 = vld [vmem:[%s461 + $0x28] sm:$0xff]
      %v1904 = vld [vmem:[%s461 + $0x30] sm:$0xff]
      %v1905 = vld [vmem:[%s461 + $0x38] sm:$0xff]
      %v1906 = vpack.c.bf16 %v1904, %v1902
      %v1907 = vpack.c.bf16 %v1905, %v1903
      %v1910 = vunpack.c.l.b16 %v1906
      %v1911 = vunpack.c.l.b16 %v1907
      %v1912 = vunpack.c.h.b16 %v1906
      %v1913 = vunpack.c.h.b16 %v1907
      %v1914 = vpack.c.b16 %v1911, %v1910
      %v1915 = vpack.c.b16 %v1913, %v1912
      %1916 = vrot.lane.b32.xlu0 %v1914, 96
      %v1917 = vpop.permute.xlu0 %1916
      %1918 = vrot.lane.b32.xlu0 %v1915, 96
      %v1919 = vpop.permute.xlu0 %1918
      %v1920 = vrot.slane %v1917, 4
      %v1921 = vrot.slane %v1919, 4
      %v1922 = vsel %vm681, %v1917, %v1920
      %v1923 = vsel %vm681, %v1919, %v1921
      %1926 = vst.msk [vmem:[%s1741 + $0x60] sm:$0xff] %vm496, %v1922
      %1927 = vst.msk [vmem:[%s1741 + $0x68] sm:$0xff] %vm496, %v1923
      %v1928 = vld [vmem:[%s461 + $0x20] sm:$0xff]
      %v1929 = vld [vmem:[%s461 + $0x28] sm:$0xff]
      %v1930 = vld [vmem:[%s461] sm:$0xff]
      %v1931 = vld [vmem:[%s461 + $0x8] sm:$0xff]
      %1934 = vrot.lane.b32.xlu0 %v1930, 114
      %v1935 = vpop.permute.xlu0 %1934
      %1936 = vrot.lane.b32.xlu0 %v1931, 114
      %v1937 = vpop.permute.xlu0 %1936
      %v1938 = vsel %vm1780, %v1935, %v1937
      %v1941 = vpack.c.bf16 %v1938, %v1928
      %v1942 = vpack.c.bf16 %v1937, %v1929
      %v1945 = vunpack.c.l.b16 %v1941
      %v1946 = vunpack.c.l.b16 %v1942
      %v1947 = vunpack.c.h.b16 %v1941
      %v1948 = vunpack.c.h.b16 %v1942
      %v1949 = vpack.c.b16 %v1946, %v1945
      %v1950 = vpack.c.b16 %v1948, %v1947
      %1951 = vrot.lane.b32.xlu0 %v1949, 95
      %v1952 = vpop.permute.xlu0 %1951
      %1953 = vrot.lane.b32.xlu0 %v1950, 95
      %v1954 = vpop.permute.xlu0 %1953
      %v1955 = vrot.slane %v1952, 4
      %v1956 = vrot.slane %v1954, 4
      %v1957 = vsel %vm717, %v1952, %v1955
      %v1958 = vsel %vm717, %v1954, %v1956
      %1961 = vst.msk [vmem:[%s1741 + $0x70] sm:$0xff] %vm496, %v1957
      %1962 = vst.msk [vmem:[%s1741 + $0x78] sm:$0xff] %vm496, %v1958
      %v1963 = vld [vmem:[%s461 + $0x10] sm:$0xff]
      %v1964 = vld [vmem:[%s461 + $0x18] sm:$0xff]
      %v1965 = vld [vmem:[%s461] sm:$0xff]
      %v1966 = vld [vmem:[%s461 + $0x8] sm:$0xff]
      %1969 = vrot.lane.b32.xlu0 %v1965, 127
      %v1970 = vpop.permute.xlu0 %1969
      %1971 = vrot.lane.b32.xlu0 %v1966, 127
      %v1972 = vpop.permute.xlu0 %1971
      %v1973 = vsel %vm573, %v1970, %v1972
      %v1976 = vpack.c.bf16 %v1973, %v1963
      %v1977 = vpack.c.bf16 %v1972, %v1964
      %v1980 = vunpack.c.l.b16 %v1976
      %v1981 = vunpack.c.l.b16 %v1977
      %v1982 = vunpack.c.h.b16 %v1976
      %v1983 = vunpack.c.h.b16 %v1977
      %v1984 = vpack.c.b16 %v1981, %v1980
      %v1985 = vpack.c.b16 %v1983, %v1982
      %1986 = vrot.lane.b32.xlu0 %v1984, 81
      %v1987 = vpop.permute.xlu0 %1986
      %1988 = vrot.lane.b32.xlu0 %v1985, 81
      %v1989 = vpop.permute.xlu0 %1988
      %v1990 = vrot.slane %v1987, 4
      %v1991 = vrot.slane %v1989, 4
      %v1992 = vsel %vm814, %v1987, %v1990
      %v1993 = vsel %vm814, %v1989, %v1991
      %1996 = vst.msk [vmem:[%s1741 + $0x80] sm:$0xff] %vm496, %v1992
      %1997 = vst.msk [vmem:[%s1741 + $0x88] sm:$0xff] %vm496, %v1993
      %v1998 = vld [vmem:[%s461 + $0x10] sm:$0xff]
      %v1999 = vld [vmem:[%s461 + $0x18] sm:$0xff]
      %v2000 = vld [vmem:[%s461] sm:$0xff]
      %v2001 = vld [vmem:[%s461 + $0x8] sm:$0xff]
      %2004 = vrot.lane.b32.xlu0 %v2000, 127
      %v2005 = vpop.permute.xlu0 %2004
      %2006 = vrot.lane.b32.xlu0 %v2001, 127
      %v2007 = vpop.permute.xlu0 %2006
      %v2008 = vsel %vm573, %v2005, %v2007
      %v2011 = vpack.c.bf16 %v2008, %v1998
      %v2012 = vpack.c.bf16 %v2007, %v1999
      %v2015 = vunpack.c.l.b16 %v2011
      %v2016 = vunpack.c.l.b16 %v2012
      %v2017 = vunpack.c.h.b16 %v2011
      %v2018 = vunpack.c.h.b16 %v2012
      %v2019 = vpack.c.b16 %v2016, %v2015
      %v2020 = vpack.c.b16 %v2018, %v2017
      %2021 = vrot.lane.b32.xlu0 %v2019, 80
      %v2022 = vpop.permute.xlu0 %2021
      %2023 = vrot.lane.b32.xlu0 %v2020, 80
      %v2024 = vpop.permute.xlu0 %2023
      %v2025 = vrot.slane %v2022, 4
      %v2026 = vrot.slane %v2024, 4
      %v2027 = vsel %vm841, %v2022, %v2025
      %v2028 = vsel %vm841, %v2024, %v2026
      %2031 = vst.msk [vmem:[%s1741 + $0x90] sm:$0xff] %vm496, %v2027
      %2032 = vst.msk [vmem:[%s1741 + $0x98] sm:$0xff] %vm496, %v2028
      %v2033 = vld [vmem:[%s461 + $0x20] sm:$0xff]
      %v2034 = vld [vmem:[%s461 + $0x28] sm:$0xff]
      %v2035 = vld [vmem:[%s461 + $0x30] sm:$0xff]
      %v2036 = vld [vmem:[%s461 + $0x38] sm:$0xff]
      %v2037 = vpack.c.bf16 %v2035, %v2033
      %v2038 = vpack.c.bf16 %v2036, %v2034
      %v2041 = vunpack.c.l.b16 %v2037
      %v2042 = vunpack.c.l.b16 %v2038
      %v2043 = vunpack.c.h.b16 %v2037
      %v2044 = vunpack.c.h.b16 %v2038
      %v2045 = vpack.c.b16 %v2042, %v2041
      %v2046 = vpack.c.b16 %v2044, %v2043
      %2047 = vrot.lane.b32.xlu0 %v2045, 81
      %v2048 = vpop.permute.xlu0 %2047
      %2049 = vrot.lane.b32.xlu0 %v2046, 81
      %v2050 = vpop.permute.xlu0 %2049
      %v2051 = vrot.slane %v2048, 4
      %v2052 = vrot.slane %v2050, 4
      %v2053 = vsel %vm814, %v2048, %v2051
      %v2054 = vsel %vm814, %v2050, %v2052
      %2057 = vst.msk [vmem:[%s1741 + $0xa0] sm:$0xff] %vm496, %v2053
      %2058 = vst.msk [vmem:[%s1741 + $0xa8] sm:$0xff] %vm496, %v2054
      %v2059 = vld [vmem:[%s461 + $0x20] sm:$0xff]
      %v2060 = vld [vmem:[%s461 + $0x28] sm:$0xff]
      %v2061 = vld [vmem:[%s461 + $0x30] sm:$0xff]
      %v2062 = vld [vmem:[%s461 + $0x38] sm:$0xff]
      %v2063 = vpack.c.bf16 %v2061, %v2059
      %v2064 = vpack.c.bf16 %v2062, %v2060
      %v2067 = vunpack.c.l.b16 %v2063
      %v2068 = vunpack.c.l.b16 %v2064
      %v2069 = vunpack.c.h.b16 %v2063
      %v2070 = vunpack.c.h.b16 %v2064
      %v2071 = vpack.c.b16 %v2068, %v2067
      %v2072 = vpack.c.b16 %v2070, %v2069
      %2073 = vrot.lane.b32.xlu0 %v2071, 80
      %v2074 = vpop.permute.xlu0 %2073
      %2075 = vrot.lane.b32.xlu0 %v2072, 80
      %v2076 = vpop.permute.xlu0 %2075
      %v2077 = vrot.slane %v2074, 4
      %v2078 = vrot.slane %v2076, 4
      %v2079 = vsel %vm841, %v2074, %v2077
      %v2080 = vsel %vm841, %v2076, %v2078
      %2083 = vst.msk [vmem:[%s1741 + $0xb0] sm:$0xff] %vm496, %v2079
      %2084 = vst.msk [vmem:[%s1741 + $0xb8] sm:$0xff] %vm496, %v2080
      %v2085 = vld [vmem:[%s461 + $0x20] sm:$0xff]
      %v2086 = vld [vmem:[%s461 + $0x28] sm:$0xff]
      %v2087 = vpack.c.bf16 %v2085, %v2085
      %v2088 = vpack.c.bf16 %v2086, %v2086
      %v2091 = vunpack.c.l.b16 %v2087
      %v2092 = vunpack.c.l.b16 %v2088
      %v2093 = vpack.c.b16 %v2092, %v2091
      %2094 = vrot.lane.b32.xlu0 %v2093, 79
      %v2095 = vpop.permute.xlu0 %2094
      %v2096 = vrot.slane %v2095, 4
      %v2097 = vsel %vm860, %v2095, %v2096
      %2099 = vst.msk [vmem:[%s1741 + $0xc0] sm:$0xff] %vm496, %v2097
      %v2100 = vld [vmem:[%s1] sm:$0xff]
      %v2101 = vld [vmem:[%s1741] sm:$0xff]
      %v2102 = vld [vmem:[%s1741 + $0x8] sm:$0xff]
      %v2103 = vld [vmem:[%s1741 + $0x10] sm:$0xff]
      %v2104 = vld [vmem:[%s1741 + $0x18] sm:$0xff]
      %v2105 = vld [vmem:[%s1741 + $0x20] sm:$0xff]
      %v2106 = vld [vmem:[%s1741 + $0x28] sm:$0xff]
      %v2107 = vld [vmem:[%s1741 + $0x30] sm:$0xff]
      %v2108 = vld [vmem:[%s1741 + $0x38] sm:$0xff]
      %v2109 = vld [vmem:[%s1741 + $0x40] sm:$0xff]
      %v2110 = vld [vmem:[%s1741 + $0x48] sm:$0xff]
      %v2111 = vld [vmem:[%s1741 + $0x50] sm:$0xff]
      %v2112 = vld [vmem:[%s1741 + $0x58] sm:$0xff]
      %v2113 = vld [vmem:[%s1741 + $0x60] sm:$0xff]
      %v2114 = vld [vmem:[%s1741 + $0x68] sm:$0xff]
      %v2115 = vld [vmem:[%s1741 + $0x70] sm:$0xff]
      %v2116 = vld [vmem:[%s1741 + $0x78] sm:$0xff]
      %v2117 = vld [vmem:[%s1741 + $0x80] sm:$0xff]
      %v2118 = vld [vmem:[%s1741 + $0x88] sm:$0xff]
      %v2119 = vld [vmem:[%s1741 + $0x90] sm:$0xff]
      %v2120 = vld [vmem:[%s1741 + $0x98] sm:$0xff]
      %v2121 = vld [vmem:[%s1741 + $0xa0] sm:$0xff]
      %v2122 = vld [vmem:[%s1741 + $0xa8] sm:$0xff]
      %v2123 = vld [vmem:[%s1741 + $0xb0] sm:$0xff]
      %v2124 = vld [vmem:[%s1741 + $0xb8] sm:$0xff]
      %v2125 = vld [vmem:[%s1741 + $0xc0] sm:$0xff]
      %v2127 = vunpack.c.l.b16 %v2100
      %v2128 = vunpack.c.h.b16 %v2100
      %v2129 = vpack.c.b16 %v2127, %v2127
      %v2130 = vpack.c.b16 %v2128, %v2128
      %v2157 = vunpack.c.l.b16 %v2101
      %v2158 = vunpack.c.h.b16 %v2101
      %v2159 = vunpack.c.l.b16 %v2102
      %v2160 = vunpack.c.h.b16 %v2102
      %v2161 = vunpack.c.l.b16 %v2103
      %v2162 = vunpack.c.h.b16 %v2103
      %v2163 = vunpack.c.l.b16 %v2104
      %v2164 = vunpack.c.h.b16 %v2104
      %v2165 = vunpack.c.l.b16 %v2105
      %v2166 = vunpack.c.h.b16 %v2105
      %v2167 = vunpack.c.l.b16 %v2106
      %v2168 = vunpack.c.h.b16 %v2106
      %v2169 = vunpack.c.l.b16 %v2107
      %v2170 = vunpack.c.h.b16 %v2107
      %v2171 = vunpack.c.l.b16 %v2108
      %v2172 = vunpack.c.h.b16 %v2108
      %v2173 = vunpack.c.l.b16 %v2109
      %v2174 = vunpack.c.h.b16 %v2109
      %v2175 = vunpack.c.l.b16 %v2110
      %v2176 = vunpack.c.h.b16 %v2110
      %v2177 = vunpack.c.l.b16 %v2111
      %v2178 = vunpack.c.h.b16 %v2111
      %v2179 = vunpack.c.l.b16 %v2112
      %v2180 = vunpack.c.h.b16 %v2112
      %v2181 = vunpack.c.l.b16 %v2113
      %v2182 = vunpack.c.h.b16 %v2113
      %v2183 = vunpack.c.l.b16 %v2114
      %v2184 = vunpack.c.h.b16 %v2114
      %v2185 = vunpack.c.l.b16 %v2115
      %v2186 = vunpack.c.h.b16 %v2115
      %v2187 = vunpack.c.l.b16 %v2116
      %v2188 = vunpack.c.h.b16 %v2116
      %v2189 = vunpack.c.l.b16 %v2117
      %v2190 = vunpack.c.h.b16 %v2117
      %v2191 = vunpack.c.l.b16 %v2118
      %v2192 = vunpack.c.h.b16 %v2118
      %v2193 = vunpack.c.l.b16 %v2119
      %v2194 = vunpack.c.h.b16 %v2119
      %v2195 = vunpack.c.l.b16 %v2120
      %v2196 = vunpack.c.h.b16 %v2120
      %v2197 = vunpack.c.l.b16 %v2121
      %v2198 = vunpack.c.h.b16 %v2121
      %v2199 = vunpack.c.l.b16 %v2122
      %v2200 = vunpack.c.h.b16 %v2122
      %v2201 = vunpack.c.l.b16 %v2123
      %v2202 = vunpack.c.h.b16 %v2123
      %v2203 = vunpack.c.l.b16 %v2124
      %v2204 = vunpack.c.h.b16 %v2124
      %v2205 = vunpack.c.l.b16 %v2125
      %v2206 = vunpack.c.h.b16 %v2125
      %v2207 = vpack.c.b16 %v2159, %v2157
      %v2208 = vpack.c.b16 %v2160, %v2158
      %v2209 = vpack.c.b16 %v2163, %v2161
      %v2210 = vpack.c.b16 %v2164, %v2162
      %v2211 = vpack.c.b16 %v2167, %v2165
      %v2212 = vpack.c.b16 %v2168, %v2166
      %v2213 = vpack.c.b16 %v2171, %v2169
      %v2214 = vpack.c.b16 %v2172, %v2170
      %v2215 = vpack.c.b16 %v2175, %v2173
      %v2216 = vpack.c.b16 %v2176, %v2174
      %v2217 = vpack.c.b16 %v2179, %v2177
      %v2218 = vpack.c.b16 %v2180, %v2178
      %v2219 = vpack.c.b16 %v2183, %v2181
      %v2220 = vpack.c.b16 %v2184, %v2182
      %v2221 = vpack.c.b16 %v2187, %v2185
      %v2222 = vpack.c.b16 %v2188, %v2186
      %v2223 = vpack.c.b16 %v2191, %v2189
      %v2224 = vpack.c.b16 %v2192, %v2190
      %v2225 = vpack.c.b16 %v2195, %v2193
      %v2226 = vpack.c.b16 %v2196, %v2194
      %v2227 = vpack.c.b16 %v2199, %v2197
      %v2228 = vpack.c.b16 %v2200, %v2198
      %v2229 = vpack.c.b16 %v2203, %v2201
      %v2230 = vpack.c.b16 %v2204, %v2202
      %v2231 = vpack.c.b16 %v2205, %v2205
      %v2232 = vpack.c.b16 %v2206, %v2206
      %v2258 = vsel %vm1021, %v2130, 0
      %v2261 = vsel %vm494, %v2231, 0
      %v2264 = vsel %vm494, %v2232, 0
      %2266 = vmatprep.subr.bf16.mxu0 %v2208
      %2267 = vmatpush1.bf16.msra.mxu0 %v2207
      %2268 = vmatprep.subr.bf16.mxu0 %v2210
      %2269 = vmatpush1.bf16.msra.mxu0 %v2209
      %2270 = vmatprep.subr.bf16.mxu0 %v2212
      %2271 = vmatpush1.bf16.msra.mxu0 %v2211
      %2272 = vmatprep.subr.bf16.mxu0 %v2214
      %2273 = vmatpush1.bf16.msra.mxu0 %v2213
      %2274 = vmatprep.subr.bf16.mxu0 %v2216
      %2275 = vmatpush1.bf16.msra.mxu0 %v2215
      %2276 = vmatprep.subr.bf16.mxu0 %v2218
      %2277 = vmatpush1.bf16.msra.mxu0 %v2217
      %2278 = vmatprep.subr.bf16.mxu0 %v2220
      %2279 = vmatpush1.bf16.msra.mxu0 %v2219
      %2280 = vmatprep.subr.bf16.mxu0 %v2222
      %2281 = vmatpush1.bf16.msra.mxu0 %v2221
      %2282 = vmatprep.subr.bf16.mxu0 %v2224
      %2283 = vmatpush1.bf16.msra.mxu0 %v2223
      %2284 = vmatprep.subr.bf16.mxu0 %v2226
      %2285 = vmatpush1.bf16.msra.mxu0 %v2225
      %2286 = vmatprep.subr.bf16.mxu0 %v2228
      %2287 = vmatpush1.bf16.msra.mxu0 %v2227
      %2288 = vmatprep.subr.bf16.mxu0 %v2230
      %2289 = vmatpush1.bf16.msra.mxu0 %v2229
      %2290 = vmatprep.subr.bf16.mxu0 %v2264
      %2291 = vmatpush1.bf16.msra.mxu0 %v2261
      %2292 = vmatprep.subr.bf16.mxu0 0
      %2293 = vmatpush1.bf16.msra.mxu0 0
      %2294 = vmatprep.subr.bf16.mxu0 0
      %2295 = vmatpush1.bf16.msra.mxu0 0
      %2296 = vmatprep.subr.bf16.mxu0 0
      %2297 = vmatpush1.bf16.msra.mxu0 0
      %2298 = vmatprep.mubr.bf16.mxu0 %v2258
      %2299 = vmatmul.mubr.bf16.gmra.mrb[0].mxu0 %v2129
      %v2300 = vpop.f32.mrb[0].mxu0
      %v2301 = vadd.f32 0.0, %v2300
      %v2302 = vpop.f32.mrb[0].mxu0
      %v2303 = vadd.f32 0.0, %v2302
      %v2304 = vpop.f32.mrb[0].mxu0
      %v2305 = vpop.f32.mrb[0].mxu0
      %2306 = vdwg.mxu0
      %v2307 = vld [vmem:[%s2] sm:$0xff]
      %2309 = vset.pattern.permute.xlu0 0
      %2310 = vperm.xlu0 %2309, %v2307
      %v2311 = vpop.permute.xlu0 %2310
      %v2313 = vmul.f32 %v2301, %v2311
      %v2314 = vmul.f32 %v2303, %v2311
      %v2315 = vld [vmem:[%s3] sm:$0xff]
      %2317 = vset.pattern.permute.xlu0 0
      %2318 = vperm.xlu0 %2317, %v2315
      %v2319 = vpop.permute.xlu0 %2318
      %v2321 = vadd.f32 %v2313, %v2319
      %v2322 = vadd.f32 %v2314, %v2319
      %v2323 = vmax.f32 %v2321, 0.0
      %v2324 = vmax.f32 %v2322, 0.0
      %v2325 = vmax.f32 %v1715, %v2323
      %v2326 = vmax.f32 %v1716, %v2324
      %v2327 = vld [vmem:[%s461 + $0x30] sm:$0xff]
      %v2328 = vld [vmem:[%s461 + $0x38] sm:$0xff]
      %v2329 = vld [vmem:[%s461 + $0x20] sm:$0xff]
      %v2330 = vld [vmem:[%s461 + $0x28] sm:$0xff]
      %2333 = vrot.lane.b32.xlu0 %v2329, 127
      %v2334 = vpop.permute.xlu0 %2333
      %2335 = vrot.lane.b32.xlu0 %v2330, 127
      %v2336 = vpop.permute.xlu0 %2335
      %v2337 = vsel %vm573, %v2334, %v2336
      %v2340 = vpack.c.bf16 %v2337, %v2327
      %v2341 = vpack.c.bf16 %v2336, %v2328
      %v2344 = vunpack.c.l.b16 %v2340
      %v2345 = vunpack.c.l.b16 %v2341
      %v2346 = vunpack.c.h.b16 %v2340
      %v2347 = vunpack.c.h.b16 %v2341
      %v2348 = vpack.c.b16 %v2345, %v2344
      %v2349 = vpack.c.b16 %v2347, %v2346
      %2350 = vrot.lane.b32.xlu0 %v2348, 113
      %v2351 = vpop.permute.xlu0 %2350
      %2352 = vrot.lane.b32.xlu0 %v2349, 113
      %v2353 = vpop.permute.xlu0 %2352
      %v2354 = vrot.slane %v2351, 4
      %v2355 = vrot.slane %v2353, 4
      %v2356 = vsel %vm489, %v2351, %v2354
      %v2357 = vsel %vm489, %v2353, %v2355
      %s2360 = scalar_lea.vmem [#allocation2], 600
      %2361 = vst.msk [vmem:[%s2360] sm:$0xff] %vm496, %v2356
      %2362 = vst.msk [vmem:[%s2360 + $0x8] sm:$0xff] %vm496, %v2357
      %v2363 = vld [vmem:[%s461 + $0x30] sm:$0xff]
      %v2364 = vld [vmem:[%s461 + $0x38] sm:$0xff]
      %v2365 = vld [vmem:[%s461 + $0x20] sm:$0xff]
      %v2366 = vld [vmem:[%s461 + $0x28] sm:$0xff]
      %2369 = vrot.lane.b32.xlu0 %v2365, 127
      %v2370 = vpop.permute.xlu0 %2369
      %2371 = vrot.lane.b32.xlu0 %v2366, 127
      %v2372 = vpop.permute.xlu0 %2371
      %v2373 = vsel %vm573, %v2370, %v2372
      %v2376 = vpack.c.bf16 %v2373, %v2363
      %v2377 = vpack.c.bf16 %v2372, %v2364
      %v2380 = vunpack.c.l.b16 %v2376
      %v2381 = vunpack.c.l.b16 %v2377
      %v2382 = vunpack.c.h.b16 %v2376
      %v2383 = vunpack.c.h.b16 %v2377
      %v2384 = vpack.c.b16 %v2381, %v2380
      %v2385 = vpack.c.b16 %v2383, %v2382
      %2386 = vrot.lane.b32.xlu0 %v2384, 112
      %v2387 = vpop.permute.xlu0 %2386
      %2388 = vrot.lane.b32.xlu0 %v2385, 112
      %v2389 = vpop.permute.xlu0 %2388
      %v2390 = vrot.slane %v2387, 4
      %v2391 = vrot.slane %v2389, 4
      %v2392 = vsel %vm519, %v2387, %v2390
      %v2393 = vsel %vm519, %v2389, %v2391
      %2396 = vst.msk [vmem:[%s2360 + $0x10] sm:$0xff] %vm496, %v2392
      %2397 = vst.msk [vmem:[%s2360 + $0x18] sm:$0xff] %vm496, %v2393
      %v2398 = vld [vmem:[%s461 + $0x30] sm:$0xff]
      %v2399 = vld [vmem:[%s461 + $0x38] sm:$0xff]
      %v2400 = vld [vmem:[%s461 + $0x10] sm:$0xff]
      %v2401 = vld [vmem:[%s461 + $0x18] sm:$0xff]
      %2404 = vrot.lane.b32.xlu0 %v2400, 114
      %v2405 = vpop.permute.xlu0 %2404
      %2406 = vrot.lane.b32.xlu0 %v2401, 114
      %v2407 = vpop.permute.xlu0 %2406
      %v2408 = vsel %vm1780, %v2405, %v2407
      %v2411 = vpack.c.bf16 %v2408, %v2398
      %v2412 = vpack.c.bf16 %v2407, %v2399
      %v2415 = vunpack.c.l.b16 %v2411
      %v2416 = vunpack.c.l.b16 %v2412
      %v2417 = vunpack.c.h.b16 %v2411
      %v2418 = vunpack.c.h.b16 %v2412
      %v2419 = vpack.c.b16 %v2416, %v2415
      %v2420 = vpack.c.b16 %v2418, %v2417
      %2421 = vrot.lane.b32.xlu0 %v2419, 111
      %v2422 = vpop.permute.xlu0 %2421
      %2423 = vrot.lane.b32.xlu0 %v2420, 111
      %v2424 = vpop.permute.xlu0 %2423
      %v2425 = vrot.slane %v2422, 4
      %v2426 = vrot.slane %v2424, 4
      %v2427 = vsel %vm556, %v2422, %v2425
      %v2428 = vsel %vm556, %v2424, %v2426
      %2431 = vst.msk [vmem:[%s2360 + $0x20] sm:$0xff] %vm496, %v2427
      %2432 = vst.msk [vmem:[%s2360 + $0x28] sm:$0xff] %vm496, %v2428
      %v2433 = vld [vmem:[%s461] sm:$0xff]
      %v2434 = vld [vmem:[%s461 + $0x8] sm:$0xff]
      %v2435 = vld [vmem:[%s461 + $0x10] sm:$0xff]
      %v2436 = vld [vmem:[%s461 + $0x18] sm:$0xff]
      %v2437 = vpack.c.bf16 %v2435, %v2433
      %v2438 = vpack.c.bf16 %v2436, %v2434
      %v2441 = vunpack.c.l.b16 %v2437
      %v2442 = vunpack.c.l.b16 %v2438
      %v2443 = vunpack.c.h.b16 %v2437
      %v2444 = vunpack.c.h.b16 %v2438
      %v2445 = vpack.c.b16 %v2442, %v2441
      %v2446 = vpack.c.b16 %v2444, %v2443
      %2447 = vrot.lane.b32.xlu0 %v2445, 96
      %v2448 = vpop.permute.xlu0 %2447
      %2449 = vrot.lane.b32.xlu0 %v2446, 96
      %v2450 = vpop.permute.xlu0 %2449
      %v2451 = vrot.slane %v2448, 4
      %v2452 = vrot.slane %v2450, 4
      %v2453 = vsel %vm681, %v2448, %v2451
      %v2454 = vsel %vm681, %v2450, %v2452
      %2457 = vst.msk [vmem:[%s2360 + $0x30] sm:$0xff] %vm496, %v2453
      %2458 = vst.msk [vmem:[%s2360 + $0x38] sm:$0xff] %vm496, %v2454
      %v2459 = vld [vmem:[%s461] sm:$0xff]
      %v2460 = vld [vmem:[%s461 + $0x8] sm:$0xff]
      %v2461 = vld [vmem:[%s461 + $0x10] sm:$0xff]
      %v2462 = vld [vmem:[%s461 + $0x18] sm:$0xff]
      %v2463 = vpack.c.bf16 %v2461, %v2459
      %v2464 = vpack.c.bf16 %v2462, %v2460
      %v2467 = vunpack.c.l.b16 %v2463
      %v2468 = vunpack.c.l.b16 %v2464
      %v2469 = vunpack.c.h.b16 %v2463
      %v2470 = vunpack.c.h.b16 %v2464
      %v2471 = vpack.c.b16 %v2468, %v2467
      %v2472 = vpack.c.b16 %v2470, %v2469
      %2473 = vrot.lane.b32.xlu0 %v2471, 95
      %v2474 = vpop.permute.xlu0 %2473
      %2475 = vrot.lane.b32.xlu0 %v2472, 95
      %v2476 = vpop.permute.xlu0 %2475
      %v2477 = vrot.slane %v2474, 4
      %v2478 = vrot.slane %v2476, 4
      %v2479 = vsel %vm717, %v2474, %v2477
      %v2480 = vsel %vm717, %v2476, %v2478
      %2483 = vst.msk [vmem:[%s2360 + $0x40] sm:$0xff] %vm496, %v2479
      %2484 = vst.msk [vmem:[%s2360 + $0x48] sm:$0xff] %vm496, %v2480
      %v2485 = vld [vmem:[%s461 + $0x30] sm:$0xff]
      %v2486 = vld [vmem:[%s461 + $0x38] sm:$0xff]
      %v2487 = vld [vmem:[%s461 + $0x20] sm:$0xff]
      %v2488 = vld [vmem:[%s461 + $0x28] sm:$0xff]
      %2491 = vrot.lane.b32.xlu0 %v2487, 127
      %v2492 = vpop.permute.xlu0 %2491
      %2493 = vrot.lane.b32.xlu0 %v2488, 127
      %v2494 = vpop.permute.xlu0 %2493
      %v2495 = vsel %vm573, %v2492, %v2494
      %v2498 = vpack.c.bf16 %v2495, %v2485
      %v2499 = vpack.c.bf16 %v2494, %v2486
      %v2502 = vunpack.c.l.b16 %v2498
      %v2503 = vunpack.c.l.b16 %v2499
      %v2504 = vunpack.c.h.b16 %v2498
      %v2505 = vunpack.c.h.b16 %v2499
      %v2506 = vpack.c.b16 %v2503, %v2502
      %v2507 = vpack.c.b16 %v2505, %v2504
      %2508 = vrot.lane.b32.xlu0 %v2506, 97
      %v2509 = vpop.permute.xlu0 %2508
      %2510 = vrot.lane.b32.xlu0 %v2507, 97
      %v2511 = vpop.permute.xlu0 %2510
      %v2512 = vrot.slane %v2509, 4
      %v2513 = vrot.slane %v2511, 4
      %v2514 = vsel %vm654, %v2509, %v2512
      %v2515 = vsel %vm654, %v2511, %v2513
      %2518 = vst.msk [vmem:[%s2360 + $0x50] sm:$0xff] %vm496, %v2514
      %2519 = vst.msk [vmem:[%s2360 + $0x58] sm:$0xff] %vm496, %v2515
      %v2520 = vld [vmem:[%s461 + $0x30] sm:$0xff]
      %v2521 = vld [vmem:[%s461 + $0x38] sm:$0xff]
      %v2522 = vld [vmem:[%s461 + $0x20] sm:$0xff]
      %v2523 = vld [vmem:[%s461 + $0x28] sm:$0xff]
      %2526 = vrot.lane.b32.xlu0 %v2522, 127
      %v2527 = vpop.permute.xlu0 %2526
      %2528 = vrot.lane.b32.xlu0 %v2523, 127
      %v2529 = vpop.permute.xlu0 %2528
      %v2530 = vsel %vm573, %v2527, %v2529
      %v2533 = vpack.c.bf16 %v2530, %v2520
      %v2534 = vpack.c.bf16 %v2529, %v2521
      %v2537 = vunpack.c.l.b16 %v2533
      %v2538 = vunpack.c.l.b16 %v2534
      %v2539 = vunpack.c.h.b16 %v2533
      %v2540 = vunpack.c.h.b16 %v2534
      %v2541 = vpack.c.b16 %v2538, %v2537
      %v2542 = vpack.c.b16 %v2540, %v2539
      %2543 = vrot.lane.b32.xlu0 %v2541, 96
      %v2544 = vpop.permute.xlu0 %2543
      %2545 = vrot.lane.b32.xlu0 %v2542, 96
      %v2546 = vpop.permute.xlu0 %2545
      %v2547 = vrot.slane %v2544, 4
      %v2548 = vrot.slane %v2546, 4
      %v2549 = vsel %vm681, %v2544, %v2547
      %v2550 = vsel %vm681, %v2546, %v2548
      %2553 = vst.msk [vmem:[%s2360 + $0x60] sm:$0xff] %vm496, %v2549
      %2554 = vst.msk [vmem:[%s2360 + $0x68] sm:$0xff] %vm496, %v2550
      %v2555 = vld [vmem:[%s461 + $0x30] sm:$0xff]
      %v2556 = vld [vmem:[%s461 + $0x38] sm:$0xff]
      %v2557 = vld [vmem:[%s461 + $0x10] sm:$0xff]
      %v2558 = vld [vmem:[%s461 + $0x18] sm:$0xff]
      %2561 = vrot.lane.b32.xlu0 %v2557, 114
      %v2562 = vpop.permute.xlu0 %2561
      %2563 = vrot.lane.b32.xlu0 %v2558, 114
      %v2564 = vpop.permute.xlu0 %2563
      %v2565 = vsel %vm1780, %v2562, %v2564
      %v2568 = vpack.c.bf16 %v2565, %v2555
      %v2569 = vpack.c.bf16 %v2564, %v2556
      %v2572 = vunpack.c.l.b16 %v2568
      %v2573 = vunpack.c.l.b16 %v2569
      %v2574 = vunpack.c.h.b16 %v2568
      %v2575 = vunpack.c.h.b16 %v2569
      %v2576 = vpack.c.b16 %v2573, %v2572
      %v2577 = vpack.c.b16 %v2575, %v2574
      %2578 = vrot.lane.b32.xlu0 %v2576, 95
      %v2579 = vpop.permute.xlu0 %2578
      %2580 = vrot.lane.b32.xlu0 %v2577, 95
      %v2581 = vpop.permute.xlu0 %2580
      %v2582 = vrot.slane %v2579, 4
      %v2583 = vrot.slane %v2581, 4
      %v2584 = vsel %vm717, %v2579, %v2582
      %v2585 = vsel %vm717, %v2581, %v2583
      %2588 = vst.msk [vmem:[%s2360 + $0x70] sm:$0xff] %vm496, %v2584
      %2589 = vst.msk [vmem:[%s2360 + $0x78] sm:$0xff] %vm496, %v2585
      %v2590 = vld [vmem:[%s461] sm:$0xff]
      %v2591 = vld [vmem:[%s461 + $0x8] sm:$0xff]
      %v2592 = vld [vmem:[%s461 + $0x10] sm:$0xff]
      %v2593 = vld [vmem:[%s461 + $0x18] sm:$0xff]
      %v2594 = vpack.c.bf16 %v2592, %v2590
      %v2595 = vpack.c.bf16 %v2593, %v2591
      %v2598 = vunpack.c.l.b16 %v2594
      %v2599 = vunpack.c.l.b16 %v2595
      %v2600 = vunpack.c.h.b16 %v2594
      %v2601 = vunpack.c.h.b16 %v2595
      %v2602 = vpack.c.b16 %v2599, %v2598
      %v2603 = vpack.c.b16 %v2601, %v2600
      %2604 = vrot.lane.b32.xlu0 %v2602, 80
      %v2605 = vpop.permute.xlu0 %2604
      %2606 = vrot.lane.b32.xlu0 %v2603, 80
      %v2607 = vpop.permute.xlu0 %2606
      %v2608 = vrot.slane %v2605, 4
      %v2609 = vrot.slane %v2607, 4
      %v2610 = vsel %vm841, %v2605, %v2608
      %v2611 = vsel %vm841, %v2607, %v2609
      %2614 = vst.msk [vmem:[%s2360 + $0x80] sm:$0xff] %vm496, %v2610
      %2615 = vst.msk [vmem:[%s2360 + $0x88] sm:$0xff] %vm496, %v2611
      %v2616 = vld [vmem:[%s461] sm:$0xff]
      %v2617 = vld [vmem:[%s461 + $0x8] sm:$0xff]
      %v2618 = vld [vmem:[%s461 + $0x10] sm:$0xff]
      %v2619 = vld [vmem:[%s461 + $0x18] sm:$0xff]
      %v2620 = vpack.c.bf16 %v2618, %v2616
      %v2621 = vpack.c.bf16 %v2619, %v2617
      %v2624 = vunpack.c.l.b16 %v2620
      %v2625 = vunpack.c.l.b16 %v2621
      %v2626 = vunpack.c.h.b16 %v2620
      %v2627 = vunpack.c.h.b16 %v2621
      %v2628 = vpack.c.b16 %v2625, %v2624
      %v2629 = vpack.c.b16 %v2627, %v2626
      %2630 = vrot.lane.b32.xlu0 %v2628, 79
      %v2631 = vpop.permute.xlu0 %2630
      %2632 = vrot.lane.b32.xlu0 %v2629, 79
      %v2633 = vpop.permute.xlu0 %2632
      %v2634 = vrot.slane %v2631, 4
      %v2635 = vrot.slane %v2633, 4
      %v2636 = vsel %vm860, %v2631, %v2634
      %v2637 = vsel %vm860, %v2633, %v2635
      %2640 = vst.msk [vmem:[%s2360 + $0x90] sm:$0xff] %vm496, %v2636
      %2641 = vst.msk [vmem:[%s2360 + $0x98] sm:$0xff] %vm496, %v2637
      %v2642 = vld [vmem:[%s461 + $0x30] sm:$0xff]
      %v2643 = vld [vmem:[%s461 + $0x38] sm:$0xff]
      %v2644 = vld [vmem:[%s461 + $0x20] sm:$0xff]
      %v2645 = vld [vmem:[%s461 + $0x28] sm:$0xff]
      %2648 = vrot.lane.b32.xlu0 %v2644, 127
      %v2649 = vpop.permute.xlu0 %2648
      %2650 = vrot.lane.b32.xlu0 %v2645, 127
      %v2651 = vpop.permute.xlu0 %2650
      %v2652 = vsel %vm573, %v2649, %v2651
      %v2655 = vpack.c.bf16 %v2652, %v2642
      %v2656 = vpack.c.bf16 %v2651, %v2643
      %v2659 = vunpack.c.l.b16 %v2655
      %v2660 = vunpack.c.l.b16 %v2656
      %v2661 = vunpack.c.h.b16 %v2655
      %v2662 = vunpack.c.h.b16 %v2656
      %v2663 = vpack.c.b16 %v2660, %v2659
      %v2664 = vpack.c.b16 %v2662, %v2661
      %2665 = vrot.lane.b32.xlu0 %v2663, 81
      %v2666 = vpop.permute.xlu0 %2665
      %2667 = vrot.lane.b32.xlu0 %v2664, 81
      %v2668 = vpop.permute.xlu0 %2667
      %v2669 = vrot.slane %v2666, 4
      %v2670 = vrot.slane %v2668, 4
      %v2671 = vsel %vm814, %v2666, %v2669
      %v2672 = vsel %vm814, %v2668, %v2670
      %2675 = vst.msk [vmem:[%s2360 + $0xa0] sm:$0xff] %vm496, %v2671
      %2676 = vst.msk [vmem:[%s2360 + $0xa8] sm:$0xff] %vm496, %v2672
      %v2677 = vld [vmem:[%s461 + $0x30] sm:$0xff]
      %v2678 = vld [vmem:[%s461 + $0x38] sm:$0xff]
      %v2679 = vld [vmem:[%s461 + $0x20] sm:$0xff]
      %v2680 = vld [vmem:[%s461 + $0x28] sm:$0xff]
      %2683 = vrot.lane.b32.xlu0 %v2679, 127
      %v2684 = vpop.permute.xlu0 %2683
      %2685 = vrot.lane.b32.xlu0 %v2680, 127
      %v2686 = vpop.permute.xlu0 %2685
      %v2687 = vsel %vm573, %v2684, %v2686
      %v2690 = vpack.c.bf16 %v2687, %v2677
      %v2691 = vpack.c.bf16 %v2686, %v2678
      %v2694 = vunpack.c.l.b16 %v2690
      %v2695 = vunpack.c.l.b16 %v2691
      %v2696 = vunpack.c.h.b16 %v2690
      %v2697 = vunpack.c.h.b16 %v2691
      %v2698 = vpack.c.b16 %v2695, %v2694
      %v2699 = vpack.c.b16 %v2697, %v2696
      %2700 = vrot.lane.b32.xlu0 %v2698, 80
      %v2701 = vpop.permute.xlu0 %2700
      %2702 = vrot.lane.b32.xlu0 %v2699, 80
      %v2703 = vpop.permute.xlu0 %2702
      %v2704 = vrot.slane %v2701, 4
      %v2705 = vrot.slane %v2703, 4
      %v2706 = vsel %vm841, %v2701, %v2704
      %v2707 = vsel %vm841, %v2703, %v2705
      %2710 = vst.msk [vmem:[%s2360 + $0xb0] sm:$0xff] %vm496, %v2706
      %2711 = vst.msk [vmem:[%s2360 + $0xb8] sm:$0xff] %vm496, %v2707
      %v2712 = vld [vmem:[%s461 + $0x30] sm:$0xff]
      %v2713 = vld [vmem:[%s461 + $0x38] sm:$0xff]
      %v2714 = vpack.c.bf16 %v2712, %v2712
      %v2715 = vpack.c.bf16 %v2713, %v2713
      %v2718 = vunpack.c.l.b16 %v2714
      %v2719 = vunpack.c.l.b16 %v2715
      %v2720 = vpack.c.b16 %v2719, %v2718
      %2721 = vrot.lane.b32.xlu0 %v2720, 79
      %v2722 = vpop.permute.xlu0 %2721
      %v2723 = vrot.slane %v2722, 4
      %v2724 = vsel %vm860, %v2722, %v2723
      %2726 = vst.msk [vmem:[%s2360 + $0xc0] sm:$0xff] %vm496, %v2724
      %v2727 = vld [vmem:[%s1] sm:$0xff]
      %v2728 = vld [vmem:[%s2360] sm:$0xff]
      %v2729 = vld [vmem:[%s2360 + $0x8] sm:$0xff]
      %v2730 = vld [vmem:[%s2360 + $0x10] sm:$0xff]
      %v2731 = vld [vmem:[%s2360 + $0x18] sm:$0xff]
      %v2732 = vld [vmem:[%s2360 + $0x20] sm:$0xff]
      %v2733 = vld [vmem:[%s2360 + $0x28] sm:$0xff]
      %v2734 = vld [vmem:[%s2360 + $0x30] sm:$0xff]
      %v2735 = vld [vmem:[%s2360 + $0x38] sm:$0xff]
      %v2736 = vld [vmem:[%s2360 + $0x40] sm:$0xff]
      %v2737 = vld [vmem:[%s2360 + $0x48] sm:$0xff]
      %v2738 = vld [vmem:[%s2360 + $0x50] sm:$0xff]
      %v2739 = vld [vmem:[%s2360 + $0x58] sm:$0xff]
      %v2740 = vld [vmem:[%s2360 + $0x60] sm:$0xff]
      %v2741 = vld [vmem:[%s2360 + $0x68] sm:$0xff]
      %v2742 = vld [vmem:[%s2360 + $0x70] sm:$0xff]
      %v2743 = vld [vmem:[%s2360 + $0x78] sm:$0xff]
      %v2744 = vld [vmem:[%s2360 + $0x80] sm:$0xff]
      %v2745 = vld [vmem:[%s2360 + $0x88] sm:$0xff]
      %v2746 = vld [vmem:[%s2360 + $0x90] sm:$0xff]
      %v2747 = vld [vmem:[%s2360 + $0x98] sm:$0xff]
      %v2748 = vld [vmem:[%s2360 + $0xa0] sm:$0xff]
      %v2749 = vld [vmem:[%s2360 + $0xa8] sm:$0xff]
      %v2750 = vld [vmem:[%s2360 + $0xb0] sm:$0xff]
      %v2751 = vld [vmem:[%s2360 + $0xb8] sm:$0xff]
      %v2752 = vld [vmem:[%s2360 + $0xc0] sm:$0xff]
      %v2754 = vunpack.c.l.b16 %v2727
      %v2755 = vunpack.c.h.b16 %v2727
      %v2756 = vpack.c.b16 %v2754, %v2754
      %v2757 = vpack.c.b16 %v2755, %v2755
      %v2784 = vunpack.c.l.b16 %v2728
      %v2785 = vunpack.c.h.b16 %v2728
      %v2786 = vunpack.c.l.b16 %v2729
      %v2787 = vunpack.c.h.b16 %v2729
      %v2788 = vunpack.c.l.b16 %v2730
      %v2789 = vunpack.c.h.b16 %v2730
      %v2790 = vunpack.c.l.b16 %v2731
      %v2791 = vunpack.c.h.b16 %v2731
      %v2792 = vunpack.c.l.b16 %v2732
      %v2793 = vunpack.c.h.b16 %v2732
      %v2794 = vunpack.c.l.b16 %v2733
      %v2795 = vunpack.c.h.b16 %v2733
      %v2796 = vunpack.c.l.b16 %v2734
      %v2797 = vunpack.c.h.b16 %v2734
      %v2798 = vunpack.c.l.b16 %v2735
      %v2799 = vunpack.c.h.b16 %v2735
      %v2800 = vunpack.c.l.b16 %v2736
      %v2801 = vunpack.c.h.b16 %v2736
      %v2802 = vunpack.c.l.b16 %v2737
      %v2803 = vunpack.c.h.b16 %v2737
      %v2804 = vunpack.c.l.b16 %v2738
      %v2805 = vunpack.c.h.b16 %v2738
      %v2806 = vunpack.c.l.b16 %v2739
      %v2807 = vunpack.c.h.b16 %v2739
      %v2808 = vunpack.c.l.b16 %v2740
      %v2809 = vunpack.c.h.b16 %v2740
      %v2810 = vunpack.c.l.b16 %v2741
      %v2811 = vunpack.c.h.b16 %v2741
      %v2812 = vunpack.c.l.b16 %v2742
      %v2813 = vunpack.c.h.b16 %v2742
      %v2814 = vunpack.c.l.b16 %v2743
      %v2815 = vunpack.c.h.b16 %v2743
      %v2816 = vunpack.c.l.b16 %v2744
      %v2817 = vunpack.c.h.b16 %v2744
      %v2818 = vunpack.c.l.b16 %v2745
      %v2819 = vunpack.c.h.b16 %v2745
      %v2820 = vunpack.c.l.b16 %v2746
      %v2821 = vunpack.c.h.b16 %v2746
      %v2822 = vunpack.c.l.b16 %v2747
      %v2823 = vunpack.c.h.b16 %v2747
      %v2824 = vunpack.c.l.b16 %v2748
      %v2825 = vunpack.c.h.b16 %v2748
      %v2826 = vunpack.c.l.b16 %v2749
      %v2827 = vunpack.c.h.b16 %v2749
      %v2828 = vunpack.c.l.b16 %v2750
      %v2829 = vunpack.c.h.b16 %v2750
      %v2830 = vunpack.c.l.b16 %v2751
      %v2831 = vunpack.c.h.b16 %v2751
      %v2832 = vunpack.c.l.b16 %v2752
      %v2833 = vunpack.c.h.b16 %v2752
      %v2834 = vpack.c.b16 %v2786, %v2784
      %v2835 = vpack.c.b16 %v2787, %v2785
      %v2836 = vpack.c.b16 %v2790, %v2788
      %v2837 = vpack.c.b16 %v2791, %v2789
      %v2838 = vpack.c.b16 %v2794, %v2792
      %v2839 = vpack.c.b16 %v2795, %v2793
      %v2840 = vpack.c.b16 %v2798, %v2796
      %v2841 = vpack.c.b16 %v2799, %v2797
      %v2842 = vpack.c.b16 %v2802, %v2800
      %v2843 = vpack.c.b16 %v2803, %v2801
      %v2844 = vpack.c.b16 %v2806, %v2804
      %v2845 = vpack.c.b16 %v2807, %v2805
      %v2846 = vpack.c.b16 %v2810, %v2808
      %v2847 = vpack.c.b16 %v2811, %v2809
      %v2848 = vpack.c.b16 %v2814, %v2812
      %v2849 = vpack.c.b16 %v2815, %v2813
      %v2850 = vpack.c.b16 %v2818, %v2816
      %v2851 = vpack.c.b16 %v2819, %v2817
      %v2852 = vpack.c.b16 %v2822, %v2820
      %v2853 = vpack.c.b16 %v2823, %v2821
      %v2854 = vpack.c.b16 %v2826, %v2824
      %v2855 = vpack.c.b16 %v2827, %v2825
      %v2856 = vpack.c.b16 %v2830, %v2828
      %v2857 = vpack.c.b16 %v2831, %v2829
      %v2858 = vpack.c.b16 %v2832, %v2832
      %v2859 = vpack.c.b16 %v2833, %v2833
      %v2885 = vsel %vm1021, %v2757, 0
      %v2888 = vsel %vm494, %v2858, 0
      %v2891 = vsel %vm494, %v2859, 0
      %2893 = vmatprep.subr.bf16.mxu0 %v2835
      %2894 = vmatpush1.bf16.msra.mxu0 %v2834
      %2895 = vmatprep.subr.bf16.mxu0 %v2837
      %2896 = vmatpush1.bf16.msra.mxu0 %v2836
      %2897 = vmatprep.subr.bf16.mxu0 %v2839
      %2898 = vmatpush1.bf16.msra.mxu0 %v2838
      %2899 = vmatprep.subr.bf16.mxu0 %v2841
      %2900 = vmatpush1.bf16.msra.mxu0 %v2840
      %2901 = vmatprep.subr.bf16.mxu0 %v2843
      %2902 = vmatpush1.bf16.msra.mxu0 %v2842
      %2903 = vmatprep.subr.bf16.mxu0 %v2845
      %2904 = vmatpush1.bf16.msra.mxu0 %v2844
      %2905 = vmatprep.subr.bf16.mxu0 %v2847
      %2906 = vmatpush1.bf16.msra.mxu0 %v2846
      %2907 = vmatprep.subr.bf16.mxu0 %v2849
      %2908 = vmatpush1.bf16.msra.mxu0 %v2848
      %2909 = vmatprep.subr.bf16.mxu0 %v2851
      %2910 = vmatpush1.bf16.msra.mxu0 %v2850
      %2911 = vmatprep.subr.bf16.mxu0 %v2853
      %2912 = vmatpush1.bf16.msra.mxu0 %v2852
      %2913 = vmatprep.subr.bf16.mxu0 %v2855
      %2914 = vmatpush1.bf16.msra.mxu0 %v2854
      %2915 = vmatprep.subr.bf16.mxu0 %v2857
      %2916 = vmatpush1.bf16.msra.mxu0 %v2856
      %2917 = vmatprep.subr.bf16.mxu0 %v2891
      %2918 = vmatpush1.bf16.msra.mxu0 %v2888
      %2919 = vmatprep.subr.bf16.mxu0 0
      %2920 = vmatpush1.bf16.msra.mxu0 0
      %2921 = vmatprep.subr.bf16.mxu0 0
      %2922 = vmatpush1.bf16.msra.mxu0 0
      %2923 = vmatprep.subr.bf16.mxu0 0
      %2924 = vmatpush1.bf16.msra.mxu0 0
      %2925 = vmatprep.mubr.bf16.mxu0 %v2885
      %2926 = vmatmul.mubr.bf16.gmra.mrb[0].mxu0 %v2756
      %v2927 = vpop.f32.mrb[0].mxu0
      %v2928 = vadd.f32 0.0, %v2927
      %v2929 = vpop.f32.mrb[0].mxu0
      %v2930 = vadd.f32 0.0, %v2929
      %v2931 = vpop.f32.mrb[0].mxu0
      %v2932 = vpop.f32.mrb[0].mxu0
      %2933 = vdwg.mxu0
      %v2934 = vld [vmem:[%s2] sm:$0xff]
      %2936 = vset.pattern.permute.xlu0 0
      %2937 = vperm.xlu0 %2936, %v2934
      %v2938 = vpop.permute.xlu0 %2937
      %v2940 = vmul.f32 %v2928, %v2938
      %v2941 = vmul.f32 %v2930, %v2938
      %v2942 = vld [vmem:[%s3] sm:$0xff]
      %2944 = vset.pattern.permute.xlu0 0
      %2945 = vperm.xlu0 %2944, %v2942
      %v2946 = vpop.permute.xlu0 %2945
      %v2948 = vadd.f32 %v2940, %v2946
      %v2949 = vadd.f32 %v2941, %v2946
      %v2950 = vmax.f32 %v2948, 0.0
      %v2951 = vmax.f32 %v2949, 0.0
      %v2952 = vmax.f32 %v2325, %v2950
      %v2953 = vmax.f32 %v2326, %v2951
      %v2955 = vlaneseq
      %v2956 = vshrl.u32 %v2955, 7
      %v2957 = vsub.s32 0, %v2956
      %v2958 = vrot.slane %v467, %v2957
      %v2959 = vlaneseq
      %v2960 = vshrl.u32 %v2959, 7
      %v2961 = vsub.s32 1, %v2960
      %v2962 = vrot.slane %v467, %v2961
      %v2965 = vmul.f32 %v2952, %v2958
      %v2966 = vmul.f32 %v2953, %v2962
      %v2967 = vld [vmem:[%s11] sm:$0xff]
      %v2968 = vld [vmem:[%s11 + $0x8] sm:$0xff]
      %v2969 = vld [vmem:[%s11 + $0x10] sm:$0xff]
      %v2970 = vld [vmem:[%s11 + $0x18] sm:$0xff]
      %v2971 = vld [vmem:[%s11 + $0x20] sm:$0xff]
      %v2972 = vld [vmem:[%s11 + $0x28] sm:$0xff]
      %v2973 = vld [vmem:[%s11 + $0x30] sm:$0xff]
      %v2974 = vld [vmem:[%s11 + $0x38] sm:$0xff]
      %v2975 = vld [vmem:[%s11 + $0x40] sm:$0xff]
      %v2976 = vld [vmem:[%s11 + $0x48] sm:$0xff]
      %v2977 = vld [vmem:[%s11 + $0x50] sm:$0xff]
      %v2978 = vld [vmem:[%s11 + $0x58] sm:$0xff]
      %v2979 = vld [vmem:[%s11 + $0x60] sm:$0xff]
      %v2980 = vld [vmem:[%s11 + $0x68] sm:$0xff]
      %v2981 = vld [vmem:[%s11 + $0x70] sm:$0xff]
      %v2982 = vld [vmem:[%s11 + $0x78] sm:$0xff]
      %v2983 = vld [vmem:[%s11 + $0x80] sm:$0xff]
      %v2984 = vld [vmem:[%s11 + $0x88] sm:$0xff]
      %v2985 = vld [vmem:[%s11 + $0x90] sm:$0xff]
      %v2986 = vld [vmem:[%s11 + $0x98] sm:$0xff]
      %v2987 = vld [vmem:[%s11 + $0xa0] sm:$0xff]
      %v2988 = vld [vmem:[%s11 + $0xa8] sm:$0xff]
      %v2989 = vld [vmem:[%s11 + $0xb0] sm:$0xff]
      %v2990 = vld [vmem:[%s11 + $0xb8] sm:$0xff]
      %vm2991 = vcmask 523264
      %v2993 = vsel %vm2991, %v2966, 0
      %2995 = vmatprep.subr.mxu0 0.0
      %2996 = vmatpush1.msra.mxu0 %v2967
      %2997 = vmatprep.subr.mxu0 0.0
      %2998 = vmatpush1.msra.mxu0 %v2968
      %2999 = vmatprep.subr.mxu0 0.0
      %3000 = vmatpush1.msra.mxu0 %v2969
      %3001 = vmatprep.subr.mxu0 0.0
      %3002 = vmatpush1.msra.mxu0 %v2970
      %3003 = vmatprep.subr.mxu0 0.0
      %3004 = vmatpush1.msra.mxu0 %v2971
      %3005 = vmatprep.subr.mxu0 0.0
      %3006 = vmatpush1.msra.mxu0 %v2972
      %3007 = vmatprep.subr.mxu0 0.0
      %3008 = vmatpush1.msra.mxu0 %v2973
      %3009 = vmatprep.subr.mxu0 0.0
      %3010 = vmatpush1.msra.mxu0 %v2974
      %3011 = vmatprep.subr.mxu0 0.0
      %3012 = vmatpush1.msra.mxu0 %v2975
      %3013 = vmatprep.subr.mxu0 0.0
      %3014 = vmatpush1.msra.mxu0 %v2976
      %3015 = vmatprep.subr.mxu0 0.0
      %3016 = vmatpush1.msra.mxu0 %v2977
      %3017 = vmatprep.subr.mxu0 0.0
      %3018 = vmatpush1.msra.mxu0 %v2978
      %3019 = vmatprep.subr.mxu0 0.0
      %3020 = vmatpush1.msra.mxu0 %v2979
      %3021 = vmatprep.subr.mxu0 0.0
      %3022 = vmatpush1.msra.mxu0 %v2980
      %3023 = vmatprep.subr.mxu0 0.0
      %3024 = vmatpush1.msra.mxu0 %v2981
      %3025 = vmatprep.subr.mxu0 0.0
      %3026 = vmatpush1.msra.mxu0 %v2982
      %3027 = vmatprep.subr.mxu0 0.0
      %3028 = vmatpush1.msra.mxu0 %v2983
      %3029 = vmatprep.subr.mxu0 0.0
      %3030 = vmatpush1.msra.mxu0 %v2984
      %3031 = vmatprep.subr.mxu0 0.0
      %3032 = vmatpush1.msra.mxu0 %v2985
      %3033 = vmatprep.subr.mxu0 0.0
      %3034 = vmatpush1.msra.mxu0 %v2986
      %3035 = vmatprep.subr.mxu0 0.0
      %3036 = vmatpush1.msra.mxu0 %v2987
      %3037 = vmatprep.subr.mxu0 0.0
      %3038 = vmatpush1.msra.mxu0 %v2988
      %3039 = vmatprep.subr.mxu0 0.0
      %3040 = vmatpush1.msra.mxu0 %v2989
      %3041 = vmatprep.subr.mxu0 0.0
      %3042 = vmatpush1.msra.mxu0 %v2990
      %3043 = vmatprep.subr.mxu0 0.0
      %3044 = vmatpush1.msra.mxu0 0.0
      %3045 = vmatprep.subr.mxu0 0.0
      %3046 = vmatpush1.msra.mxu0 0.0
      %3047 = vmatprep.subr.mxu0 0.0
      %3048 = vmatpush1.msra.mxu0 0.0
      %3049 = vmatprep.subr.mxu0 0.0
      %3050 = vmatpush1.msra.mxu0 0.0
      %3051 = vmatprep.subr.mxu0 0.0
      %3052 = vmatpush1.msra.mxu0 0.0
      %3053 = vmatprep.subr.mxu0 0.0
      %3054 = vmatpush1.msra.mxu0 0.0
      %3055 = vmatprep.subr.mxu0 0.0
      %3056 = vmatpush1.msra.mxu0 0.0
      %3057 = vmatprep.subr.mxu0 0.0
      %3058 = vmatpush1.msra.mxu0 0.0
      %3059 = vmatprep.mubr.f32.mxu0 %v2993
      %3060 = vmatmul.mubr.f32.gmra.mrb[0].mxu0 %v2965
      %v3061 = vpop.f32.mrb[0].mxu0
      %v3062 = vadd.f32 0.0, %v3061
      %v3063 = vpop.f32.mrb[0].mxu0
      %3064 = vdwg.mxu0
      %3066 = vrot.lane.b32.xlu0 %v3062, 103
      %v3067 = vpop.permute.xlu0 %3066
      %v3069 = vadd.f32 %v3062, %v3067
      %3070 = vrot.lane.b32.xlu0 %v3062, 78
      %v3071 = vpop.permute.xlu0 %3070
      %v3073 = vadd.f32 %v3069, %v3071
      %3074 = vrot.lane.b32.xlu0 %v3062, 53
      %v3075 = vpop.permute.xlu0 %3074
      %v3077 = vadd.f32 %v3073, %v3075
      %v3078 = vmul.f32 %v3077, 0.25
      %v3079 = vld [vmem:[%s12] sm:$0xff]
      %v3080 = vld [vmem:[%s12 + $0x8] sm:$0xff]
      %v3081 = vld [vmem:[%s12 + $0x10] sm:$0xff]
      %v3082 = vmul.f32 %v3079, %v3078
      %v3083 = vmul.f32 %v3080, %v3078
      %v3084 = vmul.f32 %v3081, %v3078
      %vm3085 = vcmask 203776
      %v3086 = vsel %vm3085, %v3082, 0.0
      %v3087 = vrot.slane %v3086, 4
      %v3088 = vadd.f32 %v3086, %v3087
      %v3089 = vrot.slane %v3088, 2
      %v3090 = vadd.f32 %v3088, %v3089
      %v3091 = vrot.slane %v3090, 1
      %v3092 = vadd.f32 %v3090, %v3091
      %v3093 = vsel %vm3085, %v3083, 0.0
      %v3094 = vrot.slane %v3093, 4
      %v3095 = vadd.f32 %v3093, %v3094
      %v3096 = vrot.slane %v3095, 2
      %v3097 = vadd.f32 %v3095, %v3096
      %v3098 = vrot.slane %v3097, 1
      %v3099 = vadd.f32 %v3097, %v3098
      %v3100 = vsel %vm3085, %v3084, 0.0
      %v3101 = vrot.slane %v3100, 4
      %v3102 = vadd.f32 %v3100, %v3101
      %v3103 = vrot.slane %v3102, 2
      %v3104 = vadd.f32 %v3102, %v3103
      %v3105 = vrot.slane %v3104, 1
      %v3106 = vadd.f32 %v3104, %v3105
      %v3107 = vrcp.pop 8.0
      %v3108 = vmul.f32 %v3092, %v3107
      %v3109 = vmul.f32 %v3099, %v3107
      %v3110 = vmul.f32 %v3106, %v3107
      %vm3114 = vcmask 1041409
      %v3115 = vsel %vm3114, %v3109, %v3108
      %vm3116 = vcmask 1042434
      %v3117 = vsel %vm3116, %v3110, %v3115
      %vm3119 = vcmask 198656
      %v3120 = vsel %vm3119, %v3117, inf
      %3121 = vmin.xlane.f32.xlu0 %v3120
      %v3122 = vpop.xlane.xlu0 %3121
      %v3124 = vrot.slane %v3122, 1
      %v3125 = vrot.slane %v3122, 2
      %v3129 = vsub.f32 %v3108, %v3122
      %v3130 = vsub.f32 %v3109, %v3124
      %v3131 = vsub.f32 %v3110, %v3125
      %v3135 = vrot.slane %v3130, 7
      %v3136 = vsel %vm3114, %v3135, %v3129
      %v3137 = vrot.slane %v3131, 6
      %v3138 = vsel %vm3116, %v3137, %v3136
      %v3140 = vsel %vm3119, %v3138, -inf
      %3141 = vmax.xlane.f32.xlu0 %v3140
      %v3142 = vpop.xlane.xlu0 %3141
      %v3144 = vrot.slane %v3142, 1
      %v3145 = vrot.slane %v3142, 2
      %v3149 = vrcp.pop %v3142
      %v3150 = vmul.f32 %v3129, %v3149
      %v3151 = vrcp.pop %v3144
      %v3152 = vmul.f32 %v3130, %v3151
      %v3153 = vrcp.pop %v3145
      %v3154 = vmul.f32 %v3131, %v3153
      %v3158 = vrot.slane %v3152, 7
      %v3159 = vsel %vm3114, %v3158, %v3150
      %v3160 = vrot.slane %v3154, 6
      %v3161 = vsel %vm3116, %v3160, %v3159
      %v3163 = vsel %vm3119, %v3161, 0.0
      %v3164 = vrot.slane %v3163, 4
      %v3165 = vadd.f32 %v3163, %v3164
      %v3166 = vrot.slane %v3165, 2
      %v3167 = vadd.f32 %v3165, %v3166
      %v3168 = vrot.slane %v3167, 1
      %v3169 = vadd.f32 %v3167, %v3168
      %v3170 = vrcp.pop 3.0
      %v3171 = vmul.f32 %v3169, %v3170
      %v3172 = vld [vmem:[%s4] sm:$0xf]
      %v3173 = vpack.c.bf16 %v2965, %v2965
      %v3174 = vpack.c.bf16 %v2966, %v2966
      %vm3175 = vcmask 64512
      %v3177 = vsel %vm3175, %v3172, 0
      %v3180 = vsel %vm494, %v3173, 0
      %v3183 = vsel %vm494, %v3174, 0
      %3185 = vmatprep.subr.bf16.mxu0 %v3183
      %3186 = vmatpush1.bf16.msra.mxu0 %v3180
      %3187 = vmatprep.subr.bf16.mxu0 0
      %3188 = vmatpush1.bf16.msra.mxu0 0
      %3189 = vmatprep.subr.bf16.mxu0 0
      %3190 = vmatpush1.bf16.msra.mxu0 0
      %3191 = vmatprep.subr.bf16.mxu0 0
      %3192 = vmatpush1.bf16.msra.mxu0 0
      %3193 = vmatprep.subr.bf16.mxu0 0
      %3194 = vmatpush1.bf16.msra.mxu0 0
      %3195 = vmatprep.subr.bf16.mxu0 0
      %3196 = vmatpush1.bf16.msra.mxu0 0
      %3197 = vmatprep.subr.bf16.mxu0 0
      %3198 = vmatpush1.bf16.msra.mxu0 0
      %3199 = vmatprep.subr.bf16.mxu0 0
      %3200 = vmatpush1.bf16.msra.mxu0 0
      %3201 = vmatprep.subr.bf16.mxu0 0
      %3202 = vmatpush1.bf16.msra.mxu0 0
      %3203 = vmatprep.subr.bf16.mxu0 0
      %3204 = vmatpush1.bf16.msra.mxu0 0
      %3205 = vmatprep.subr.bf16.mxu0 0
      %3206 = vmatpush1.bf16.msra.mxu0 0
      %3207 = vmatprep.subr.bf16.mxu0 0
      %3208 = vmatpush1.bf16.msra.mxu0 0
      %3209 = vmatprep.subr.bf16.mxu0 0
      %3210 = vmatpush1.bf16.msra.mxu0 0
      %3211 = vmatprep.subr.bf16.mxu0 0
      %3212 = vmatpush1.bf16.msra.mxu0 0
      %3213 = vmatprep.subr.bf16.mxu0 0
      %3214 = vmatpush1.bf16.msra.mxu0 0
      %3215 = vmatprep.subr.bf16.mxu0 0
      %3216 = vmatpush1.bf16.msra.mxu0 0
      %3217 = vmatprep.mubr.bf16.mxu0 0
      %3218 = vmatmul.mubr.bf16.gmra.mrb[0].mxu0 %v3177
      %v3219 = vpop.f32.mrb[0].mxu0
      %v3220 = vadd.f32 0.0, %v3219
      %v3221 = vpop.f32.mrb[0].mxu0
      %v3222 = vadd.f32 0.0, %v3221
      %v3223 = vpop.f32.mrb[0].mxu0
      %v3224 = vpop.f32.mrb[0].mxu0
      %3225 = vdwg.mxu0
      %v3226 = vld [vmem:[%s5] sm:$0xff]
      %3228 = vset.pattern.permute.xlu0 0
      %3229 = vperm.xlu0 %3228, %v3226
      %v3230 = vpop.permute.xlu0 %3229
      %v3232 = vmul.f32 %v3220, %v3230
      %v3233 = vmul.f32 %v3222, %v3230
      %v3234 = vld [vmem:[%s6] sm:$0xff]
      %3236 = vset.pattern.permute.xlu0 0
      %3237 = vperm.xlu0 %3236, %v3234
      %v3238 = vpop.permute.xlu0 %3237
      %v3240 = vadd.f32 %v3232, %v3238
      %v3241 = vadd.f32 %v3233, %v3238
      %v3242 = vmax.f32 %v3240, 0.0
      %v3243 = vmax.f32 %v3241, 0.0
      %v3244 = vmul.f32 %v3242, %v2958
      %v3245 = vmul.f32 %v3243, %v2962
      %v3246 = vadd.f32 %v2965, %v3244
      %v3247 = vadd.f32 %v2966, %v3245
      %v3248 = vpack.c.bf16 %v3246, %v3246
      %v3249 = vpack.c.bf16 %v3247, %v3247
      %v3252 = vunpack.c.l.b16 %v3248
      %v3253 = vunpack.c.l.b16 %v3249
      %v3254 = vpack.c.b16 %v3253, %v3252
      %3255 = vrot.lane.b32.xlu0 %v3254, 32
      %v3256 = vpop.permute.xlu0 %3255
      %v3257 = vrot.slane %v3256, 4
      %vm3258 = vcmask 261120
      %v3259 = vsel %vm3258, %v3257, %v3256
      %vm3261 = vcmask 1043712
      %vm3262 = vcmask 785412
      %vm3263 = vmor %vm3262, %vm3261
      %3264 = vst.msk [vmem:[#allocation3] sm:$0xff] %vm3263, %v3259
      %v3265 = vld [vmem:[%s7] sm:$0xf]
      %v3266 = vld [vmem:[#allocation3] sm:$0xff]
      %s3267 = scalar_lea.vmem %s7, 4
      %v3268 = vld [vmem:[%s3267] sm:$0xf]
      %v3270 = vunpack.c.l.b16 %v3266
      %v3271 = vunpack.c.h.b16 %v3266
      %v3272 = vpack.c.b16 %v3270, %v3270
      %v3273 = vpack.c.b16 %v3271, %v3271
      %3274 = vrot.lane.b32.xlu0 %v3272, 112
      %v3275 = vpop.permute.xlu0 %3274
      %3276 = vrot.lane.b32.xlu0 %v3273, 112
      %v3277 = vpop.permute.xlu0 %3276
      %v3278 = vsel %vm519, %v3275, %v3277
      %v3280 = vsel %vm3175, %v3268, 0
      %v3283 = vsel %vm494, %v3278, 0
      %v3286 = vsel %vm494, %v3277, 0
      %3288 = vmatprep.subr.bf16.mxu0 %v3286
      %3289 = vmatpush1.bf16.msra.mxu0 %v3283
      %3290 = vmatprep.subr.bf16.mxu0 0
      %3291 = vmatpush1.bf16.msra.mxu0 0
      %3292 = vmatprep.subr.bf16.mxu0 0
      %3293 = vmatpush1.bf16.msra.mxu0 0
      %3294 = vmatprep.subr.bf16.mxu0 0
      %3295 = vmatpush1.bf16.msra.mxu0 0
      %3296 = vmatprep.subr.bf16.mxu0 0
      %3297 = vmatpush1.bf16.msra.mxu0 0
      %3298 = vmatprep.subr.bf16.mxu0 0
      %3299 = vmatpush1.bf16.msra.mxu0 0
      %3300 = vmatprep.subr.bf16.mxu0 0
      %3301 = vmatpush1.bf16.msra.mxu0 0
      %3302 = vmatprep.subr.bf16.mxu0 0
      %3303 = vmatpush1.bf16.msra.mxu0 0
      %3304 = vmatprep.subr.bf16.mxu0 0
      %3305 = vmatpush1.bf16.msra.mxu0 0
      %3306 = vmatprep.subr.bf16.mxu0 0
      %3307 = vmatpush1.bf16.msra.mxu0 0
      %3308 = vmatprep.subr.bf16.mxu0 0
      %3309 = vmatpush1.bf16.msra.mxu0 0
      %3310 = vmatprep.subr.bf16.mxu0 0
      %3311 = vmatpush1.bf16.msra.mxu0 0
      %3312 = vmatprep.subr.bf16.mxu0 0
      %3313 = vmatpush1.bf16.msra.mxu0 0
      %3314 = vmatprep.subr.bf16.mxu0 0
      %3315 = vmatpush1.bf16.msra.mxu0 0
      %3316 = vmatprep.subr.bf16.mxu0 0
      %3317 = vmatpush1.bf16.msra.mxu0 0
      %3318 = vmatprep.subr.bf16.mxu0 0
      %3319 = vmatpush1.bf16.msra.mxu0 0
      %3320 = vmatprep.mubr.bf16.mxu0 0
      %3321 = vmatmul.mubr.bf16.gmra.mrb[0].mxu0 %v3280
      %v3322 = vpop.f32.mrb[0].mxu0
      %v3323 = vadd.f32 0.0, %v3322
      %v3324 = vpop.f32.mrb[0].mxu0
      %v3325 = vadd.f32 0.0, %v3324
      %v3326 = vpop.f32.mrb[0].mxu0
      %v3327 = vpop.f32.mrb[0].mxu0
      %3328 = vdwg.mxu0
      %3329 = vrot.lane.b32.xlu0 %v3272, 113
      %v3330 = vpop.permute.xlu0 %3329
      %3331 = vrot.lane.b32.xlu0 %v3273, 113
      %v3332 = vpop.permute.xlu0 %3331
      %v3333 = vsel %vm489, %v3330, %v3332
      %v3335 = vsel %vm3175, %v3265, 0
      %v3338 = vsel %vm494, %v3333, 0
      %v3341 = vsel %vm494, %v3332, 0
      %3343 = vmatprep.subr.bf16.mxu0 %v3341
      %3344 = vmatpush1.bf16.msra.mxu0 %v3338
      %3345 = vmatprep.subr.bf16.mxu0 0
      %3346 = vmatpush1.bf16.msra.mxu0 0
      %3347 = vmatprep.subr.bf16.mxu0 0
      %3348 = vmatpush1.bf16.msra.mxu0 0
      %3349 = vmatprep.subr.bf16.mxu0 0
      %3350 = vmatpush1.bf16.msra.mxu0 0
      %3351 = vmatprep.subr.bf16.mxu0 0
      %3352 = vmatpush1.bf16.msra.mxu0 0
      %3353 = vmatprep.subr.bf16.mxu0 0
      %3354 = vmatpush1.bf16.msra.mxu0 0
      %3355 = vmatprep.subr.bf16.mxu0 0
      %3356 = vmatpush1.bf16.msra.mxu0 0
      %3357 = vmatprep.subr.bf16.mxu0 0
      %3358 = vmatpush1.bf16.msra.mxu0 0
      %3359 = vmatprep.subr.bf16.mxu0 0
      %3360 = vmatpush1.bf16.msra.mxu0 0
      %3361 = vmatprep.subr.bf16.mxu0 0
      %3362 = vmatpush1.bf16.msra.mxu0 0
      %3363 = vmatprep.subr.bf16.mxu0 0
      %3364 = vmatpush1.bf16.msra.mxu0 0
      %3365 = vmatprep.subr.bf16.mxu0 0
      %3366 = vmatpush1.bf16.msra.mxu0 0
      %3367 = vmatprep.subr.bf16.mxu0 0
      %3368 = vmatpush1.bf16.msra.mxu0 0
      %3369 = vmatprep.subr.bf16.mxu0 0
      %3370 = vmatpush1.bf16.msra.mxu0 0
      %3371 = vmatprep.subr.bf16.mxu0 0
      %3372 = vmatpush1.bf16.msra.mxu0 0
      %3373 = vmatprep.subr.bf16.mxu0 0
      %3374 = vmatpush1.bf16.msra.mxu0 0
      %3375 = vmatprep.mubr.bf16.mxu0 0
      %3376 = vmatmul.mubr.bf16.gmra.mrb[0].mxu0 %v3335
      %v3377 = vpop.f32.mrb[0].mxu0
      %v3378 = vadd.f32 %v3323, %v3377
      %v3379 = vpop.f32.mrb[0].mxu0
      %v3380 = vadd.f32 %v3325, %v3379
      %v3381 = vpop.f32.mrb[0].mxu0
      %v3382 = vpop.f32.mrb[0].mxu0
      %3383 = vdwg.mxu0
      %s3384 = scalar_lea.vmem %s7, 8
      %v3385 = vld [vmem:[%s3384] sm:$0xf]
      %3386 = vrot.lane.b32.xlu0 %v3272, 111
      %v3387 = vpop.permute.xlu0 %3386
      %3388 = vrot.lane.b32.xlu0 %v3273, 111
      %v3389 = vpop.permute.xlu0 %3388
      %v3390 = vsel %vm556, %v3387, %v3389
      %v3392 = vsel %vm3175, %v3385, 0
      %v3395 = vsel %vm494, %v3390, 0
      %v3398 = vsel %vm494, %v3389, 0
      %3400 = vmatprep.subr.bf16.mxu0 %v3398
      %3401 = vmatpush1.bf16.msra.mxu0 %v3395
      %3402 = vmatprep.subr.bf16.mxu0 0
      %3403 = vmatpush1.bf16.msra.mxu0 0
      %3404 = vmatprep.subr.bf16.mxu0 0
      %3405 = vmatpush1.bf16.msra.mxu0 0
      %3406 = vmatprep.subr.bf16.mxu0 0
      %3407 = vmatpush1.bf16.msra.mxu0 0
      %3408 = vmatprep.subr.bf16.mxu0 0
      %3409 = vmatpush1.bf16.msra.mxu0 0
      %3410 = vmatprep.subr.bf16.mxu0 0
      %3411 = vmatpush1.bf16.msra.mxu0 0
      %3412 = vmatprep.subr.bf16.mxu0 0
      %3413 = vmatpush1.bf16.msra.mxu0 0
      %3414 = vmatprep.subr.bf16.mxu0 0
      %3415 = vmatpush1.bf16.msra.mxu0 0
      %3416 = vmatprep.subr.bf16.mxu0 0
      %3417 = vmatpush1.bf16.msra.mxu0 0
      %3418 = vmatprep.subr.bf16.mxu0 0
      %3419 = vmatpush1.bf16.msra.mxu0 0
      %3420 = vmatprep.subr.bf16.mxu0 0
      %3421 = vmatpush1.bf16.msra.mxu0 0
      %3422 = vmatprep.subr.bf16.mxu0 0
      %3423 = vmatpush1.bf16.msra.mxu0 0
      %3424 = vmatprep.subr.bf16.mxu0 0
      %3425 = vmatpush1.bf16.msra.mxu0 0
      %3426 = vmatprep.subr.bf16.mxu0 0
      %3427 = vmatpush1.bf16.msra.mxu0 0
      %3428 = vmatprep.subr.bf16.mxu0 0
      %3429 = vmatpush1.bf16.msra.mxu0 0
      %3430 = vmatprep.subr.bf16.mxu0 0
      %3431 = vmatpush1.bf16.msra.mxu0 0
      %3432 = vmatprep.mubr.bf16.mxu0 0
      %3433 = vmatmul.mubr.bf16.gmra.mrb[0].mxu0 %v3392
      %v3434 = vpop.f32.mrb[0].mxu0
      %v3435 = vadd.f32 0.0, %v3434
      %v3436 = vpop.f32.mrb[0].mxu0
      %v3437 = vadd.f32 0.0, %v3436
      %v3438 = vpop.f32.mrb[0].mxu0
      %v3439 = vpop.f32.mrb[0].mxu0
      %3440 = vdwg.mxu0
      %v3441 = vadd.f32 %v3378, %v3435
      %v3442 = vadd.f32 %v3380, %v3437
      %s3443 = scalar_lea.vmem %s7, 12
      %v3444 = vld [vmem:[%s3443] sm:$0xf]
      %3445 = vrot.lane.b32.xlu0 %v3272, 97
      %v3446 = vpop.permute.xlu0 %3445
      %3447 = vrot.lane.b32.xlu0 %v3273, 97
      %v3448 = vpop.permute.xlu0 %3447
      %v3449 = vsel %vm654, %v3446, %v3448
      %v3451 = vsel %vm3175, %v3444, 0
      %v3454 = vsel %vm494, %v3449, 0
      %v3457 = vsel %vm494, %v3448, 0
      %3459 = vmatprep.subr.bf16.mxu0 %v3457
      %3460 = vmatpush1.bf16.msra.mxu0 %v3454
      %3461 = vmatprep.subr.bf16.mxu0 0
      %3462 = vmatpush1.bf16.msra.mxu0 0
      %3463 = vmatprep.subr.bf16.mxu0 0
      %3464 = vmatpush1.bf16.msra.mxu0 0
      %3465 = vmatprep.subr.bf16.mxu0 0
      %3466 = vmatpush1.bf16.msra.mxu0 0
      %3467 = vmatprep.subr.bf16.mxu0 0
      %3468 = vmatpush1.bf16.msra.mxu0 0
      %3469 = vmatprep.subr.bf16.mxu0 0
      %3470 = vmatpush1.bf16.msra.mxu0 0
      %3471 = vmatprep.subr.bf16.mxu0 0
      %3472 = vmatpush1.bf16.msra.mxu0 0
      %3473 = vmatprep.subr.bf16.mxu0 0
      %3474 = vmatpush1.bf16.msra.mxu0 0
      %3475 = vmatprep.subr.bf16.mxu0 0
      %3476 = vmatpush1.bf16.msra.mxu0 0
      %3477 = vmatprep.subr.bf16.mxu0 0
      %3478 = vmatpush1.bf16.msra.mxu0 0
      %3479 = vmatprep.subr.bf16.mxu0 0
      %3480 = vmatpush1.bf16.msra.mxu0 0
      %3481 = vmatprep.subr.bf16.mxu0 0
      %3482 = vmatpush1.bf16.msra.mxu0 0
      %3483 = vmatprep.subr.bf16.mxu0 0
      %3484 = vmatpush1.bf16.msra.mxu0 0
      %3485 = vmatprep.subr.bf16.mxu0 0
      %3486 = vmatpush1.bf16.msra.mxu0 0
      %3487 = vmatprep.subr.bf16.mxu0 0
      %3488 = vmatpush1.bf16.msra.mxu0 0
      %3489 = vmatprep.subr.bf16.mxu0 0
      %3490 = vmatpush1.bf16.msra.mxu0 0
      %3491 = vmatprep.mubr.bf16.mxu0 0
      %3492 = vmatmul.mubr.bf16.gmra.mrb[0].mxu0 %v3451
      %v3493 = vpop.f32.mrb[0].mxu0
      %v3494 = vadd.f32 0.0, %v3493
      %v3495 = vpop.f32.mrb[0].mxu0
      %v3496 = vadd.f32 0.0, %v3495
      %v3497 = vpop.f32.mrb[0].mxu0
      %v3498 = vpop.f32.mrb[0].mxu0
      %3499 = vdwg.mxu0
      %v3500 = vadd.f32 %v3441, %v3494
      %v3501 = vadd.f32 %v3442, %v3496
      %s3502 = scalar_lea.vmem %s7, 16
      %v3503 = vld [vmem:[%s3502] sm:$0xf]
      %3504 = vrot.lane.b32.xlu0 %v3272, 96
      %v3505 = vpop.permute.xlu0 %3504
      %3506 = vrot.lane.b32.xlu0 %v3273, 96
      %v3507 = vpop.permute.xlu0 %3506
      %v3508 = vsel %vm681, %v3505, %v3507
      %v3510 = vsel %vm3175, %v3503, 0
      %v3513 = vsel %vm494, %v3508, 0
      %v3516 = vsel %vm494, %v3507, 0
      %3518 = vmatprep.subr.bf16.mxu0 %v3516
      %3519 = vmatpush1.bf16.msra.mxu0 %v3513
      %3520 = vmatprep.subr.bf16.mxu0 0
      %3521 = vmatpush1.bf16.msra.mxu0 0
      %3522 = vmatprep.subr.bf16.mxu0 0
      %3523 = vmatpush1.bf16.msra.mxu0 0
      %3524 = vmatprep.subr.bf16.mxu0 0
      %3525 = vmatpush1.bf16.msra.mxu0 0
      %3526 = vmatprep.subr.bf16.mxu0 0
      %3527 = vmatpush1.bf16.msra.mxu0 0
      %3528 = vmatprep.subr.bf16.mxu0 0
      %3529 = vmatpush1.bf16.msra.mxu0 0
      %3530 = vmatprep.subr.bf16.mxu0 0
      %3531 = vmatpush1.bf16.msra.mxu0 0
      %3532 = vmatprep.subr.bf16.mxu0 0
      %3533 = vmatpush1.bf16.msra.mxu0 0
      %3534 = vmatprep.subr.bf16.mxu0 0
      %3535 = vmatpush1.bf16.msra.mxu0 0
      %3536 = vmatprep.subr.bf16.mxu0 0
      %3537 = vmatpush1.bf16.msra.mxu0 0
      %3538 = vmatprep.subr.bf16.mxu0 0
      %3539 = vmatpush1.bf16.msra.mxu0 0
      %3540 = vmatprep.subr.bf16.mxu0 0
      %3541 = vmatpush1.bf16.msra.mxu0 0
      %3542 = vmatprep.subr.bf16.mxu0 0
      %3543 = vmatpush1.bf16.msra.mxu0 0
      %3544 = vmatprep.subr.bf16.mxu0 0
      %3545 = vmatpush1.bf16.msra.mxu0 0
      %3546 = vmatprep.subr.bf16.mxu0 0
      %3547 = vmatpush1.bf16.msra.mxu0 0
      %3548 = vmatprep.subr.bf16.mxu0 0
      %3549 = vmatpush1.bf16.msra.mxu0 0
      %3550 = vmatprep.mubr.bf16.mxu0 0
      %3551 = vmatmul.mubr.bf16.gmra.mrb[0].mxu0 %v3510
      %v3552 = vpop.f32.mrb[0].mxu0
      %v3553 = vadd.f32 0.0, %v3552
      %v3554 = vpop.f32.mrb[0].mxu0
      %v3555 = vadd.f32 0.0, %v3554
      %v3556 = vpop.f32.mrb[0].mxu0
      %v3557 = vpop.f32.mrb[0].mxu0
      %3558 = vdwg.mxu0
      %v3559 = vadd.f32 %v3500, %v3553
      %v3560 = vadd.f32 %v3501, %v3555
      %s3561 = scalar_lea.vmem %s7, 20
      %v3562 = vld [vmem:[%s3561] sm:$0xf]
      %3563 = vrot.lane.b32.xlu0 %v3272, 95
      %v3564 = vpop.permute.xlu0 %3563
      %3565 = vrot.lane.b32.xlu0 %v3273, 95
      %v3566 = vpop.permute.xlu0 %3565
      %v3567 = vsel %vm717, %v3564, %v3566
      %v3569 = vsel %vm3175, %v3562, 0
      %v3572 = vsel %vm494, %v3567, 0
      %v3575 = vsel %vm494, %v3566, 0
      %3577 = vmatprep.subr.bf16.mxu0 %v3575
      %3578 = vmatpush1.bf16.msra.mxu0 %v3572
      %3579 = vmatprep.subr.bf16.mxu0 0
      %3580 = vmatpush1.bf16.msra.mxu0 0
      %3581 = vmatprep.subr.bf16.mxu0 0
      %3582 = vmatpush1.bf16.msra.mxu0 0
      %3583 = vmatprep.subr.bf16.mxu0 0
      %3584 = vmatpush1.bf16.msra.mxu0 0
      %3585 = vmatprep.subr.bf16.mxu0 0
      %3586 = vmatpush1.bf16.msra.mxu0 0
      %3587 = vmatprep.subr.bf16.mxu0 0
      %3588 = vmatpush1.bf16.msra.mxu0 0
      %3589 = vmatprep.subr.bf16.mxu0 0
      %3590 = vmatpush1.bf16.msra.mxu0 0
      %3591 = vmatprep.subr.bf16.mxu0 0
      %3592 = vmatpush1.bf16.msra.mxu0 0
      %3593 = vmatprep.subr.bf16.mxu0 0
      %3594 = vmatpush1.bf16.msra.mxu0 0
      %3595 = vmatprep.subr.bf16.mxu0 0
      %3596 = vmatpush1.bf16.msra.mxu0 0
      %3597 = vmatprep.subr.bf16.mxu0 0
      %3598 = vmatpush1.bf16.msra.mxu0 0
      %3599 = vmatprep.subr.bf16.mxu0 0
      %3600 = vmatpush1.bf16.msra.mxu0 0
      %3601 = vmatprep.subr.bf16.mxu0 0
      %3602 = vmatpush1.bf16.msra.mxu0 0
      %3603 = vmatprep.subr.bf16.mxu0 0
      %3604 = vmatpush1.bf16.msra.mxu0 0
      %3605 = vmatprep.subr.bf16.mxu0 0
      %3606 = vmatpush1.bf16.msra.mxu0 0
      %3607 = vmatprep.subr.bf16.mxu0 0
      %3608 = vmatpush1.bf16.msra.mxu0 0
      %3609 = vmatprep.mubr.bf16.mxu0 0
      %3610 = vmatmul.mubr.bf16.gmra.mrb[0].mxu0 %v3569
      %v3611 = vpop.f32.mrb[0].mxu0
      %v3612 = vadd.f32 0.0, %v3611
      %v3613 = vpop.f32.mrb[0].mxu0
      %v3614 = vadd.f32 0.0, %v3613
      %v3615 = vpop.f32.mrb[0].mxu0
      %v3616 = vpop.f32.mrb[0].mxu0
      %3617 = vdwg.mxu0
      %v3618 = vadd.f32 %v3559, %v3612
      %v3619 = vadd.f32 %v3560, %v3614
      %s3620 = scalar_lea.vmem %s7, 24
      %v3621 = vld [vmem:[%s3620] sm:$0xf]
      %3622 = vrot.lane.b32.xlu0 %v3272, 81
      %v3623 = vpop.permute.xlu0 %3622
      %3624 = vrot.lane.b32.xlu0 %v3273, 81
      %v3625 = vpop.permute.xlu0 %3624
      %v3626 = vsel %vm814, %v3623, %v3625
      %v3628 = vsel %vm3175, %v3621, 0
      %v3631 = vsel %vm494, %v3626, 0
      %v3634 = vsel %vm494, %v3625, 0
      %3636 = vmatprep.subr.bf16.mxu0 %v3634
      %3637 = vmatpush1.bf16.msra.mxu0 %v3631
      %3638 = vmatprep.subr.bf16.mxu0 0
      %3639 = vmatpush1.bf16.msra.mxu0 0
      %3640 = vmatprep.subr.bf16.mxu0 0
      %3641 = vmatpush1.bf16.msra.mxu0 0
      %3642 = vmatprep.subr.bf16.mxu0 0
      %3643 = vmatpush1.bf16.msra.mxu0 0
      %3644 = vmatprep.subr.bf16.mxu0 0
      %3645 = vmatpush1.bf16.msra.mxu0 0
      %3646 = vmatprep.subr.bf16.mxu0 0
      %3647 = vmatpush1.bf16.msra.mxu0 0
      %3648 = vmatprep.subr.bf16.mxu0 0
      %3649 = vmatpush1.bf16.msra.mxu0 0
      %3650 = vmatprep.subr.bf16.mxu0 0
      %3651 = vmatpush1.bf16.msra.mxu0 0
      %3652 = vmatprep.subr.bf16.mxu0 0
      %3653 = vmatpush1.bf16.msra.mxu0 0
      %3654 = vmatprep.subr.bf16.mxu0 0
      %3655 = vmatpush1.bf16.msra.mxu0 0
      %3656 = vmatprep.subr.bf16.mxu0 0
      %3657 = vmatpush1.bf16.msra.mxu0 0
      %3658 = vmatprep.subr.bf16.mxu0 0
      %3659 = vmatpush1.bf16.msra.mxu0 0
      %3660 = vmatprep.subr.bf16.mxu0 0
      %3661 = vmatpush1.bf16.msra.mxu0 0
      %3662 = vmatprep.subr.bf16.mxu0 0
      %3663 = vmatpush1.bf16.msra.mxu0 0
      %3664 = vmatprep.subr.bf16.mxu0 0
      %3665 = vmatpush1.bf16.msra.mxu0 0
      %3666 = vmatprep.subr.bf16.mxu0 0
      %3667 = vmatpush1.bf16.msra.mxu0 0
      %3668 = vmatprep.mubr.bf16.mxu0 0
      %3669 = vmatmul.mubr.bf16.gmra.mrb[0].mxu0 %v3628
      %v3670 = vpop.f32.mrb[0].mxu0
      %v3671 = vadd.f32 0.0, %v3670
      %v3672 = vpop.f32.mrb[0].mxu0
      %v3673 = vadd.f32 0.0, %v3672
      %v3674 = vpop.f32.mrb[0].mxu0
      %v3675 = vpop.f32.mrb[0].mxu0
      %3676 = vdwg.mxu0
      %v3677 = vadd.f32 %v3618, %v3671
      %v3678 = vadd.f32 %v3619, %v3673
      %s3679 = scalar_lea.vmem %s7, 28
      %v3680 = vld [vmem:[%s3679] sm:$0xf]
      %3681 = vrot.lane.b32.xlu0 %v3272, 80
      %v3682 = vpop.permute.xlu0 %3681
      %3683 = vrot.lane.b32.xlu0 %v3273, 80
      %v3684 = vpop.permute.xlu0 %3683
      %v3685 = vsel %vm841, %v3682, %v3684
      %v3687 = vsel %vm3175, %v3680, 0
      %v3690 = vsel %vm494, %v3685, 0
      %v3693 = vsel %vm494, %v3684, 0
      %3695 = vmatprep.subr.bf16.mxu0 %v3693
      %3696 = vmatpush1.bf16.msra.mxu0 %v3690
      %3697 = vmatprep.subr.bf16.mxu0 0
      %3698 = vmatpush1.bf16.msra.mxu0 0
      %3699 = vmatprep.subr.bf16.mxu0 0
      %3700 = vmatpush1.bf16.msra.mxu0 0
      %3701 = vmatprep.subr.bf16.mxu0 0
      %3702 = vmatpush1.bf16.msra.mxu0 0
      %3703 = vmatprep.subr.bf16.mxu0 0
      %3704 = vmatpush1.bf16.msra.mxu0 0
      %3705 = vmatprep.subr.bf16.mxu0 0
      %3706 = vmatpush1.bf16.msra.mxu0 0
      %3707 = vmatprep.subr.bf16.mxu0 0
      %3708 = vmatpush1.bf16.msra.mxu0 0
      %3709 = vmatprep.subr.bf16.mxu0 0
      %3710 = vmatpush1.bf16.msra.mxu0 0
      %3711 = vmatprep.subr.bf16.mxu0 0
      %3712 = vmatpush1.bf16.msra.mxu0 0
      %3713 = vmatprep.subr.bf16.mxu0 0
      %3714 = vmatpush1.bf16.msra.mxu0 0
      %3715 = vmatprep.subr.bf16.mxu0 0
      %3716 = vmatpush1.bf16.msra.mxu0 0
      %3717 = vmatprep.subr.bf16.mxu0 0
      %3718 = vmatpush1.bf16.msra.mxu0 0
      %3719 = vmatprep.subr.bf16.mxu0 0
      %3720 = vmatpush1.bf16.msra.mxu0 0
      %3721 = vmatprep.subr.bf16.mxu0 0
      %3722 = vmatpush1.bf16.msra.mxu0 0
      %3723 = vmatprep.subr.bf16.mxu0 0
      %3724 = vmatpush1.bf16.msra.mxu0 0
      %3725 = vmatprep.subr.bf16.mxu0 0
      %3726 = vmatpush1.bf16.msra.mxu0 0
      %3727 = vmatprep.mubr.bf16.mxu0 0
      %3728 = vmatmul.mubr.bf16.gmra.mrb[0].mxu0 %v3687
      %v3729 = vpop.f32.mrb[0].mxu0
      %v3730 = vadd.f32 0.0, %v3729
      %v3731 = vpop.f32.mrb[0].mxu0
      %v3732 = vadd.f32 0.0, %v3731
      %v3733 = vpop.f32.mrb[0].mxu0
      %v3734 = vpop.f32.mrb[0].mxu0
      %3735 = vdwg.mxu0
      %v3736 = vadd.f32 %v3677, %v3730
      %v3737 = vadd.f32 %v3678, %v3732
      %s3738 = scalar_lea.vmem %s7, 32
      %v3739 = vld [vmem:[%s3738] sm:$0xf]
      %3740 = vrot.lane.b32.xlu0 %v3272, 79
      %v3741 = vpop.permute.xlu0 %3740
      %3742 = vrot.lane.b32.xlu0 %v3273, 79
      %v3743 = vpop.permute.xlu0 %3742
      %v3744 = vsel %vm860, %v3741, %v3743
      %v3746 = vsel %vm3175, %v3739, 0
      %v3749 = vsel %vm494, %v3744, 0
      %v3752 = vsel %vm494, %v3743, 0
      %3754 = vmatprep.subr.bf16.mxu0 %v3752
      %3755 = vmatpush1.bf16.msra.mxu0 %v3749
      %3756 = vmatprep.subr.bf16.mxu0 0
      %3757 = vmatpush1.bf16.msra.mxu0 0
      %3758 = vmatprep.subr.bf16.mxu0 0
      %3759 = vmatpush1.bf16.msra.mxu0 0
      %3760 = vmatprep.subr.bf16.mxu0 0
      %3761 = vmatpush1.bf16.msra.mxu0 0
      %3762 = vmatprep.subr.bf16.mxu0 0
      %3763 = vmatpush1.bf16.msra.mxu0 0
      %3764 = vmatprep.subr.bf16.mxu0 0
      %3765 = vmatpush1.bf16.msra.mxu0 0
      %3766 = vmatprep.subr.bf16.mxu0 0
      %3767 = vmatpush1.bf16.msra.mxu0 0
      %3768 = vmatprep.subr.bf16.mxu0 0
      %3769 = vmatpush1.bf16.msra.mxu0 0
      %3770 = vmatprep.subr.bf16.mxu0 0
      %3771 = vmatpush1.bf16.msra.mxu0 0
      %3772 = vmatprep.subr.bf16.mxu0 0
      %3773 = vmatpush1.bf16.msra.mxu0 0
      %3774 = vmatprep.subr.bf16.mxu0 0
      %3775 = vmatpush1.bf16.msra.mxu0 0
      %3776 = vmatprep.subr.bf16.mxu0 0
      %3777 = vmatpush1.bf16.msra.mxu0 0
      %3778 = vmatprep.subr.bf16.mxu0 0
      %3779 = vmatpush1.bf16.msra.mxu0 0
      %3780 = vmatprep.subr.bf16.mxu0 0
      %3781 = vmatpush1.bf16.msra.mxu0 0
      %3782 = vmatprep.subr.bf16.mxu0 0
      %3783 = vmatpush1.bf16.msra.mxu0 0
      %3784 = vmatprep.subr.bf16.mxu0 0
      %3785 = vmatpush1.bf16.msra.mxu0 0
      %3786 = vmatprep.mubr.bf16.mxu0 0
      %3787 = vmatmul.mubr.bf16.gmra.mrb[0].mxu0 %v3746
      %v3788 = vpop.f32.mrb[0].mxu0
      %v3789 = vadd.f32 0.0, %v3788
      %v3790 = vpop.f32.mrb[0].mxu0
      %v3791 = vadd.f32 0.0, %v3790
      %v3792 = vpop.f32.mrb[0].mxu0
      %v3793 = vpop.f32.mrb[0].mxu0
      %3794 = vdwg.mxu0
      %v3795 = vadd.f32 %v3736, %v3789
      %v3796 = vadd.f32 %v3737, %v3791
      %v3797 = vld [vmem:[%s8] sm:$0xff]
      %3799 = vset.pattern.permute.xlu0 0
      %3800 = vperm.xlu0 %3799, %v3797
      %v3801 = vpop.permute.xlu0 %3800
      %v3803 = vmul.f32 %v3795, %v3801
      %v3804 = vmul.f32 %v3796, %v3801
      %v3805 = vld [vmem:[%s9] sm:$0xff]
      %3807 = vset.pattern.permute.xlu0 0
      %3808 = vperm.xlu0 %3807, %v3805
      %v3809 = vpop.permute.xlu0 %3808
      %v3811 = vadd.f32 %v3803, %v3809
      %v3812 = vadd.f32 %v3804, %v3809
      %v3813 = vmax.f32 %v3811, 0.0
      %v3814 = vmax.f32 %v3812, 0.0
      %v3815 = vmul.f32 %v3813, %v2958
      %v3816 = vmul.f32 %v3814, %v2962
      %v3817 = vadd.f32 %v2965, %v3815
      %v3818 = vadd.f32 %v2966, %v3816
      %v3819 = vpack.c.bf16 %v3817, %v3817
      %v3820 = vpack.c.bf16 %v3818, %v3818
      %v3823 = vunpack.c.l.b16 %v3819
      %v3824 = vunpack.c.l.b16 %v3820
      %v3825 = vpack.c.b16 %v3824, %v3823
      %3826 = vrot.lane.b32.xlu0 %v3825, 32
      %v3827 = vpop.permute.xlu0 %3826
      %v3828 = vrot.slane %v3827, 4
      %v3829 = vsel %vm3258, %v3828, %v3827
      %3831 = vst.msk [vmem:[#allocation3] sm:$0xff] %vm3263, %v3829
      %v3832 = vld [vmem:[%s7] sm:$0xf]
      %v3833 = vld [vmem:[#allocation3] sm:$0xff]
      %v3834 = vld [vmem:[%s3267] sm:$0xf]
      %v3836 = vunpack.c.l.b16 %v3833
      %v3837 = vunpack.c.h.b16 %v3833
      %v3838 = vpack.c.b16 %v3836, %v3836
      %v3839 = vpack.c.b16 %v3837, %v3837
      %3840 = vrot.lane.b32.xlu0 %v3838, 112
      %v3841 = vpop.permute.xlu0 %3840
      %3842 = vrot.lane.b32.xlu0 %v3839, 112
      %v3843 = vpop.permute.xlu0 %3842
      %v3844 = vsel %vm519, %v3841, %v3843
      %v3846 = vsel %vm3175, %v3834, 0
      %v3849 = vsel %vm494, %v3844, 0
      %v3852 = vsel %vm494, %v3843, 0
      %3854 = vmatprep.subr.bf16.mxu0 %v3852
      %3855 = vmatpush1.bf16.msra.mxu0 %v3849
      %3856 = vmatprep.subr.bf16.mxu0 0
      %3857 = vmatpush1.bf16.msra.mxu0 0
      %3858 = vmatprep.subr.bf16.mxu0 0
      %3859 = vmatpush1.bf16.msra.mxu0 0
      %3860 = vmatprep.subr.bf16.mxu0 0
      %3861 = vmatpush1.bf16.msra.mxu0 0
      %3862 = vmatprep.subr.bf16.mxu0 0
      %3863 = vmatpush1.bf16.msra.mxu0 0
      %3864 = vmatprep.subr.bf16.mxu0 0
      %3865 = vmatpush1.bf16.msra.mxu0 0
      %3866 = vmatprep.subr.bf16.mxu0 0
      %3867 = vmatpush1.bf16.msra.mxu0 0
      %3868 = vmatprep.subr.bf16.mxu0 0
      %3869 = vmatpush1.bf16.msra.mxu0 0
      %3870 = vmatprep.subr.bf16.mxu0 0
      %3871 = vmatpush1.bf16.msra.mxu0 0
      %3872 = vmatprep.subr.bf16.mxu0 0
      %3873 = vmatpush1.bf16.msra.mxu0 0
      %3874 = vmatprep.subr.bf16.mxu0 0
      %3875 = vmatpush1.bf16.msra.mxu0 0
      %3876 = vmatprep.subr.bf16.mxu0 0
      %3877 = vmatpush1.bf16.msra.mxu0 0
      %3878 = vmatprep.subr.bf16.mxu0 0
      %3879 = vmatpush1.bf16.msra.mxu0 0
      %3880 = vmatprep.subr.bf16.mxu0 0
      %3881 = vmatpush1.bf16.msra.mxu0 0
      %3882 = vmatprep.subr.bf16.mxu0 0
      %3883 = vmatpush1.bf16.msra.mxu0 0
      %3884 = vmatprep.subr.bf16.mxu0 0
      %3885 = vmatpush1.bf16.msra.mxu0 0
      %3886 = vmatprep.mubr.bf16.mxu0 0
      %3887 = vmatmul.mubr.bf16.gmra.mrb[0].mxu0 %v3846
      %v3888 = vpop.f32.mrb[0].mxu0
      %v3889 = vadd.f32 0.0, %v3888
      %v3890 = vpop.f32.mrb[0].mxu0
      %v3891 = vadd.f32 0.0, %v3890
      %v3892 = vpop.f32.mrb[0].mxu0
      %v3893 = vpop.f32.mrb[0].mxu0
      %3894 = vdwg.mxu0
      %3895 = vrot.lane.b32.xlu0 %v3838, 113
      %v3896 = vpop.permute.xlu0 %3895
      %3897 = vrot.lane.b32.xlu0 %v3839, 113
      %v3898 = vpop.permute.xlu0 %3897
      %v3899 = vsel %vm489, %v3896, %v3898
      %v3901 = vsel %vm3175, %v3832, 0
      %v3904 = vsel %vm494, %v3899, 0
      %v3907 = vsel %vm494, %v3898, 0
      %3909 = vmatprep.subr.bf16.mxu0 %v3907
      %3910 = vmatpush1.bf16.msra.mxu0 %v3904
      %3911 = vmatprep.subr.bf16.mxu0 0
      %3912 = vmatpush1.bf16.msra.mxu0 0
      %3913 = vmatprep.subr.bf16.mxu0 0
      %3914 = vmatpush1.bf16.msra.mxu0 0
      %3915 = vmatprep.subr.bf16.mxu0 0
      %3916 = vmatpush1.bf16.msra.mxu0 0
      %3917 = vmatprep.subr.bf16.mxu0 0
      %3918 = vmatpush1.bf16.msra.mxu0 0
      %3919 = vmatprep.subr.bf16.mxu0 0
      %3920 = vmatpush1.bf16.msra.mxu0 0
      %3921 = vmatprep.subr.bf16.mxu0 0
      %3922 = vmatpush1.bf16.msra.mxu0 0
      %3923 = vmatprep.subr.bf16.mxu0 0
      %3924 = vmatpush1.bf16.msra.mxu0 0
      %3925 = vmatprep.subr.bf16.mxu0 0
      %3926 = vmatpush1.bf16.msra.mxu0 0
      %3927 = vmatprep.subr.bf16.mxu0 0
      %3928 = vmatpush1.bf16.msra.mxu0 0
      %3929 = vmatprep.subr.bf16.mxu0 0
      %3930 = vmatpush1.bf16.msra.mxu0 0
      %3931 = vmatprep.subr.bf16.mxu0 0
      %3932 = vmatpush1.bf16.msra.mxu0 0
      %3933 = vmatprep.subr.bf16.mxu0 0
      %3934 = vmatpush1.bf16.msra.mxu0 0
      %3935 = vmatprep.subr.bf16.mxu0 0
      %3936 = vmatpush1.bf16.msra.mxu0 0
      %3937 = vmatprep.subr.bf16.mxu0 0
      %3938 = vmatpush1.bf16.msra.mxu0 0
      %3939 = vmatprep.subr.bf16.mxu0 0
      %3940 = vmatpush1.bf16.msra.mxu0 0
      %3941 = vmatprep.mubr.bf16.mxu0 0
      %3942 = vmatmul.mubr.bf16.gmra.mrb[0].mxu0 %v3901
      %v3943 = vpop.f32.mrb[0].mxu0
      %v3944 = vadd.f32 %v3889, %v3943
      %v3945 = vpop.f32.mrb[0].mxu0
      %v3946 = vadd.f32 %v3891, %v3945
      %v3947 = vpop.f32.mrb[0].mxu0
      %v3948 = vpop.f32.mrb[0].mxu0
      %3949 = vdwg.mxu0
      %v3950 = vld [vmem:[%s3384] sm:$0xf]
      %3951 = vrot.lane.b32.xlu0 %v3838, 111
      %v3952 = vpop.permute.xlu0 %3951
      %3953 = vrot.lane.b32.xlu0 %v3839, 111
      %v3954 = vpop.permute.xlu0 %3953
      %v3955 = vsel %vm556, %v3952, %v3954
      %v3957 = vsel %vm3175, %v3950, 0
      %v3960 = vsel %vm494, %v3955, 0
      %v3963 = vsel %vm494, %v3954, 0
      %3965 = vmatprep.subr.bf16.mxu0 %v3963
      %3966 = vmatpush1.bf16.msra.mxu0 %v3960
      %3967 = vmatprep.subr.bf16.mxu0 0
      %3968 = vmatpush1.bf16.msra.mxu0 0
      %3969 = vmatprep.subr.bf16.mxu0 0
      %3970 = vmatpush1.bf16.msra.mxu0 0
      %3971 = vmatprep.subr.bf16.mxu0 0
      %3972 = vmatpush1.bf16.msra.mxu0 0
      %3973 = vmatprep.subr.bf16.mxu0 0
      %3974 = vmatpush1.bf16.msra.mxu0 0
      %3975 = vmatprep.subr.bf16.mxu0 0
      %3976 = vmatpush1.bf16.msra.mxu0 0
      %3977 = vmatprep.subr.bf16.mxu0 0
      %3978 = vmatpush1.bf16.msra.mxu0 0
      %3979 = vmatprep.subr.bf16.mxu0 0
      %3980 = vmatpush1.bf16.msra.mxu0 0
      %3981 = vmatprep.subr.bf16.mxu0 0
      %3982 = vmatpush1.bf16.msra.mxu0 0
      %3983 = vmatprep.subr.bf16.mxu0 0
      %3984 = vmatpush1.bf16.msra.mxu0 0
      %3985 = vmatprep.subr.bf16.mxu0 0
      %3986 = vmatpush1.bf16.msra.mxu0 0
      %3987 = vmatprep.subr.bf16.mxu0 0
      %3988 = vmatpush1.bf16.msra.mxu0 0
      %3989 = vmatprep.subr.bf16.mxu0 0
      %3990 = vmatpush1.bf16.msra.mxu0 0
      %3991 = vmatprep.subr.bf16.mxu0 0
      %3992 = vmatpush1.bf16.msra.mxu0 0
      %3993 = vmatprep.subr.bf16.mxu0 0
      %3994 = vmatpush1.bf16.msra.mxu0 0
      %3995 = vmatprep.subr.bf16.mxu0 0
      %3996 = vmatpush1.bf16.msra.mxu0 0
      %3997 = vmatprep.mubr.bf16.mxu0 0
      %3998 = vmatmul.mubr.bf16.gmra.mrb[0].mxu0 %v3957
      %v3999 = vpop.f32.mrb[0].mxu0
      %v4000 = vadd.f32 0.0, %v3999
      %v4001 = vpop.f32.mrb[0].mxu0
      %v4002 = vadd.f32 0.0, %v4001
      %v4003 = vpop.f32.mrb[0].mxu0
      %v4004 = vpop.f32.mrb[0].mxu0
      %4005 = vdwg.mxu0
      %v4006 = vadd.f32 %v3944, %v4000
      %v4007 = vadd.f32 %v3946, %v4002
      %v4008 = vld [vmem:[%s3443] sm:$0xf]
      %4009 = vrot.lane.b32.xlu0 %v3838, 97
      %v4010 = vpop.permute.xlu0 %4009
      %4011 = vrot.lane.b32.xlu0 %v3839, 97
      %v4012 = vpop.permute.xlu0 %4011
      %v4013 = vsel %vm654, %v4010, %v4012
      %v4015 = vsel %vm3175, %v4008, 0
      %v4018 = vsel %vm494, %v4013, 0
      %v4021 = vsel %vm494, %v4012, 0
      %4023 = vmatprep.subr.bf16.mxu0 %v4021
      %4024 = vmatpush1.bf16.msra.mxu0 %v4018
      %4025 = vmatprep.subr.bf16.mxu0 0
      %4026 = vmatpush1.bf16.msra.mxu0 0
      %4027 = vmatprep.subr.bf16.mxu0 0
      %4028 = vmatpush1.bf16.msra.mxu0 0
      %4029 = vmatprep.subr.bf16.mxu0 0
      %4030 = vmatpush1.bf16.msra.mxu0 0
      %4031 = vmatprep.subr.bf16.mxu0 0
      %4032 = vmatpush1.bf16.msra.mxu0 0
      %4033 = vmatprep.subr.bf16.mxu0 0
      %4034 = vmatpush1.bf16.msra.mxu0 0
      %4035 = vmatprep.subr.bf16.mxu0 0
      %4036 = vmatpush1.bf16.msra.mxu0 0
      %4037 = vmatprep.subr.bf16.mxu0 0
      %4038 = vmatpush1.bf16.msra.mxu0 0
      %4039 = vmatprep.subr.bf16.mxu0 0
      %4040 = vmatpush1.bf16.msra.mxu0 0
      %4041 = vmatprep.subr.bf16.mxu0 0
      %4042 = vmatpush1.bf16.msra.mxu0 0
      %4043 = vmatprep.subr.bf16.mxu0 0
      %4044 = vmatpush1.bf16.msra.mxu0 0
      %4045 = vmatprep.subr.bf16.mxu0 0
      %4046 = vmatpush1.bf16.msra.mxu0 0
      %4047 = vmatprep.subr.bf16.mxu0 0
      %4048 = vmatpush1.bf16.msra.mxu0 0
      %4049 = vmatprep.subr.bf16.mxu0 0
      %4050 = vmatpush1.bf16.msra.mxu0 0
      %4051 = vmatprep.subr.bf16.mxu0 0
      %4052 = vmatpush1.bf16.msra.mxu0 0
      %4053 = vmatprep.subr.bf16.mxu0 0
      %4054 = vmatpush1.bf16.msra.mxu0 0
      %4055 = vmatprep.mubr.bf16.mxu0 0
      %4056 = vmatmul.mubr.bf16.gmra.mrb[0].mxu0 %v4015
      %v4057 = vpop.f32.mrb[0].mxu0
      %v4058 = vadd.f32 0.0, %v4057
      %v4059 = vpop.f32.mrb[0].mxu0
      %v4060 = vadd.f32 0.0, %v4059
      %v4061 = vpop.f32.mrb[0].mxu0
      %v4062 = vpop.f32.mrb[0].mxu0
      %4063 = vdwg.mxu0
      %v4064 = vadd.f32 %v4006, %v4058
      %v4065 = vadd.f32 %v4007, %v4060
      %v4066 = vld [vmem:[%s3502] sm:$0xf]
      %4067 = vrot.lane.b32.xlu0 %v3838, 96
      %v4068 = vpop.permute.xlu0 %4067
      %4069 = vrot.lane.b32.xlu0 %v3839, 96
      %v4070 = vpop.permute.xlu0 %4069
      %v4071 = vsel %vm681, %v4068, %v4070
      %v4073 = vsel %vm3175, %v4066, 0
      %v4076 = vsel %vm494, %v4071, 0
      %v4079 = vsel %vm494, %v4070, 0
      %4081 = vmatprep.subr.bf16.mxu0 %v4079
      %4082 = vmatpush1.bf16.msra.mxu0 %v4076
      %4083 = vmatprep.subr.bf16.mxu0 0
      %4084 = vmatpush1.bf16.msra.mxu0 0
      %4085 = vmatprep.subr.bf16.mxu0 0
      %4086 = vmatpush1.bf16.msra.mxu0 0
      %4087 = vmatprep.subr.bf16.mxu0 0
      %4088 = vmatpush1.bf16.msra.mxu0 0
      %4089 = vmatprep.subr.bf16.mxu0 0
      %4090 = vmatpush1.bf16.msra.mxu0 0
      %4091 = vmatprep.subr.bf16.mxu0 0
      %4092 = vmatpush1.bf16.msra.mxu0 0
      %4093 = vmatprep.subr.bf16.mxu0 0
      %4094 = vmatpush1.bf16.msra.mxu0 0
      %4095 = vmatprep.subr.bf16.mxu0 0
      %4096 = vmatpush1.bf16.msra.mxu0 0
      %4097 = vmatprep.subr.bf16.mxu0 0
      %4098 = vmatpush1.bf16.msra.mxu0 0
      %4099 = vmatprep.subr.bf16.mxu0 0
      %4100 = vmatpush1.bf16.msra.mxu0 0
      %4101 = vmatprep.subr.bf16.mxu0 0
      %4102 = vmatpush1.bf16.msra.mxu0 0
      %4103 = vmatprep.subr.bf16.mxu0 0
      %4104 = vmatpush1.bf16.msra.mxu0 0
      %4105 = vmatprep.subr.bf16.mxu0 0
      %4106 = vmatpush1.bf16.msra.mxu0 0
      %4107 = vmatprep.subr.bf16.mxu0 0
      %4108 = vmatpush1.bf16.msra.mxu0 0
      %4109 = vmatprep.subr.bf16.mxu0 0
      %4110 = vmatpush1.bf16.msra.mxu0 0
      %4111 = vmatprep.subr.bf16.mxu0 0
      %4112 = vmatpush1.bf16.msra.mxu0 0
      %4113 = vmatprep.mubr.bf16.mxu0 0
      %4114 = vmatmul.mubr.bf16.gmra.mrb[0].mxu0 %v4073
      %v4115 = vpop.f32.mrb[0].mxu0
      %v4116 = vadd.f32 0.0, %v4115
      %v4117 = vpop.f32.mrb[0].mxu0
      %v4118 = vadd.f32 0.0, %v4117
      %v4119 = vpop.f32.mrb[0].mxu0
      %v4120 = vpop.f32.mrb[0].mxu0
      %4121 = vdwg.mxu0
      %v4122 = vadd.f32 %v4064, %v4116
      %v4123 = vadd.f32 %v4065, %v4118
      %v4124 = vld [vmem:[%s3561] sm:$0xf]
      %4125 = vrot.lane.b32.xlu0 %v3838, 95
      %v4126 = vpop.permute.xlu0 %4125
      %4127 = vrot.lane.b32.xlu0 %v3839, 95
      %v4128 = vpop.permute.xlu0 %4127
      %v4129 = vsel %vm717, %v4126, %v4128
      %v4131 = vsel %vm3175, %v4124, 0
      %v4134 = vsel %vm494, %v4129, 0
      %v4137 = vsel %vm494, %v4128, 0
      %4139 = vmatprep.subr.bf16.mxu0 %v4137
      %4140 = vmatpush1.bf16.msra.mxu0 %v4134
      %4141 = vmatprep.subr.bf16.mxu0 0
      %4142 = vmatpush1.bf16.msra.mxu0 0
      %4143 = vmatprep.subr.bf16.mxu0 0
      %4144 = vmatpush1.bf16.msra.mxu0 0
      %4145 = vmatprep.subr.bf16.mxu0 0
      %4146 = vmatpush1.bf16.msra.mxu0 0
      %4147 = vmatprep.subr.bf16.mxu0 0
      %4148 = vmatpush1.bf16.msra.mxu0 0
      %4149 = vmatprep.subr.bf16.mxu0 0
      %4150 = vmatpush1.bf16.msra.mxu0 0
      %4151 = vmatprep.subr.bf16.mxu0 0
      %4152 = vmatpush1.bf16.msra.mxu0 0
      %4153 = vmatprep.subr.bf16.mxu0 0
      %4154 = vmatpush1.bf16.msra.mxu0 0
      %4155 = vmatprep.subr.bf16.mxu0 0
      %4156 = vmatpush1.bf16.msra.mxu0 0
      %4157 = vmatprep.subr.bf16.mxu0 0
      %4158 = vmatpush1.bf16.msra.mxu0 0
      %4159 = vmatprep.subr.bf16.mxu0 0
      %4160 = vmatpush1.bf16.msra.mxu0 0
      %4161 = vmatprep.subr.bf16.mxu0 0
      %4162 = vmatpush1.bf16.msra.mxu0 0
      %4163 = vmatprep.subr.bf16.mxu0 0
      %4164 = vmatpush1.bf16.msra.mxu0 0
      %4165 = vmatprep.subr.bf16.mxu0 0
      %4166 = vmatpush1.bf16.msra.mxu0 0
      %4167 = vmatprep.subr.bf16.mxu0 0
      %4168 = vmatpush1.bf16.msra.mxu0 0
      %4169 = vmatprep.subr.bf16.mxu0 0
      %4170 = vmatpush1.bf16.msra.mxu0 0
      %4171 = vmatprep.mubr.bf16.mxu0 0
      %4172 = vmatmul.mubr.bf16.gmra.mrb[0].mxu0 %v4131
      %v4173 = vpop.f32.mrb[0].mxu0
      %v4174 = vadd.f32 0.0, %v4173
      %v4175 = vpop.f32.mrb[0].mxu0
      %v4176 = vadd.f32 0.0, %v4175
      %v4177 = vpop.f32.mrb[0].mxu0
      %v4178 = vpop.f32.mrb[0].mxu0
      %4179 = vdwg.mxu0
      %v4180 = vadd.f32 %v4122, %v4174
      %v4181 = vadd.f32 %v4123, %v4176
      %v4182 = vld [vmem:[%s3620] sm:$0xf]
      %4183 = vrot.lane.b32.xlu0 %v3838, 81
      %v4184 = vpop.permute.xlu0 %4183
      %4185 = vrot.lane.b32.xlu0 %v3839, 81
      %v4186 = vpop.permute.xlu0 %4185
      %v4187 = vsel %vm814, %v4184, %v4186
      %v4189 = vsel %vm3175, %v4182, 0
      %v4192 = vsel %vm494, %v4187, 0
      %v4195 = vsel %vm494, %v4186, 0
      %4197 = vmatprep.subr.bf16.mxu0 %v4195
      %4198 = vmatpush1.bf16.msra.mxu0 %v4192
      %4199 = vmatprep.subr.bf16.mxu0 0
      %4200 = vmatpush1.bf16.msra.mxu0 0
      %4201 = vmatprep.subr.bf16.mxu0 0
      %4202 = vmatpush1.bf16.msra.mxu0 0
      %4203 = vmatprep.subr.bf16.mxu0 0
      %4204 = vmatpush1.bf16.msra.mxu0 0
      %4205 = vmatprep.subr.bf16.mxu0 0
      %4206 = vmatpush1.bf16.msra.mxu0 0
      %4207 = vmatprep.subr.bf16.mxu0 0
      %4208 = vmatpush1.bf16.msra.mxu0 0
      %4209 = vmatprep.subr.bf16.mxu0 0
      %4210 = vmatpush1.bf16.msra.mxu0 0
      %4211 = vmatprep.subr.bf16.mxu0 0
      %4212 = vmatpush1.bf16.msra.mxu0 0
      %4213 = vmatprep.subr.bf16.mxu0 0
      %4214 = vmatpush1.bf16.msra.mxu0 0
      %4215 = vmatprep.subr.bf16.mxu0 0
      %4216 = vmatpush1.bf16.msra.mxu0 0
      %4217 = vmatprep.subr.bf16.mxu0 0
      %4218 = vmatpush1.bf16.msra.mxu0 0
      %4219 = vmatprep.subr.bf16.mxu0 0
      %4220 = vmatpush1.bf16.msra.mxu0 0
      %4221 = vmatprep.subr.bf16.mxu0 0
      %4222 = vmatpush1.bf16.msra.mxu0 0
      %4223 = vmatprep.subr.bf16.mxu0 0
      %4224 = vmatpush1.bf16.msra.mxu0 0
      %4225 = vmatprep.subr.bf16.mxu0 0
      %4226 = vmatpush1.bf16.msra.mxu0 0
      %4227 = vmatprep.subr.bf16.mxu0 0
      %4228 = vmatpush1.bf16.msra.mxu0 0
      %4229 = vmatprep.mubr.bf16.mxu0 0
      %4230 = vmatmul.mubr.bf16.gmra.mrb[0].mxu0 %v4189
      %v4231 = vpop.f32.mrb[0].mxu0
      %v4232 = vadd.f32 0.0, %v4231
      %v4233 = vpop.f32.mrb[0].mxu0
      %v4234 = vadd.f32 0.0, %v4233
      %v4235 = vpop.f32.mrb[0].mxu0
      %v4236 = vpop.f32.mrb[0].mxu0
      %4237 = vdwg.mxu0
      %v4238 = vadd.f32 %v4180, %v4232
      %v4239 = vadd.f32 %v4181, %v4234
      %v4240 = vld [vmem:[%s3679] sm:$0xf]
      %4241 = vrot.lane.b32.xlu0 %v3838, 80
      %v4242 = vpop.permute.xlu0 %4241
      %4243 = vrot.lane.b32.xlu0 %v3839, 80
      %v4244 = vpop.permute.xlu0 %4243
      %v4245 = vsel %vm841, %v4242, %v4244
      %v4247 = vsel %vm3175, %v4240, 0
      %v4250 = vsel %vm494, %v4245, 0
      %v4253 = vsel %vm494, %v4244, 0
      %4255 = vmatprep.subr.bf16.mxu0 %v4253
      %4256 = vmatpush1.bf16.msra.mxu0 %v4250
      %4257 = vmatprep.subr.bf16.mxu0 0
      %4258 = vmatpush1.bf16.msra.mxu0 0
      %4259 = vmatprep.subr.bf16.mxu0 0
      %4260 = vmatpush1.bf16.msra.mxu0 0
      %4261 = vmatprep.subr.bf16.mxu0 0
      %4262 = vmatpush1.bf16.msra.mxu0 0
      %4263 = vmatprep.subr.bf16.mxu0 0
      %4264 = vmatpush1.bf16.msra.mxu0 0
      %4265 = vmatprep.subr.bf16.mxu0 0
      %4266 = vmatpush1.bf16.msra.mxu0 0
      %4267 = vmatprep.subr.bf16.mxu0 0
      %4268 = vmatpush1.bf16.msra.mxu0 0
      %4269 = vmatprep.subr.bf16.mxu0 0
      %4270 = vmatpush1.bf16.msra.mxu0 0
      %4271 = vmatprep.subr.bf16.mxu0 0
      %4272 = vmatpush1.bf16.msra.mxu0 0
      %4273 = vmatprep.subr.bf16.mxu0 0
      %4274 = vmatpush1.bf16.msra.mxu0 0
      %4275 = vmatprep.subr.bf16.mxu0 0
      %4276 = vmatpush1.bf16.msra.mxu0 0
      %4277 = vmatprep.subr.bf16.mxu0 0
      %4278 = vmatpush1.bf16.msra.mxu0 0
      %4279 = vmatprep.subr.bf16.mxu0 0
      %4280 = vmatpush1.bf16.msra.mxu0 0
      %4281 = vmatprep.subr.bf16.mxu0 0
      %4282 = vmatpush1.bf16.msra.mxu0 0
      %4283 = vmatprep.subr.bf16.mxu0 0
      %4284 = vmatpush1.bf16.msra.mxu0 0
      %4285 = vmatprep.subr.bf16.mxu0 0
      %4286 = vmatpush1.bf16.msra.mxu0 0
      %4287 = vmatprep.mubr.bf16.mxu0 0
      %4288 = vmatmul.mubr.bf16.gmra.mrb[0].mxu0 %v4247
      %v4289 = vpop.f32.mrb[0].mxu0
      %v4290 = vadd.f32 0.0, %v4289
      %v4291 = vpop.f32.mrb[0].mxu0
      %v4292 = vadd.f32 0.0, %v4291
      %v4293 = vpop.f32.mrb[0].mxu0
      %v4294 = vpop.f32.mrb[0].mxu0
      %4295 = vdwg.mxu0
      %v4296 = vadd.f32 %v4238, %v4290
      %v4297 = vadd.f32 %v4239, %v4292
      %v4298 = vld [vmem:[%s3738] sm:$0xf]
      %4299 = vrot.lane.b32.xlu0 %v3838, 79
      %v4300 = vpop.permute.xlu0 %4299
      %4301 = vrot.lane.b32.xlu0 %v3839, 79
      %v4302 = vpop.permute.xlu0 %4301
      %v4303 = vsel %vm860, %v4300, %v4302
      %v4305 = vsel %vm3175, %v4298, 0
      %v4308 = vsel %vm494, %v4303, 0
      %v4311 = vsel %vm494, %v4302, 0
      %4313 = vmatprep.subr.bf16.mxu0 %v4311
      %4314 = vmatpush1.bf16.msra.mxu0 %v4308
      %4315 = vmatprep.subr.bf16.mxu0 0
      %4316 = vmatpush1.bf16.msra.mxu0 0
      %4317 = vmatprep.subr.bf16.mxu0 0
      %4318 = vmatpush1.bf16.msra.mxu0 0
      %4319 = vmatprep.subr.bf16.mxu0 0
      %4320 = vmatpush1.bf16.msra.mxu0 0
      %4321 = vmatprep.subr.bf16.mxu0 0
      %4322 = vmatpush1.bf16.msra.mxu0 0
      %4323 = vmatprep.subr.bf16.mxu0 0
      %4324 = vmatpush1.bf16.msra.mxu0 0
      %4325 = vmatprep.subr.bf16.mxu0 0
      %4326 = vmatpush1.bf16.msra.mxu0 0
      %4327 = vmatprep.subr.bf16.mxu0 0
      %4328 = vmatpush1.bf16.msra.mxu0 0
      %4329 = vmatprep.subr.bf16.mxu0 0
      %4330 = vmatpush1.bf16.msra.mxu0 0
      %4331 = vmatprep.subr.bf16.mxu0 0
      %4332 = vmatpush1.bf16.msra.mxu0 0
      %4333 = vmatprep.subr.bf16.mxu0 0
      %4334 = vmatpush1.bf16.msra.mxu0 0
      %4335 = vmatprep.subr.bf16.mxu0 0
      %4336 = vmatpush1.bf16.msra.mxu0 0
      %4337 = vmatprep.subr.bf16.mxu0 0
      %4338 = vmatpush1.bf16.msra.mxu0 0
      %4339 = vmatprep.subr.bf16.mxu0 0
      %4340 = vmatpush1.bf16.msra.mxu0 0
      %4341 = vmatprep.subr.bf16.mxu0 0
      %4342 = vmatpush1.bf16.msra.mxu0 0
      %4343 = vmatprep.subr.bf16.mxu0 0
      %4344 = vmatpush1.bf16.msra.mxu0 0
      %4345 = vmatprep.mubr.bf16.mxu0 0
      %4346 = vmatmul.mubr.bf16.gmra.mrb[0].mxu0 %v4305
      %v4347 = vpop.f32.mrb[0].mxu0
      %v4348 = vadd.f32 0.0, %v4347
      %v4349 = vpop.f32.mrb[0].mxu0
      %v4350 = vadd.f32 0.0, %v4349
      %v4351 = vpop.f32.mrb[0].mxu0
      %v4352 = vpop.f32.mrb[0].mxu0
      %4353 = vdwg.mxu0
      %v4354 = vadd.f32 %v4296, %v4348
      %v4355 = vadd.f32 %v4297, %v4350
      %v4356 = vld [vmem:[%s8] sm:$0xff]
      %4358 = vset.pattern.permute.xlu0 0
      %4359 = vperm.xlu0 %4358, %v4356
      %v4360 = vpop.permute.xlu0 %4359
      %v4362 = vmul.f32 %v4354, %v4360
      %v4363 = vmul.f32 %v4355, %v4360
      %v4364 = vld [vmem:[%s9] sm:$0xff]
      %4366 = vset.pattern.permute.xlu0 0
      %4367 = vperm.xlu0 %4366, %v4364
      %v4368 = vpop.permute.xlu0 %4367
      %v4370 = vadd.f32 %v4362, %v4368
      %v4371 = vadd.f32 %v4363, %v4368
      %v4372 = vmax.f32 %v4370, 0.0
      %v4373 = vmax.f32 %v4371, 0.0
      %v4374 = vld [vmem:[%s11] sm:$0xff]
      %v4375 = vld [vmem:[%s11 + $0x8] sm:$0xff]
      %v4376 = vld [vmem:[%s11 + $0x10] sm:$0xff]
      %v4377 = vld [vmem:[%s11 + $0x18] sm:$0xff]
      %v4378 = vld [vmem:[%s11 + $0x20] sm:$0xff]
      %v4379 = vld [vmem:[%s11 + $0x28] sm:$0xff]
      %v4380 = vld [vmem:[%s11 + $0x30] sm:$0xff]
      %v4381 = vld [vmem:[%s11 + $0x38] sm:$0xff]
      %v4382 = vld [vmem:[%s11 + $0x40] sm:$0xff]
      %v4383 = vld [vmem:[%s11 + $0x48] sm:$0xff]
      %v4384 = vld [vmem:[%s11 + $0x50] sm:$0xff]
      %v4385 = vld [vmem:[%s11 + $0x58] sm:$0xff]
      %v4386 = vld [vmem:[%s11 + $0x60] sm:$0xff]
      %v4387 = vld [vmem:[%s11 + $0x68] sm:$0xff]
      %v4388 = vld [vmem:[%s11 + $0x70] sm:$0xff]
      %v4389 = vld [vmem:[%s11 + $0x78] sm:$0xff]
      %v4390 = vld [vmem:[%s11 + $0x80] sm:$0xff]
      %v4391 = vld [vmem:[%s11 + $0x88] sm:$0xff]
      %v4392 = vld [vmem:[%s11 + $0x90] sm:$0xff]
      %v4393 = vld [vmem:[%s11 + $0x98] sm:$0xff]
      %v4394 = vld [vmem:[%s11 + $0xa0] sm:$0xff]
      %v4395 = vld [vmem:[%s11 + $0xa8] sm:$0xff]
      %v4396 = vld [vmem:[%s11 + $0xb0] sm:$0xff]
      %v4397 = vld [vmem:[%s11 + $0xb8] sm:$0xff]
      %v4399 = vsel %vm2991, %v4373, 0
      %4401 = vmatprep.subr.mxu0 0.0
      %4402 = vmatpush1.msra.mxu0 %v4374
      %4403 = vmatprep.subr.mxu0 0.0
      %4404 = vmatpush1.msra.mxu0 %v4375
      %4405 = vmatprep.subr.mxu0 0.0
      %4406 = vmatpush1.msra.mxu0 %v4376
      %4407 = vmatprep.subr.mxu0 0.0
      %4408 = vmatpush1.msra.mxu0 %v4377
      %4409 = vmatprep.subr.mxu0 0.0
      %4410 = vmatpush1.msra.mxu0 %v4378
      %4411 = vmatprep.subr.mxu0 0.0
      %4412 = vmatpush1.msra.mxu0 %v4379
      %4413 = vmatprep.subr.mxu0 0.0
      %4414 = vmatpush1.msra.mxu0 %v4380
      %4415 = vmatprep.subr.mxu0 0.0
      %4416 = vmatpush1.msra.mxu0 %v4381
      %4417 = vmatprep.subr.mxu0 0.0
      %4418 = vmatpush1.msra.mxu0 %v4382
      %4419 = vmatprep.subr.mxu0 0.0
      %4420 = vmatpush1.msra.mxu0 %v4383
      %4421 = vmatprep.subr.mxu0 0.0
      %4422 = vmatpush1.msra.mxu0 %v4384
      %4423 = vmatprep.subr.mxu0 0.0
      %4424 = vmatpush1.msra.mxu0 %v4385
      %4425 = vmatprep.subr.mxu0 0.0
      %4426 = vmatpush1.msra.mxu0 %v4386
      %4427 = vmatprep.subr.mxu0 0.0
      %4428 = vmatpush1.msra.mxu0 %v4387
      %4429 = vmatprep.subr.mxu0 0.0
      %4430 = vmatpush1.msra.mxu0 %v4388
      %4431 = vmatprep.subr.mxu0 0.0
      %4432 = vmatpush1.msra.mxu0 %v4389
      %4433 = vmatprep.subr.mxu0 0.0
      %4434 = vmatpush1.msra.mxu0 %v4390
      %4435 = vmatprep.subr.mxu0 0.0
      %4436 = vmatpush1.msra.mxu0 %v4391
      %4437 = vmatprep.subr.mxu0 0.0
      %4438 = vmatpush1.msra.mxu0 %v4392
      %4439 = vmatprep.subr.mxu0 0.0
      %4440 = vmatpush1.msra.mxu0 %v4393
      %4441 = vmatprep.subr.mxu0 0.0
      %4442 = vmatpush1.msra.mxu0 %v4394
      %4443 = vmatprep.subr.mxu0 0.0
      %4444 = vmatpush1.msra.mxu0 %v4395
      %4445 = vmatprep.subr.mxu0 0.0
      %4446 = vmatpush1.msra.mxu0 %v4396
      %4447 = vmatprep.subr.mxu0 0.0
      %4448 = vmatpush1.msra.mxu0 %v4397
      %4449 = vmatprep.subr.mxu0 0.0
      %4450 = vmatpush1.msra.mxu0 0.0
      %4451 = vmatprep.subr.mxu0 0.0
      %4452 = vmatpush1.msra.mxu0 0.0
      %4453 = vmatprep.subr.mxu0 0.0
      %4454 = vmatpush1.msra.mxu0 0.0
      %4455 = vmatprep.subr.mxu0 0.0
      %4456 = vmatpush1.msra.mxu0 0.0
      %4457 = vmatprep.subr.mxu0 0.0
      %4458 = vmatpush1.msra.mxu0 0.0
      %4459 = vmatprep.subr.mxu0 0.0
      %4460 = vmatpush1.msra.mxu0 0.0
      %4461 = vmatprep.subr.mxu0 0.0
      %4462 = vmatpush1.msra.mxu0 0.0
      %4463 = vmatprep.subr.mxu0 0.0
      %4464 = vmatpush1.msra.mxu0 0.0
      %4465 = vmatprep.mubr.f32.mxu0 %v4399
      %4466 = vmatmul.mubr.f32.gmra.mrb[0].mxu0 %v4372
      %v4467 = vpop.f32.mrb[0].mxu0
      %v4468 = vadd.f32 0.0, %v4467
      %v4469 = vpop.f32.mrb[0].mxu0
      %4470 = vdwg.mxu0
      %4472 = vrot.lane.b32.xlu0 %v4468, 103
      %v4473 = vpop.permute.xlu0 %4472
      %v4475 = vmax.f32 %v4468, %v4473
      %4477 = vrot.lane.b32.xlu0 %v4475, 78
      %v4478 = vpop.permute.xlu0 %4477
      %v4480 = vmax.f32 %v4475, %v4478
      %v4481 = vlaneseq
      %v4482 = vshrl.u32 %v4481, 7
      %v4483 = vsub.s32 0, %v4482
      %v4484 = vrot.slane %v3171, %v4483
      %v4485 = vmul.f32 %v4480, %v4484
      %v4486 = vmul.f32 %v3079, %v4485
      %v4487 = vmul.f32 %v3080, %v4485
      %v4488 = vmul.f32 %v3081, %v4485
      %v4489 = vsel %vm3085, %v4486, 0.0
      %4490 = vadd.xlane.f32.xlu0 %v4489
      %v4491 = vpop.xlane.xlu0 %4490
      %v4492 = vsel %vm3085, %v4487, 0.0
      %4493 = vadd.xlane.f32.xlu0 %v4492
      %v4494 = vpop.xlane.xlu0 %4493
      %v4495 = vsel %vm3085, %v4488, 0.0
      %4496 = vadd.xlane.f32.xlu0 %v4495
      %v4497 = vpop.xlane.xlu0 %4496
      %v4501 = vlaneseq
      %v4502 = vand.u32 %v4501, 127
      %v4503 = vlaneseq
      %v4504 = vshrl.u32 %v4503, 7
      %v4505 = vsub.s32 %v4502, %v4504
      %v4506 = vrot.slane %v4491, %v4505
      %v4507 = vlaneseq
      %v4508 = vshrl.u32 %v4507, 7
      %v4509 = vsub.s32 %v4502, %v4508
      %v4510 = vrot.slane %v4494, %v4509
      %v4511 = vlaneseq
      %v4512 = vshrl.u32 %v4511, 7
      %v4513 = vsub.s32 %v4502, %v4512
      %v4514 = vrot.slane %v4497, %v4513
      %v4515 = vsel %vm3114, %v4510, %v4506
      %v4516 = vsel %vm3116, %v4514, %v4515
      %vm4518 = vcmask 59392
      %v4519 = vsel %vm4518, %v4516, 0.0
      %4520 = vadd.xlane.f32.xlu0 %v4519
      %v4521 = vpop.xlane.xlu0 %4520
      %v4522 = vld [vmem:[%s13] sm:$0x7]
      %v4523 = vadd.f32 %v4521, %v4522
      %vm4524 = vcmask 2048
      %4525 = vst.msk [vmem:[%s465] sm:$0x7] %vm4524, %v4523
      %p4526 = scmp.lt.s32.totalorder %s25, 1
      %s4527 = scalar_select %p4526, %s25, 1
      %s4528 = smul.addr %s4527, 4
      %s4529 = scalar_lea.vmem %s14, %s4528
      // Predicated region
      $region77: #{rcn_a_forward.1} parent=75 // pred_check
        %p4530 = pneg %p342
      $region78: #{rcn_a_forward.1} parent=75 // pred_check_branch
        %4532 = sbr.rel (%p4530) target = $region80
      $region79: #{rcn_a_forward.1} parent=75 // pred_region
        _
      $region80: #{rcn_a_forward.1} parent=75 // pred_fallthru
        _
    $region76: #{rcn_a_forward.1} parent=5 // pred_fallthru
      _
    %p4533 = scmp.le.s32.totalorder 2, %s20
    // Predicated region
    $region81: #{rcn_a_forward.1} parent=5 // pred_check
      %p4534 = pneg %p4533
    $region82: #{rcn_a_forward.1} parent=5 // pred_check_branch
      %4536 = sbr.rel (%p4534) target = $region84
    $region83: #{rcn_a_forward.1} parent=5 // pred_region
      %s4537 = ssub.s32 %s20, 2
      // Predicated region
      $region85: #{rcn_a_forward.1} parent=83 // pred_check
        %p4538 = pneg %p348
      $region86: #{rcn_a_forward.1} parent=83 // pred_check_branch
        %4540 = sbr.rel (%p4538) target = $region88
      $region87: #{rcn_a_forward.1} parent=83 // pred_region
        %p4541 = scmp.lt.s32.totalorder %s26, 1
        %s4542 = scalar_select %p4541, %s26, 1
        %s4543 = smul.addr %s4542, 4
        %s4544 = scalar_lea.vmem %s14, %s4543
      $region88: #{rcn_a_forward.1} parent=83 // pred_fallthru
        _
    $region84: #{rcn_a_forward.1} parent=5 // pred_fallthru
      _
  $region6: #{rcn_a_forward.1} parent=0 // loop_footer
    %s24 = sadd.s32 1, %s20
  $region7: #{rcn_a_forward.1} parent=0 // loop_footer_branch
    %19 = sbr.rel target = $region3
  $region8: #{rcn_a_forward.1} parent=0 // loop_exit
    _

</llo_original>
